<compile_context>
chip_gen: v5e
topology: v5e:2x2
jax: 0.10.0
libtpu: 0.0.40
codegen_flags: <defaults>
</compile_context>

<pallas_src>
import functools

import jax
import jax.numpy as jnp
from jax import lax
from jax.experimental import pallas as pl
from jax.experimental.pallas import tpu as pltpu

NEG_INF = -1e9
LN_EPS = 1e-5
MATMUL_ROW_TILE = 256      # MXU-heavy kernels (QKV / FFN): 256-edge tiles
BW_ROW_TILE = 512          # bandwidth-bound kernels (LN, KV projection)
CE_ROW_TILE = 512          # fused logits+CE (amortizes embedding streaming)
ATTN_Q_TILE = 256          # Lq tile in attention


# ------------------------------ small helpers -------------------------------

def _round_up(x, m):
    return ((x + m - 1) // m) * m


def _pad_rows(x, rows):
    pad = rows - x.shape[0]
    if pad > 0:
        x = jnp.pad(x, ((0, pad),) + ((0, 0),) * (x.ndim - 1))
    return x


def _row_tiling(m, max_tile):
    tm = min(_round_up(m, 8), max_tile)
    mp = _round_up(m, tm)
    return tm, mp


def _vocab_tile(v):
    for tv in (2048, 1024, 512, 256, 128):
        if v % tv == 0:
            return tv
    return v


@functools.lru_cache(maxsize=None)
def _vmem_limit_bytes():
    # Generation-aware scoped-VMEM limit: 64 MiB on 128-MiB-VMEM chips
    # (v5e/v6e), 32 MiB on 64-MiB-VMEM chips (v7x-class) / unknown.
    try:
        info = pltpu.get_tpu_info()
        cap = int(getattr(info, "vmem_capacity_bytes", 0) or 0)
    except Exception:
        cap = 0
    if cap >= 96 * 1024 * 1024:
        return 64 * 1024 * 1024
    return 32 * 1024 * 1024


def _cparams(parallel_axes, arbitrary_axes=0):
    sem = ("parallel",) * parallel_axes + ("arbitrary",) * arbitrary_axes
    return pltpu.CompilerParams(dimension_semantics=sem,
                                vmem_limit_bytes=_vmem_limit_bytes())


def _const_spec(block_shape, index_map):
    # Grid-invariant weight block: single-buffer it (default double-buffering
    # would allocate 2x the weight in VMEM for no benefit).
    try:
        return pl.BlockSpec(block_shape, index_map,
                            pipeline_mode=pl.Buffered(1))
    except Exception:  # very old jax without pipeline_mode support
        return pl.BlockSpec(block_shape, index_map)


# ----------------------------- Pallas kernels -------------------------------

def _ln_matmul_scale_kernel(x_ref, g_ref, b_ref, w_ref, s_ref, wb_ref, o_ref,
                            *, eps):
    # o = (LayerNorm(x) @ W) * s + b   (W bf16, f32 accumulation, bf16 out).
    # `s` carries the folded 1/sqrt(d_head) attention scale for the q columns.
    x = x_ref[...].astype(jnp.float32)
    mu = jnp.mean(x, axis=-1, keepdims=True)
    var = jnp.mean(jnp.square(x - mu), axis=-1, keepdims=True)
    xn = (x - mu) * lax.rsqrt(var + eps) * g_ref[...] + b_ref[...]
    y = jnp.dot(xn.astype(jnp.bfloat16), w_ref[...],
                preferred_element_type=jnp.float32)
    o_ref[...] = (y * s_ref[...] + wb_ref[...]).astype(o_ref.dtype)


def _matmul_bias_kernel(x_ref, w_ref, wb_ref, o_ref):
    y = jnp.dot(x_ref[...].astype(jnp.bfloat16), w_ref[...],
                preferred_element_type=jnp.float32)
    o_ref[...] = (y + wb_ref[...]).astype(o_ref.dtype)


def _layernorm_kernel(x_ref, g_ref, b_ref, o_ref, *, eps):
    x = x_ref[...].astype(jnp.float32)
    mu = jnp.mean(x, axis=-1, keepdims=True)
    var = jnp.mean(jnp.square(x - mu), axis=-1, keepdims=True)
    o_ref[...] = ((x - mu) * lax.rsqrt(var + eps) * g_ref[...]
                  + b_ref[...]).astype(o_ref.dtype)


def _ln_ffn_kernel(x_ref, g_ref, b_ref, w1_ref, b1_ref, w2_ref, b2_ref, o_ref,
                   *, eps):
    # out = x + relu(LN(x) @ W1 + b1) @ W2 + b2   (whole FFN fused, f32 acc)
    x = x_ref[...].astype(jnp.float32)
    mu = jnp.mean(x, axis=-1, keepdims=True)
    var = jnp.mean(jnp.square(x - mu), axis=-1, keepdims=True)
    xn = (x - mu) * lax.rsqrt(var + eps) * g_ref[...] + b_ref[...]
    h = jnp.dot(xn.astype(jnp.bfloat16), w1_ref[...],
                preferred_element_type=jnp.float32) + b1_ref[...]
    h = jnp.maximum(h, 0.0)
    y = jnp.dot(h.astype(jnp.bfloat16), w2_ref[...],
                preferred_element_type=jnp.float32) + b2_ref[...]
    o_ref[...] = (x + y).astype(o_ref.dtype)


def _attention_kernel(lens_ref, q_ref, k_ref, v_ref, wo_ref, bo_ref, res_ref,
                      o_ref, *, n_head, causal, wait_k, q_tile):
    # Head-major Q/K/V: (1, H, TQ, dh) / (1, H, Lk, dh).  Mask built in-kernel
    # from scalar-prefetched key lengths + static causal / wait-k flags.
    b = pl.program_id(0)
    q0 = pl.program_id(1) * q_tile
    lk = k_ref.shape[2]
    key_len = lens_ref[b]

    qi = q0 + lax.broadcasted_iota(jnp.int32, (q_tile, lk), 0)
    kj = lax.broadcasted_iota(jnp.int32, (q_tile, lk), 1)
    masked = kj >= key_len
    if causal:
        masked = masked | (kj > qi)
    if wait_k is not None:
        masked = masked | (kj >= qi + wait_k)
    bias = jnp.where(masked, NEG_INF, 0.0).astype(jnp.float32)

    ctx_parts = []
    for h in range(n_head):                        # static unroll over heads
        qh = q_ref[0, h]                           # (TQ, dh) bf16 (pre-scaled)
        kh = k_ref[0, h]
        vh = v_ref[0, h]
        s = lax.dot_general(qh, kh, (((1,), (1,)), ((), ())),
                            preferred_element_type=jnp.float32) + bias
        m = jnp.max(s, axis=-1, keepdims=True)
        e = jnp.exp(s - m)
        p = e * pl.reciprocal(jnp.sum(e, axis=-1, keepdims=True), approx=True)
        ctx_parts.append(jnp.dot(p.astype(jnp.bfloat16), vh,
                                 preferred_element_type=jnp.float32))
    # Concat heads once, then a single full-K output projection on the MXU.
    ctx = jnp.concatenate(ctx_parts, axis=-1).astype(jnp.bfloat16)   # (TQ, D)
    attn = jnp.dot(ctx, wo_ref[...], preferred_element_type=jnp.float32)
    o_ref[0] = (res_ref[0].astype(jnp.float32) + attn
                + bo_ref[...]).astype(o_ref.dtype)


def _ln_ce_kernel(x_ref, g_ref, b_ref, lab_ref, w_ref, emb_ref, o_ref,
                  xn_sc, m_sc, l_sc, s_sc, t_sc,
                  *, eps_ln, eps_smooth, vocab, v_tile):
    # Fused: LN(x) -> logits = xn @ embed^T (vocab-tiled, online logsumexp)
    # -> label-smoothed CE partial sum per row tile.  Logits never hit HBM.
    j = pl.program_id(1)

    @pl.when(j == 0)
    def _():
        x = x_ref[...].astype(jnp.float32)
        mu = jnp.mean(x, axis=-1, keepdims=True)
        var = jnp.mean(jnp.square(x - mu), axis=-1, keepdims=True)
        xn = (x - mu) * lax.rsqrt(var + eps_ln) * g_ref[...] + b_ref[...]
        xn_sc[...] = xn.astype(jnp.bfloat16)
        m_sc[...] = jnp.full_like(m_sc, -jnp.inf)
        l_sc[...] = jnp.zeros_like(l_sc)
        s_sc[...] = jnp.zeros_like(s_sc)
        t_sc[...] = jnp.zeros_like(t_sc)
        o_ref[...] = jnp.zeros_like(o_ref)

    z = lax.dot_general(xn_sc[...], emb_ref[...], (((1,), (1,)), ((), ())),
                        preferred_element_type=jnp.float32)        # (TM, TV)
    m_new = jnp.maximum(m_sc[...], jnp.max(z, axis=-1, keepdims=True))
    l_sc[...] = (l_sc[...] * jnp.exp(m_sc[...] - m_new)
                 + jnp.sum(jnp.exp(z - m_new), axis=-1, keepdims=True))
    m_sc[...] = m_new
    s_sc[...] = s_sc[...] + jnp.sum(z, axis=-1, keepdims=True)
    cols = j * v_tile + lax.broadcasted_iota(jnp.int32, z.shape, 1)
    t_sc[...] = t_sc[...] + jnp.sum(jnp.where(cols == lab_ref[...], z, 0.0),
                                    axis=-1, keepdims=True)

    @pl.when(j == pl.num_programs(1) - 1)
    def _():
        lse = m_sc[...] + jnp.log(l_sc[...])
        # TODO(synk): reduction/smoothing convention of the upstream
        # label_smoothed_cross_entropy is implementation-defined; masked
        # token-mean with eps/V over all classes is used here.
        per_tok = ((1.0 - eps_smooth) * (lse - t_sc[...])
                   + (eps_smooth / vocab) * (vocab * lse - s_sc[...]))
        part = jnp.sum(per_tok * w_ref[...], axis=0, keepdims=True)   # (1,1)
        lane = lax.broadcasted_iota(jnp.int32, o_ref.shape, 1)
        o_ref[...] = jnp.where(lane == 0, part, 0.0)


# ------------------------------ kernel wrappers ------------------------------

def ln_matmul(x, gamma, beta, w_bf16, bias, scale_vec, eps=LN_EPS):
    *lead, D = x.shape
    N = w_bf16.shape[1]
    x2 = x.reshape(-1, D)
    M = x2.shape[0]
    tm, mp = _row_tiling(M, MATMUL_ROW_TILE)
    x2 = _pad_rows(x2, mp)
    out = pl.pallas_call(
        functools.partial(_ln_matmul_scale_kernel, eps=eps),
        out_shape=jax.ShapeDtypeStruct((mp, N), jnp.bfloat16),
        grid=(mp // tm,),
        in_specs=[pl.BlockSpec((tm, D), lambda i: (i, 0)),
                  pl.BlockSpec((1, D), lambda i: (0, 0)),
                  pl.BlockSpec((1, D), lambda i: (0, 0)),
                  _const_spec((D, N), lambda i: (0, 0)),
                  pl.BlockSpec((1, N), lambda i: (0, 0)),
                  pl.BlockSpec((1, N), lambda i: (0, 0))],
        out_specs=pl.BlockSpec((tm, N), lambda i: (i, 0)),
        compiler_params=_cparams(1),
    )(x2, gamma.reshape(1, D).astype(jnp.float32),
      beta.reshape(1, D).astype(jnp.float32),
      w_bf16, scale_vec, bias.reshape(1, N).astype(jnp.float32))
    return out[:M].reshape(*lead, N)


def matmul_bias(x, w_bf16, bias):
    *lead, D = x.shape
    N = w_bf16.shape[1]
    x2 = x.reshape(-1, D)
    M = x2.shape[0]
    tm, mp = _row_tiling(M, BW_ROW_TILE)
    x2 = _pad_rows(x2, mp)
    out = pl.pallas_call(
        _matmul_bias_kernel,
        out_shape=jax.ShapeDtypeStruct((mp, N), jnp.bfloat16),
        grid=(mp // tm,),
        in_specs=[pl.BlockSpec((tm, D), lambda i: (i, 0)),
                  _const_spec((D, N), lambda i: (0, 0)),
                  pl.BlockSpec((1, N), lambda i: (0, 0))],
        out_specs=pl.BlockSpec((tm, N), lambda i: (i, 0)),
        compiler_params=_cparams(1),
    )(x2, w_bf16, bias.reshape(1, N).astype(jnp.float32))
    return out[:M].reshape(*lead, N)


def layer_norm(x, gamma, beta, eps=LN_EPS):
    *lead, D = x.shape
    x2 = x.reshape(-1, D)
    M = x2.shape[0]
    tm, mp = _row_tiling(M, BW_ROW_TILE)
    x2 = _pad_rows(x2, mp)
    out = pl.pallas_call(
        functools.partial(_layernorm_kernel, eps=eps),
        out_shape=jax.ShapeDtypeStruct((mp, D), jnp.bfloat16),
        grid=(mp // tm,),
        in_specs=[pl.BlockSpec((tm, D), lambda i: (i, 0)),
                  pl.BlockSpec((1, D), lambda i: (0, 0)),
                  pl.BlockSpec((1, D), lambda i: (0, 0))],
        out_specs=pl.BlockSpec((tm, D), lambda i: (i, 0)),
        compiler_params=_cparams(1),
    )(x2, gamma.reshape(1, D).astype(jnp.float32),
      beta.reshape(1, D).astype(jnp.float32))
    return out[:M].reshape(*lead, D)


def ln_ffn(x, gamma, beta, w1_bf16, b1, w2_bf16, b2, eps=LN_EPS):
    B, L, D = x.shape
    dff = w1_bf16.shape[1]
    x2 = x.reshape(-1, D)
    M = x2.shape[0]
    tm, mp = _row_tiling(M, MATMUL_ROW_TILE)
    x2 = _pad_rows(x2, mp)
    out = pl.pallas_call(
        functools.partial(_ln_ffn_kernel, eps=eps),
        out_shape=jax.ShapeDtypeStruct((mp, D), jnp.bfloat16),
        grid=(mp // tm,),
        in_specs=[pl.BlockSpec((tm, D), lambda i: (i, 0)),
                  pl.BlockSpec((1, D), lambda i: (0, 0)),
                  pl.BlockSpec((1, D), lambda i: (0, 0)),
                  _const_spec((D, dff), lambda i: (0, 0)),
                  pl.BlockSpec((1, dff), lambda i: (0, 0)),
                  _const_spec((dff, D), lambda i: (0, 0)),
                  pl.BlockSpec((1, D), lambda i: (0, 0))],
        out_specs=pl.BlockSpec((tm, D), lambda i: (i, 0)),
        compiler_params=_cparams(1),
    )(x2, gamma.reshape(1, D).astype(jnp.float32),
      beta.reshape(1, D).astype(jnp.float32),
      w1_bf16, b1.reshape(1, dff).astype(jnp.float32),
      w2_bf16, b2.reshape(1, D).astype(jnp.float32))
    return out[:M].reshape(B, L, D)


def attention_block(q, k, v, wo_bf16, bo, residual, key_lens, *, causal, wait_k):
    # q,k,v: (B, H, L, dh) bf16 head-major; residual: (B, Lq, D) bf16.
    B, H, Lq, dh = q.shape
    Lk = k.shape[2]
    D = H * dh
    tq = min(_round_up(Lq, 8), ATTN_Q_TILE)
    lq_pad = _round_up(Lq, tq)
    if lq_pad != Lq:
        q = jnp.pad(q, ((0, 0), (0, 0), (0, lq_pad - Lq), (0, 0)))
        residual = jnp.pad(residual, ((0, 0), (0, lq_pad - Lq), (0, 0)))
    kern = functools.partial(_attention_kernel, n_head=H, causal=causal,
                             wait_k=wait_k, q_tile=tq)
    out = pl.pallas_call(
        kern,
        out_shape=jax.ShapeDtypeStruct((B, lq_pad, D), jnp.bfloat16),
        grid_spec=pltpu.PrefetchScalarGridSpec(
            num_scalar_prefetch=1,
            grid=(B, lq_pad // tq),
            in_specs=[
                pl.BlockSpec((1, H, tq, dh), lambda b, i, lens: (b, 0, i, 0)),
                pl.BlockSpec((1, H, Lk, dh), lambda b, i, lens: (b, 0, 0, 0)),
                pl.BlockSpec((1, H, Lk, dh), lambda b, i, lens: (b, 0, 0, 0)),
                _const_spec((D, D), lambda b, i, lens: (0, 0)),
                pl.BlockSpec((1, D), lambda b, i, lens: (0, 0)),
                pl.BlockSpec((1, tq, D), lambda b, i, lens: (b, i, 0)),
            ],
            out_specs=pl.BlockSpec((1, tq, D), lambda b, i, lens: (b, i, 0)),
        ),
        compiler_params=_cparams(2),
    )(key_lens.astype(jnp.int32), q, k, v, wo_bf16,
      bo.reshape(1, D).astype(jnp.float32), residual)
    return out[:, :Lq]


def ln_logits_smoothed_ce(x, gamma, beta, embed_bf16, labels, weights,
                          smoothing_eps, eps=LN_EPS):
    # Fused final LN + tied-embedding logits + label-smoothed CE.
    B, L, D = x.shape
    V = embed_bf16.shape[0]
    M = B * L
    x2 = _pad_rows(x.reshape(M, D), 0)
    lab = labels.reshape(M, 1).astype(jnp.int32)
    w = weights.reshape(M, 1).astype(jnp.float32)
    tm, mp = _row_tiling(M, CE_ROW_TILE)
    x2 = _pad_rows(x.reshape(M, D), mp)
    lab = _pad_rows(lab, mp)
    w = _pad_rows(w, mp)
    tv = _vocab_tile(V)
    nt, nv = mp // tm, V // tv
    kern = functools.partial(_ln_ce_kernel, eps_ln=eps,
                             eps_smooth=smoothing_eps, vocab=V, v_tile=tv)
    partials = pl.pallas_call(
        kern,
        out_shape=jax.ShapeDtypeStruct((1, nt * 128), jnp.float32),
        grid=(nt, nv),
        in_specs=[pl.BlockSpec((tm, D), lambda i, j: (i, 0)),
                  pl.BlockSpec((1, D), lambda i, j: (0, 0)),
                  pl.BlockSpec((1, D), lambda i, j: (0, 0)),
                  pl.BlockSpec((tm, 1), lambda i, j: (i, 0)),
                  pl.BlockSpec((tm, 1), lambda i, j: (i, 0)),
                  pl.BlockSpec((tv, D), lambda i, j: (j, 0))],
        out_specs=pl.BlockSpec((1, 128), lambda i, j: (0, i)),
        scratch_shapes=[pltpu.VMEM((tm, D), jnp.bfloat16),
                        pltpu.VMEM((tm, 1), jnp.float32),
                        pltpu.VMEM((tm, 1), jnp.float32),
                        pltpu.VMEM((tm, 1), jnp.float32),
                        pltpu.VMEM((tm, 1), jnp.float32)],
        compiler_params=_cparams(1, 1),
    )(x2, gamma.reshape(1, D).astype(jnp.float32),
      beta.reshape(1, D).astype(jnp.float32), lab, w, embed_bf16)
    total = jnp.sum(partials)
    denom = jnp.maximum(jnp.sum(w), 1.0)
    return total / denom


# ------------------------------- model glue ---------------------------------

def sinusoidal_pe(d_model, max_length=5000):
    # Mirrors get_sinusoidal_positional_embedding exactly (sin on all columns).
    d = jnp.arange(d_model, dtype=jnp.float32)
    div_term = jnp.power(10000.0,
                         -(jnp.floor(d / 2.0) * 2.0) / d_model).reshape(1, -1)
    pos = jnp.arange(max_length, dtype=jnp.float32).reshape(-1, 1)
    return jnp.sin(pos @ div_term)


def _to_heads(x, n_head, n_parts):
    # (B, L, n_parts*D) -> n_parts arrays of (B, H, L, dh) (head-major, bf16).
    B, L, ND = x.shape
    D = ND // n_parts
    dh = D // n_head
    x = x.reshape(B, L, n_parts, n_head, dh)
    x = jnp.transpose(x, (2, 0, 3, 1, 4))
    return tuple(x[i] for i in range(n_parts))


# TODO(synk): TransformerEncoder/TransformerDecoder internals are not in the
# reference; a standard pre-norm transformer block (prenorm=True, relu,
# dropout disabled / eval-mode forward) is used.
def wait_k_transformer_train_forward(params, src_ids, src_lens, tgt_ids,
                                     tgt_lens, wait_k, smoothing_eps,
                                     d_model, n_head):
    embed_scale = d_model ** 0.5
    dh = d_model // n_head
    attn_scale = dh ** -0.5
    B, T = tgt_ids.shape
    Ltgt = T - 1
    Lsrc = src_ids.shape[1]
    pe = params['pe']
    embed = params['embed']

    # 1/sqrt(d_head) folded into the fused LN+projection kernels (q cols only).
    qkv_scale = jnp.concatenate(
        [jnp.full((d_model,), attn_scale, jnp.float32),
         jnp.ones((2 * d_model,), jnp.float32)]).reshape(1, 3 * d_model)
    q_scale = jnp.full((1, d_model), attn_scale, jnp.float32)

    src_klens = src_lens.astype(jnp.int32)
    tgt_klens = (tgt_lens - 1).astype(jnp.int32)
    enc_causal = wait_k > 0                       # static (Python) flag
    cross_wait_k = wait_k if wait_k > 0 else None

    # Token dropout is training-RNG only; forward here is deterministic (eval).
    # ----------------------------- encoder -------------------------------
    x = (embed[src_ids] * embed_scale + pe[:Lsrc][None, :, :]).astype(jnp.bfloat16)
    for lp in params['enc_layers']:
        a = lp['attn']
        qkv = ln_matmul(x, lp['ln1_g'], lp['ln1_b'], a['wqkv'], a['bqkv'],
                        qkv_scale)
        q, k, v = _to_heads(qkv, n_head, 3)
        x = attention_block(q, k, v, a['wo'], a['bo'], x, src_klens,
                            causal=enc_causal, wait_k=None)
        f = lp['ffn']
        x = ln_ffn(x, lp['ln2_g'], lp['ln2_b'],
                   f['w1'], f['b1'], f['w2'], f['b2'])
    enc_out = layer_norm(x, params['enc_ln_g'], params['enc_ln_b'])

    # ----------------------------- decoder -------------------------------
    y = (embed[tgt_ids[:, :-1]] * embed_scale
         + pe[:Ltgt][None, :, :]).astype(jnp.bfloat16)
    for lp in params['dec_layers']:
        sa = lp['self_attn']
        qkv = ln_matmul(y, lp['ln1_g'], lp['ln1_b'], sa['wqkv'], sa['bqkv'],
                        qkv_scale)
        q, k, v = _to_heads(qkv, n_head, 3)
        y = attention_block(q, k, v, sa['wo'], sa['bo'], y, tgt_klens,
                            causal=True, wait_k=None)
        ca = lp['cross_attn']
        qp = ln_matmul(y, lp['ln2_g'], lp['ln2_b'], ca['wq'], ca['bq'], q_scale)
        kvp = matmul_bias(enc_out, ca['wkv'], ca['bkv'])
        (qh,) = _to_heads(qp, n_head, 1)
        kh, vh = _to_heads(kvp, n_head, 2)
        y = attention_block(qh, kh, vh, ca['wo'], ca['bo'], y, src_klens,
                            causal=False, wait_k=cross_wait_k)
        f = lp['ffn']
        y = ln_ffn(y, lp['ln3_g'], lp['ln3_b'],
                   f['w1'], f['b1'], f['w2'], f['b2'])

    # Final decoder LN + tied-embedding logits + label-smoothed CE fused;
    # the (M, V) logits tensor never round-trips through HBM.
    tgt_label = tgt_ids[:, 1:]
    label_w = (jnp.arange(Ltgt)[None, :] < (tgt_lens - 1)[:, None]
               ).astype(jnp.float32)
    loss = ln_logits_smoothed_ce(y, params['dec_ln_g'], params['dec_ln_b'],
                                 embed.astype(jnp.bfloat16),
                                 tgt_label, label_w, smoothing_eps)
    return {'loss': loss}


# ------------------------------ parameter init ------------------------------

def init_params(key, vocab, d_model, d_ff, n_head, n_enc, n_dec):
    keys = jax.random.split(key, 128)
    kit = iter(keys)

    def nrm(shape, std):
        return jax.random.normal(next(kit), shape, jnp.float32) * std

    def wbf16(shape, std):
        return nrm(shape, std).astype(jnp.bfloat16)   # MXU weights stored bf16

    std = d_model ** -0.5

    def self_attn_params():
        return dict(wqkv=wbf16((d_model, 3 * d_model), std),
                    bqkv=jnp.zeros((3 * d_model,), jnp.float32),
                    wo=wbf16((d_model, d_model), std),
                    bo=jnp.zeros((d_model,), jnp.float32))

    def cross_attn_params():
        return dict(wq=wbf16((d_model, d_model), std),
                    bq=jnp.zeros((d_model,), jnp.float32),
                    wkv=wbf16((d_model, 2 * d_model), std),
                    bkv=jnp.zeros((2 * d_model,), jnp.float32),
                    wo=wbf16((d_model, d_model), std),
                    bo=jnp.zeros((d_model,), jnp.float32))

    def ffn_params():
        return dict(w1=wbf16((d_model, d_ff), d_model ** -0.5),
                    b1=jnp.zeros((d_ff,), jnp.float32),
                    w2=wbf16((d_ff, d_model), d_ff ** -0.5),
                    b2=jnp.zeros((d_model,), jnp.float32))

    def ln():
        return (jnp.ones((d_model,), jnp.float32),
                jnp.zeros((d_model,), jnp.float32))

    params = {}
    # share_src_tgt_emb_weight=True and share_tgt_emb_proj_weight=True:
    # single embedding matrix, init N(0, d_model^-0.5), no projection bias.
    params['embed'] = nrm((vocab, d_model), d_model ** -0.5)

    enc_layers = []
    for _ in range(n_enc):
        g1, b1 = ln(); g2, b2 = ln()
        enc_layers.append(dict(attn=self_attn_params(), ffn=ffn_params(),
                               ln1_g=g1, ln1_b=b1, ln2_g=g2, ln2_b=b2))
    params['enc_layers'] = enc_layers
    params['enc_ln_g'], params['enc_ln_b'] = ln()

    dec_layers = []
    for _ in range(n_dec):
        g1, b1 = ln(); g2, b2 = ln(); g3, b3 = ln()
        dec_layers.append(dict(self_attn=self_attn_params(),
                               cross_attn=cross_attn_params(),
                               ffn=ffn_params(),
                               ln1_g=g1, ln1_b=b1, ln2_g=g2, ln2_b=b2,
                               ln3_g=g3, ln3_b=b3))
    params['dec_layers'] = dec_layers
    params['dec_ln_g'], params['dec_ln_b'] = ln()

    params['pe'] = sinusoidal_pe(d_model)
    return params


# ----------------------------------- main ------------------------------------

if __name__ == "__main__":
    cfg = dict(vocab=32, d_model=32, d_ff=64, n_head=4, n_enc=2, n_dec=2)
    key = jax.random.PRNGKey(0)
    kp, ks, kt = jax.random.split(key, 3)

    params = init_params(kp, cfg['vocab'], cfg['d_model'], cfg['d_ff'],
                         cfg['n_head'], cfg['n_enc'], cfg['n_dec'])

    B, Lsrc, Ltgt_plus1 = 2, 8, 9
    src_ids = jax.random.randint(ks, (B, Lsrc), 0, cfg['vocab'], dtype=jnp.int32)
    tgt_ids = jax.random.randint(kt, (B, Ltgt_plus1), 0, cfg['vocab'],
                                 dtype=jnp.int32)
    src_lens = jnp.array([8, 6], dtype=jnp.int32)
    tgt_lens = jnp.array([9, 7], dtype=jnp.int32)

    fwd = jax.jit(functools.partial(
        wait_k_transformer_train_forward,
        wait_k=3, smoothing_eps=0.1,
        d_model=cfg['d_model'], n_head=cfg['n_head']))

    result = fwd(params, src_ids, src_lens, tgt_ids, tgt_lens)
    jax.block_until_ready(result['loss'])
    print("KERNEL_OK")
</pallas_src>

<mosaic_0001>
module attributes {stable_mosaic.version = 11 : i64} {
  func.func @_ln_matmul_scale_kernel(%arg0: i32, %arg1: memref<16x32xbf16, #tpu.memory_space<vmem>>, %arg2: memref<1x32xf32, #tpu.memory_space<vmem>>, %arg3: memref<1x32xf32, #tpu.memory_space<vmem>>, %arg4: memref<32x96xbf16, #tpu.memory_space<vmem>>, %arg5: memref<1x96xf32, #tpu.memory_space<vmem>>, %arg6: memref<1x96xf32, #tpu.memory_space<vmem>>, %arg7: memref<16x96xbf16, #tpu.memory_space<vmem>>) attributes {dimension_semantics = [#tpu.dimension_semantics<parallel>], iteration_bounds = array<i64: 1>, scalar_prefetch = 0 : i64, scratch_operands = 0 : i64, tpu.core_type = #tpu.core_type<tc>, window_params = [{transform_indices = @transform_0, window_bounds = array<i64: 16, 32>}, {pipeline_mode = #tpu.pipeline_mode<synchronous>, transform_indices = @transform_1, window_bounds = array<i64: 1, 32>}, {pipeline_mode = #tpu.pipeline_mode<synchronous>, transform_indices = @transform_2, window_bounds = array<i64: 1, 32>}, {pipeline_mode = #tpu.pipeline_mode<synchronous>, transform_indices = @transform_3, window_bounds = array<i64: 32, 96>}, {pipeline_mode = #tpu.pipeline_mode<synchronous>, transform_indices = @transform_4, window_bounds = array<i64: 1, 96>}, {pipeline_mode = #tpu.pipeline_mode<synchronous>, transform_indices = @transform_5, window_bounds = array<i64: 1, 96>}, {transform_indices = @transform_6, window_bounds = array<i64: 16, 96>}]} {
    %c0 = arith.constant 0 : index
    %c0_0 = arith.constant 0 : index
    %0 = vector.load %arg1[%c0, %c0_0] : memref<16x32xbf16, #tpu.memory_space<vmem>>, vector<16x32xbf16>
    %1 = arith.extf %0 : vector<16x32xbf16> to vector<16x32xf32>
    %cst = arith.constant dense<0.000000e+00> : vector<16xf32>
    %2 = vector.multi_reduction <add>, %1, %cst [1] : vector<16x32xf32> to vector<16xf32>
    %3 = vector.shape_cast %2 : vector<16xf32> to vector<16x1xf32>
    %cst_1 = arith.constant 3.200000e+01 : f32
    %4 = vector.broadcast %cst_1 : f32 to vector<16x1xf32>
    %5 = arith.divf %3, %4 : vector<16x1xf32>
    %6 = vector.broadcast %5 : vector<16x1xf32> to vector<16x32xf32>
    %7 = arith.subf %1, %6 : vector<16x32xf32>
    %8 = arith.mulf %7, %7 : vector<16x32xf32>
    %cst_2 = arith.constant dense<0.000000e+00> : vector<16xf32>
    %9 = vector.multi_reduction <add>, %8, %cst_2 [1] : vector<16x32xf32> to vector<16xf32>
    %10 = vector.shape_cast %9 : vector<16xf32> to vector<16x1xf32>
    %cst_3 = arith.constant 3.200000e+01 : f32
    %11 = vector.broadcast %cst_3 : f32 to vector<16x1xf32>
    %12 = arith.divf %10, %11 : vector<16x1xf32>
    %13 = vector.broadcast %5 : vector<16x1xf32> to vector<16x32xf32>
    %14 = arith.subf %1, %13 : vector<16x32xf32>
    %cst_4 = arith.constant 9.99999974E-6 : f32
    %15 = vector.broadcast %cst_4 : f32 to vector<16x1xf32>
    %16 = arith.addf %12, %15 : vector<16x1xf32>
    %17 = math.rsqrt %16 : vector<16x1xf32>
    %18 = vector.broadcast %17 : vector<16x1xf32> to vector<16x32xf32>
    %19 = arith.mulf %14, %18 : vector<16x32xf32>
    %c0_5 = arith.constant 0 : index
    %c0_6 = arith.constant 0 : index
    %20 = vector.load %arg2[%c0_5, %c0_6] : memref<1x32xf32, #tpu.memory_space<vmem>>, vector<1x32xf32>
    %21 = vector.broadcast %20 : vector<1x32xf32> to vector<16x32xf32>
    %22 = arith.mulf %19, %21 : vector<16x32xf32>
    %c0_7 = arith.constant 0 : index
    %c0_8 = arith.constant 0 : index
    %23 = vector.load %arg3[%c0_7, %c0_8] : memref<1x32xf32, #tpu.memory_space<vmem>>, vector<1x32xf32>
    %24 = vector.broadcast %23 : vector<1x32xf32> to vector<16x32xf32>
    %25 = arith.addf %22, %24 : vector<16x32xf32>
    %26 = arith.truncf %25 : vector<16x32xf32> to vector<16x32xbf16>
    %c0_9 = arith.constant 0 : index
    %c0_10 = arith.constant 0 : index
    %27 = vector.load %arg4[%c0_9, %c0_10] : memref<32x96xbf16, #tpu.memory_space<vmem>>, vector<32x96xbf16>
    %cst_11 = arith.constant dense<0.000000e+00> : vector<16x96xf32>
    %28 = tpu.matmul %26, %27, %cst_11 {dimension_numbers = #tpu.dot_dimension_numbers<[1], [0], [0], [1], [0, 0, 1, 1], [], []>} : vector<16x32xbf16>, vector<32x96xbf16>, vector<16x96xf32> -> vector<16x96xf32>
    %c0_12 = arith.constant 0 : index
    %c0_13 = arith.constant 0 : index
    %29 = vector.load %arg5[%c0_12, %c0_13] : memref<1x96xf32, #tpu.memory_space<vmem>>, vector<1x96xf32>
    %30 = vector.broadcast %29 : vector<1x96xf32> to vector<16x96xf32>
    %31 = arith.mulf %28, %30 : vector<16x96xf32>
    %c0_14 = arith.constant 0 : index
    %c0_15 = arith.constant 0 : index
    %32 = vector.load %arg6[%c0_14, %c0_15] : memref<1x96xf32, #tpu.memory_space<vmem>>, vector<1x96xf32>
    %33 = vector.broadcast %32 : vector<1x96xf32> to vector<16x96xf32>
    %34 = arith.addf %31, %33 : vector<16x96xf32>
    %35 = arith.truncf %34 : vector<16x96xf32> to vector<16x96xbf16>
    %c0_16 = arith.constant 0 : index
    %c0_17 = arith.constant 0 : index
    %36 = vector.load %arg7[%c0_16, %c0_17] : memref<16x96xbf16, #tpu.memory_space<vmem>>, vector<16x96xbf16>
    tpu.vector_store %arg7[%c0_16, %c0_17], %35 {strides = array<i32>} : memref<16x96xbf16, #tpu.memory_space<vmem>>, vector<16x96xbf16>,
    return
  }
  func.func @transform_0(%arg0: i32) -> (i32, i32) {
    %c0_i32 = arith.constant 0 : i32
    %c0_i32_0 = arith.constant 0 : i32
    return %arg0, %c0_i32 : i32, i32
  }
  func.func @transform_1(%arg0: i32) -> (i32, i32) {
    %c0_i32 = arith.constant 0 : i32
    %c0_i32_0 = arith.constant 0 : i32
    %c0_i32_1 = arith.constant 0 : i32
    return %c0_i32, %c0_i32_0 : i32, i32
  }
  func.func @transform_2(%arg0: i32) -> (i32, i32) {
    %c0_i32 = arith.constant 0 : i32
    %c0_i32_0 = arith.constant 0 : i32
    %c0_i32_1 = arith.constant 0 : i32
    return %c0_i32, %c0_i32_0 : i32, i32
  }
  func.func @transform_3(%arg0: i32) -> (i32, i32) {
    %c0_i32 = arith.constant 0 : i32
    %c0_i32_0 = arith.constant 0 : i32
    %c0_i32_1 = arith.constant 0 : i32
    return %c0_i32, %c0_i32_0 : i32, i32
  }
  func.func @transform_4(%arg0: i32) -> (i32, i32) {
    %c0_i32 = arith.constant 0 : i32
    %c0_i32_0 = arith.constant 0 : i32
    %c0_i32_1 = arith.constant 0 : i32
    return %c0_i32, %c0_i32_0 : i32, i32
  }
  func.func @transform_5(%arg0: i32) -> (i32, i32) {
    %c0_i32 = arith.constant 0 : i32
    %c0_i32_0 = arith.constant 0 : i32
    %c0_i32_1 = arith.constant 0 : i32
    return %c0_i32, %c0_i32_0 : i32, i32
  }
  func.func @transform_6(%arg0: i32) -> (i32, i32) {
    %c0_i32 = arith.constant 0 : i32
    %c0_i32_0 = arith.constant 0 : i32
    return %arg0, %c0_i32 : i32, i32
  }
}

module attributes {stable_mosaic.version = 11 : i64} {
  func.func @_attention_kernel(%arg0: i32, %arg1: i32, %arg2: memref<2xi32, #tpu.memory_space<smem>>, %arg3: memref<1x4x8x8xbf16, #tpu.memory_space<vmem>>, %arg4: memref<1x4x8x8xbf16, #tpu.memory_space<vmem>>, %arg5: memref<1x4x8x8xbf16, #tpu.memory_space<vmem>>, %arg6: memref<32x32xbf16, #tpu.memory_space<vmem>>, %arg7: memref<1x32xf32, #tpu.memory_space<vmem>>, %arg8: memref<1x8x32xbf16, #tpu.memory_space<vmem>>, %arg9: memref<1x8x32xbf16, #tpu.memory_space<vmem>>) attributes {dimension_semantics = [#tpu.dimension_semantics<parallel>, #tpu.dimension_semantics<parallel>], iteration_bounds = array<i64: 2, 1>, scalar_prefetch = 1 : i64, scratch_operands = 0 : i64, tpu.core_type = #tpu.core_type<tc>, window_params = [{transform_indices = @transform_0, window_bounds = array<i64: 1, 4, 8, 8>}, {transform_indices = @transform_1, window_bounds = array<i64: 1, 4, 8, 8>}, {transform_indices = @transform_2, window_bounds = array<i64: 1, 4, 8, 8>}, {pipeline_mode = #tpu.pipeline_mode<synchronous>, transform_indices = @transform_3, window_bounds = array<i64: 32, 32>}, {pipeline_mode = #tpu.pipeline_mode<synchronous>, transform_indices = @transform_4, window_bounds = array<i64: 1, 32>}, {transform_indices = @transform_5, window_bounds = array<i64: 1, 8, 32>}, {transform_indices = @transform_6, window_bounds = array<i64: 1, 8, 32>}]} {
    %c8_i32 = arith.constant 8 : i32
    %0 = arith.muli %arg1, %c8_i32 : i32
    %1 = arith.index_cast %arg0 : i32 to index
    %2 = memref.load %arg2[%1] : memref<2xi32, #tpu.memory_space<smem>>
    %3 = tpu.iota {dimensions = array<i32: 0>} : vector<8x8xi32>
    %4 = vector.broadcast %0 : i32 to vector<8x8xi32>
    %5 = arith.addi %4, %3 : vector<8x8xi32>
    %6 = tpu.iota {dimensions = array<i32: 1>} : vector<8x8xi32>
    %7 = vector.broadcast %2 : i32 to vector<8x8xi32>
    %8 = arith.cmpi sge, %6, %7 : vector<8x8xi32>
    %9 = arith.cmpi sgt, %6, %5 : vector<8x8xi32>
    %10 = arith.ori %8, %9 : vector<8x8xi1>
    %cst = arith.constant -1.000000e+09 : f32
    %cst_0 = arith.constant 0.000000e+00 : f32
    %11 = vector.broadcast %cst : f32 to vector<8x8xf32>
    %12 = vector.broadcast %cst_0 : f32 to vector<8x8xf32>
    %13 = arith.select %10, %11, %12 : vector<8x8xi1>, vector<8x8xf32>
    %c0 = arith.constant 0 : index
    %c0_1 = arith.constant 0 : index
    %c0_2 = arith.constant 0 : index
    %c0_3 = arith.constant 0 : index
    %14 = vector.load %arg3[%c0, %c0_1, %c0_2, %c0_3] : memref<1x4x8x8xbf16, #tpu.memory_space<vmem>>, vector<1x1x8x8xbf16>
    %15 = vector.shape_cast %14 : vector<1x1x8x8xbf16> to vector<8x8xbf16>
    %c0_4 = arith.constant 0 : index
    %c0_5 = arith.constant 0 : index
    %c0_6 = arith.constant 0 : index
    %c0_7 = arith.constant 0 : index
    %16 = vector.load %arg4[%c0_4, %c0_5, %c0_6, %c0_7] : memref<1x4x8x8xbf16, #tpu.memory_space<vmem>>, vector<1x1x8x8xbf16>
    %17 = vector.shape_cast %16 : vector<1x1x8x8xbf16> to vector<8x8xbf16>
    %c0_8 = arith.constant 0 : index
    %c0_9 = arith.constant 0 : index
    %c0_10 = arith.constant 0 : index
    %c0_11 = arith.constant 0 : index
    %18 = vector.load %arg5[%c0_8, %c0_9, %c0_10, %c0_11] : memref<1x4x8x8xbf16, #tpu.memory_space<vmem>>, vector<1x1x8x8xbf16>
    %19 = vector.shape_cast %18 : vector<1x1x8x8xbf16> to vector<8x8xbf16>
    %cst_12 = arith.constant dense<0.000000e+00> : vector<8x8xf32>
    %20 = tpu.matmul %15, %17, %cst_12 {dimension_numbers = #tpu.dot_dimension_numbers<[1], [1], [0], [0], [0, 0, 1, 0], [], []>} : vector<8x8xbf16>, vector<8x8xbf16>, vector<8x8xf32> -> vector<8x8xf32>
    %21 = arith.addf %20, %13 : vector<8x8xf32>
    %cst_13 = arith.constant dense<0xFF800000> : vector<8xf32>
    %22 = vector.multi_reduction <maximumf>, %21, %cst_13 [1] : vector<8x8xf32> to vector<8xf32>
    %23 = vector.shape_cast %22 : vector<8xf32> to vector<8x1xf32>
    %24 = vector.broadcast %23 : vector<8x1xf32> to vector<8x8xf32>
    %25 = arith.subf %21, %24 : vector<8x8xf32>
    %26 = math.exp %25 : vector<8x8xf32>
    %cst_14 = arith.constant dense<0.000000e+00> : vector<8xf32>
    %27 = vector.multi_reduction <add>, %26, %cst_14 [1] : vector<8x8xf32> to vector<8xf32>
    %28 = vector.shape_cast %27 : vector<8xf32> to vector<8x1xf32>
    %29 = tpu.reciprocal %28 {approx = true} : vector<8x1xf32> -> vector<8x1xf32>
    %30 = vector.broadcast %29 : vector<8x1xf32> to vector<8x8xf32>
    %31 = arith.mulf %26, %30 : vector<8x8xf32>
    %32 = arith.truncf %31 : vector<8x8xf32> to vector<8x8xbf16>
    %cst_15 = arith.constant dense<0.000000e+00> : vector<8x8xf32>
    %33 = tpu.matmul %32, %19, %cst_15 {dimension_numbers = #tpu.dot_dimension_numbers<[1], [0], [0], [1], [0, 0, 1, 1], [], []>} : vector<8x8xbf16>, vector<8x8xbf16>, vector<8x8xf32> -> vector<8x8xf32>
    %c0_16 = arith.constant 0 : index
    %c1 = arith.constant 1 : index
    %c0_17 = arith.constant 0 : index
    %c0_18 = arith.constant 0 : index
    %34 = vector.load %arg3[%c0_16, %c1, %c0_17, %c0_18] : memref<1x4x8x8xbf16, #tpu.memory_space<vmem>>, vector<1x1x8x8xbf16>
    %35 = vector.shape_cast %34 : vector<1x1x8x8xbf16> to vector<8x8xbf16>
    %c0_19 = arith.constant 0 : index
    %c1_20 = arith.constant 1 : index
    %c0_21 = arith.constant 0 : index
    %c0_22 = arith.constant 0 : index
    %36 = vector.load %arg4[%c0_19, %c1_20, %c0_21, %c0_22] : memref<1x4x8x8xbf16, #tpu.memory_space<vmem>>, vector<1x1x8x8xbf16>
    %37 = vector.shape_cast %36 : vector<1x1x8x8xbf16> to vector<8x8xbf16>
    %c0_23 = arith.constant 0 : index
    %c1_24 = arith.constant 1 : index
    %c0_25 = arith.constant 0 : index
    %c0_26 = arith.constant 0 : index
    %38 = vector.load %arg5[%c0_23, %c1_24, %c0_25, %c0_26] : memref<1x4x8x8xbf16, #tpu.memory_space<vmem>>, vector<1x1x8x8xbf16>
    %39 = vector.shape_cast %38 : vector<1x1x8x8xbf16> to vector<8x8xbf16>
    %cst_27 = arith.constant dense<0.000000e+00> : vector<8x8xf32>
    %40 = tpu.matmul %35, %37, %cst_27 {dimension_numbers = #tpu.dot_dimension_numbers<[1], [1], [0], [0], [0, 0, 1, 0], [], []>} : vector<8x8xbf16>, vector<8x8xbf16>, vector<8x8xf32> -> vector<8x8xf32>
    %41 = arith.addf %40, %13 : vector<8x8xf32>
    %cst_28 = arith.constant dense<0xFF800000> : vector<8xf32>
    %42 = vector.multi_reduction <maximumf>, %41, %cst_28 [1] : vector<8x8xf32> to vector<8xf32>
    %43 = vector.shape_cast %42 : vector<8xf32> to vector<8x1xf32>
    %44 = vector.broadcast %43 : vector<8x1xf32> to vector<8x8xf32>
    %45 = arith.subf %41, %44 : vector<8x8xf32>
    %46 = math.exp %45 : vector<8x8xf32>
    %cst_29 = arith.constant dense<0.000000e+00> : vector<8xf32>
    %47 = vector.multi_reduction <add>, %46, %cst_29 [1] : vector<8x8xf32> to vector<8xf32>
    %48 = vector.shape_cast %47 : vector<8xf32> to vector<8x1xf32>
    %49 = tpu.reciprocal %48 {approx = true} : vector<8x1xf32> -> vector<8x1xf32>
    %50 = vector.broadcast %49 : vector<8x1xf32> to vector<8x8xf32>
    %51 = arith.mulf %46, %50 : vector<8x8xf32>
    %52 = arith.truncf %51 : vector<8x8xf32> to vector<8x8xbf16>
    %cst_30 = arith.constant dense<0.000000e+00> : vector<8x8xf32>
    %53 = tpu.matmul %52, %39, %cst_30 {dimension_numbers = #tpu.dot_dimension_numbers<[1], [0], [0], [1], [0, 0, 1, 1], [], []>} : vector<8x8xbf16>, vector<8x8xbf16>, vector<8x8xf32> -> vector<8x8xf32>
    %c0_31 = arith.constant 0 : index
    %c2 = arith.constant 2 : index
    %c0_32 = arith.constant 0 : index
    %c0_33 = arith.constant 0 : index
    %54 = vector.load %arg3[%c0_31, %c2, %c0_32, %c0_33] : memref<1x4x8x8xbf16, #tpu.memory_space<vmem>>, vector<1x1x8x8xbf16>
    %55 = vector.shape_cast %54 : vector<1x1x8x8xbf16> to vector<8x8xbf16>
    %c0_34 = arith.constant 0 : index
    %c2_35 = arith.constant 2 : index
    %c0_36 = arith.constant 0 : index
    %c0_37 = arith.constant 0 : index
    %56 = vector.load %arg4[%c0_34, %c2_35, %c0_36, %c0_37] : memref<1x4x8x8xbf16, #tpu.memory_space<vmem>>, vector<1x1x8x8xbf16>
    %57 = vector.shape_cast %56 : vector<1x1x8x8xbf16> to vector<8x8xbf16>
    %c0_38 = arith.constant 0 : index
    %c2_39 = arith.constant 2 : index
    %c0_40 = arith.constant 0 : index
    %c0_41 = arith.constant 0 : index
    %58 = vector.load %arg5[%c0_38, %c2_39, %c0_40, %c0_41] : memref<1x4x8x8xbf16, #tpu.memory_space<vmem>>, vector<1x1x8x8xbf16>
    %59 = vector.shape_cast %58 : vector<1x1x8x8xbf16> to vector<8x8xbf16>
    %cst_42 = arith.constant dense<0.000000e+00> : vector<8x8xf32>
    %60 = tpu.matmul %55, %57, %cst_42 {dimension_numbers = #tpu.dot_dimension_numbers<[1], [1], [0], [0], [0, 0, 1, 0], [], []>} : vector<8x8xbf16>, vector<8x8xbf16>, vector<8x8xf32> -> vector<8x8xf32>
    %61 = arith.addf %60, %13 : vector<8x8xf32>
    %cst_43 = arith.constant dense<0xFF800000> : vector<8xf32>
    %62 = vector.multi_reduction <maximumf>, %61, %cst_43 [1] : vector<8x8xf32> to vector<8xf32>
    %63 = vector.shape_cast %62 : vector<8xf32> to vector<8x1xf32>
    %64 = vector.broadcast %63 : vector<8x1xf32> to vector<8x8xf32>
    %65 = arith.subf %61, %64 : vector<8x8xf32>
    %66 = math.exp %65 : vector<8x8xf32>
    %cst_44 = arith.constant dense<0.000000e+00> : vector<8xf32>
    %67 = vector.multi_reduction <add>, %66, %cst_44 [1] : vector<8x8xf32> to vector<8xf32>
    %68 = vector.shape_cast %67 : vector<8xf32> to vector<8x1xf32>
    %69 = tpu.reciprocal %68 {approx = true} : vector<8x1xf32> -> vector<8x1xf32>
    %70 = vector.broadcast %69 : vector<8x1xf32> to vector<8x8xf32>
    %71 = arith.mulf %66, %70 : vector<8x8xf32>
    %72 = arith.truncf %71 : vector<8x8xf32> to vector<8x8xbf16>
    %cst_45 = arith.constant dense<0.000000e+00> : vector<8x8xf32>
    %73 = tpu.matmul %72, %59, %cst_45 {dimension_numbers = #tpu.dot_dimension_numbers<[1], [0], [0], [1], [0, 0, 1, 1], [], []>} : vector<8x8xbf16>, vector<8x8xbf16>, vector<8x8xf32> -> vector<8x8xf32>
    %c0_46 = arith.constant 0 : index
    %c3 = arith.constant 3 : index
    %c0_47 = arith.constant 0 : index
    %c0_48 = arith.constant 0 : index
    %74 = vector.load %arg3[%c0_46, %c3, %c0_47, %c0_48] : memref<1x4x8x8xbf16, #tpu.memory_space<vmem>>, vector<1x1x8x8xbf16>
    %75 = vector.shape_cast %74 : vector<1x1x8x8xbf16> to vector<8x8xbf16>
    %c0_49 = arith.constant 0 : index
    %c3_50 = arith.constant 3 : index
    %c0_51 = arith.constant 0 : index
    %c0_52 = arith.constant 0 : index
    %76 = vector.load %arg4[%c0_49, %c3_50, %c0_51, %c0_52] : memref<1x4x8x8xbf16, #tpu.memory_space<vmem>>, vector<1x1x8x8xbf16>
    %77 = vector.shape_cast %76 : vector<1x1x8x8xbf16> to vector<8x8xbf16>
    %c0_53 = arith.constant 0 : index
    %c3_54 = arith.constant 3 : index
    %c0_55 = arith.constant 0 : index
    %c0_56 = arith.constant 0 : index
    %78 = vector.load %arg5[%c0_53, %c3_54, %c0_55, %c0_56] : memref<1x4x8x8xbf16, #tpu.memory_space<vmem>>, vector<1x1x8x8xbf16>
    %79 = vector.shape_cast %78 : vector<1x1x8x8xbf16> to vector<8x8xbf16>
    %cst_57 = arith.constant dense<0.000000e+00> : vector<8x8xf32>
    %80 = tpu.matmul %75, %77, %cst_57 {dimension_numbers = #tpu.dot_dimension_numbers<[1], [1], [0], [0], [0, 0, 1, 0], [], []>} : vector<8x8xbf16>, vector<8x8xbf16>, vector<8x8xf32> -> vector<8x8xf32>
    %81 = arith.addf %80, %13 : vector<8x8xf32>
    %cst_58 = arith.constant dense<0xFF800000> : vector<8xf32>
    %82 = vector.multi_reduction <maximumf>, %81, %cst_58 [1] : vector<8x8xf32> to vector<8xf32>
    %83 = vector.shape_cast %82 : vector<8xf32> to vector<8x1xf32>
    %84 = vector.broadcast %83 : vector<8x1xf32> to vector<8x8xf32>
    %85 = arith.subf %81, %84 : vector<8x8xf32>
    %86 = math.exp %85 : vector<8x8xf32>
    %cst_59 = arith.constant dense<0.000000e+00> : vector<8xf32>
    %87 = vector.multi_reduction <add>, %86, %cst_59 [1] : vector<8x8xf32> to vector<8xf32>
    %88 = vector.shape_cast %87 : vector<8xf32> to vector<8x1xf32>
    %89 = tpu.reciprocal %88 {approx = true} : vector<8x1xf32> -> vector<8x1xf32>
    %90 = vector.broadcast %89 : vector<8x1xf32> to vector<8x8xf32>
    %91 = arith.mulf %86, %90 : vector<8x8xf32>
    %92 = arith.truncf %91 : vector<8x8xf32> to vector<8x8xbf16>
    %cst_60 = arith.constant dense<0.000000e+00> : vector<8x8xf32>
    %93 = tpu.matmul %92, %79, %cst_60 {dimension_numbers = #tpu.dot_dimension_numbers<[1], [0], [0], [1], [0, 0, 1, 1], [], []>} : vector<8x8xbf16>, vector<8x8xbf16>, vector<8x8xf32> -> vector<8x8xf32>
    %94 = tpu.concatenate %33, %53, %73, %93 in 1 : vector<8x8xf32>, vector<8x8xf32>, vector<8x8xf32>, vector<8x8xf32> -> vector<8x32xf32>
    %95 = arith.truncf %94 : vector<8x32xf32> to vector<8x32xbf16>
    %c0_61 = arith.constant 0 : index
    %c0_62 = arith.constant 0 : index
    %96 = vector.load %arg6[%c0_61, %c0_62] : memref<32x32xbf16, #tpu.memory_space<vmem>>, vector<32x32xbf16>
    %cst_63 = arith.constant dense<0.000000e+00> : vector<8x32xf32>
    %97 = tpu.matmul %95, %96, %cst_63 {dimension_numbers = #tpu.dot_dimension_numbers<[1], [0], [0], [1], [0, 0, 1, 1], [], []>} : vector<8x32xbf16>, vector<32x32xbf16>, vector<8x32xf32> -> vector<8x32xf32>
    %c0_64 = arith.constant 0 : index
    %c0_65 = arith.constant 0 : index
    %c0_66 = arith.constant 0 : index
    %98 = vector.load %arg8[%c0_64, %c0_65, %c0_66] : memref<1x8x32xbf16, #tpu.memory_space<vmem>>, vector<1x8x32xbf16>
    %99 = vector.shape_cast %98 : vector<1x8x32xbf16> to vector<8x32xbf16>
    %100 = arith.extf %99 : vector<8x32xbf16> to vector<8x32xf32>
    %101 = arith.addf %100, %97 : vector<8x32xf32>
    %c0_67 = arith.constant 0 : index
    %c0_68 = arith.constant 0 : index
    %102 = vector.load %arg7[%c0_67, %c0_68] : memref<1x32xf32, #tpu.memory_space<vmem>>, vector<1x32xf32>
    %103 = vector.broadcast %102 : vector<1x32xf32> to vector<8x32xf32>
    %104 = arith.addf %101, %103 : vector<8x32xf32>
    %105 = arith.truncf %104 : vector<8x32xf32> to vector<8x32xbf16>
    %c0_69 = arith.constant 0 : index
    %c0_70 = arith.constant 0 : index
    %c0_71 = arith.constant 0 : index
    %106 = vector.load %arg9[%c0_69, %c0_70, %c0_71] : memref<1x8x32xbf16, #tpu.memory_space<vmem>>, vector<1x8x32xbf16>
    %107 = vector.shape_cast %106 : vector<1x8x32xbf16> to vector<8x32xbf16>
    %108 = vector.shape_cast %105 : vector<8x32xbf16> to vector<1x8x32xbf16>
    tpu.vector_store %arg9[%c0_69, %c0_70, %c0_71], %108 {strides = array<i32>} : memref<1x8x32xbf16, #tpu.memory_space<vmem>>, vector<1x8x32xbf16>,
    return
  }
  func.func @transform_0(%arg0: i32, %arg1: i32, %arg2: memref<2xi32, #tpu.memory_space<smem>>) -> (i32, i32, i32, i32) {
    %c0_i32 = arith.constant 0 : i32
    %c0_i32_0 = arith.constant 0 : i32
    %c0_i32_1 = arith.constant 0 : i32
    return %arg0, %c0_i32, %arg1, %c0_i32_0 : i32, i32, i32, i32
  }
  func.func @transform_1(%arg0: i32, %arg1: i32, %arg2: memref<2xi32, #tpu.memory_space<smem>>) -> (i32, i32, i32, i32) {
    %c0_i32 = arith.constant 0 : i32
    %c0_i32_0 = arith.constant 0 : i32
    %c0_i32_1 = arith.constant 0 : i32
    %c0_i32_2 = arith.constant 0 : i32
    return %arg0, %c0_i32, %c0_i32_0, %c0_i32_1 : i32, i32, i32, i32
  }
  func.func @transform_2(%arg0: i32, %arg1: i32, %arg2: memref<2xi32, #tpu.memory_space<smem>>) -> (i32, i32, i32, i32) {
    %c0_i32 = arith.constant 0 : i32
    %c0_i32_0 = arith.constant 0 : i32
    %c0_i32_1 = arith.constant 0 : i32
    %c0_i32_2 = arith.constant 0 : i32
    return %arg0, %c0_i32, %c0_i32_0, %c0_i32_1 : i32, i32, i32, i32
  }
  func.func @transform_3(%arg0: i32, %arg1: i32, %arg2: memref<2xi32, #tpu.memory_space<smem>>) -> (i32, i32) {
    %c0_i32 = arith.constant 0 : i32
    %c0_i32_0 = arith.constant 0 : i32
    %c0_i32_1 = arith.constant 0 : i32
    return %c0_i32, %c0_i32_0 : i32, i32
  }
  func.func @transform_4(%arg0: i32, %arg1: i32, %arg2: memref<2xi32, #tpu.memory_space<smem>>) -> (i32, i32) {
    %c0_i32 = arith.constant 0 : i32
    %c0_i32_0 = arith.constant 0 : i32
    %c0_i32_1 = arith.constant 0 : i32
    return %c0_i32, %c0_i32_0 : i32, i32
  }
  func.func @transform_5(%arg0: i32, %arg1: i32, %arg2: memref<2xi32, #tpu.memory_space<smem>>) -> (i32, i32, i32) {
    %c0_i32 = arith.constant 0 : i32
    %c0_i32_0 = arith.constant 0 : i32
    return %arg0, %arg1, %c0_i32 : i32, i32, i32
  }
  func.func @transform_6(%arg0: i32, %arg1: i32, %arg2: memref<2xi32, #tpu.memory_space<smem>>) -> (i32, i32, i32) {
    %c0_i32 = arith.constant 0 : i32
    %c0_i32_0 = arith.constant 0 : i32
    return %arg0, %arg1, %c0_i32 : i32, i32, i32
  }
}

module attributes {stable_mosaic.version = 11 : i64} {
  func.func @_ln_matmul_scale_kernel(%arg0: i32, %arg1: memref<16x32xbf16, #tpu.memory_space<vmem>>, %arg2: memref<1x32xf32, #tpu.memory_space<vmem>>, %arg3: memref<1x32xf32, #tpu.memory_space<vmem>>, %arg4: memref<32x32xbf16, #tpu.memory_space<vmem>>, %arg5: memref<1x32xf32, #tpu.memory_space<vmem>>, %arg6: memref<1x32xf32, #tpu.memory_space<vmem>>, %arg7: memref<16x32xbf16, #tpu.memory_space<vmem>>) attributes {dimension_semantics = [#tpu.dimension_semantics<parallel>], iteration_bounds = array<i64: 1>, scalar_prefetch = 0 : i64, scratch_operands = 0 : i64, tpu.core_type = #tpu.core_type<tc>, window_params = [{transform_indices = @transform_0, window_bounds = array<i64: 16, 32>}, {pipeline_mode = #tpu.pipeline_mode<synchronous>, transform_indices = @transform_1, window_bounds = array<i64: 1, 32>}, {pipeline_mode = #tpu.pipeline_mode<synchronous>, transform_indices = @transform_2, window_bounds = array<i64: 1, 32>}, {pipeline_mode = #tpu.pipeline_mode<synchronous>, transform_indices = @transform_3, window_bounds = array<i64: 32, 32>}, {pipeline_mode = #tpu.pipeline_mode<synchronous>, transform_indices = @transform_4, window_bounds = array<i64: 1, 32>}, {pipeline_mode = #tpu.pipeline_mode<synchronous>, transform_indices = @transform_5, window_bounds = array<i64: 1, 32>}, {transform_indices = @transform_6, window_bounds = array<i64: 16, 32>}]} {
    %c0 = arith.constant 0 : index
    %c0_0 = arith.constant 0 : index
    %0 = vector.load %arg1[%c0, %c0_0] : memref<16x32xbf16, #tpu.memory_space<vmem>>, vector<16x32xbf16>
    %1 = arith.extf %0 : vector<16x32xbf16> to vector<16x32xf32>
    %cst = arith.constant dense<0.000000e+00> : vector<16xf32>
    %2 = vector.multi_reduction <add>, %1, %cst [1] : vector<16x32xf32> to vector<16xf32>
    %3 = vector.shape_cast %2 : vector<16xf32> to vector<16x1xf32>
    %cst_1 = arith.constant 3.200000e+01 : f32
    %4 = vector.broadcast %cst_1 : f32 to vector<16x1xf32>
    %5 = arith.divf %3, %4 : vector<16x1xf32>
    %6 = vector.broadcast %5 : vector<16x1xf32> to vector<16x32xf32>
    %7 = arith.subf %1, %6 : vector<16x32xf32>
    %8 = arith.mulf %7, %7 : vector<16x32xf32>
    %cst_2 = arith.constant dense<0.000000e+00> : vector<16xf32>
    %9 = vector.multi_reduction <add>, %8, %cst_2 [1] : vector<16x32xf32> to vector<16xf32>
    %10 = vector.shape_cast %9 : vector<16xf32> to vector<16x1xf32>
    %cst_3 = arith.constant 3.200000e+01 : f32
    %11 = vector.broadcast %cst_3 : f32 to vector<16x1xf32>
    %12 = arith.divf %10, %11 : vector<16x1xf32>
    %13 = vector.broadcast %5 : vector<16x1xf32> to vector<16x32xf32>
    %14 = arith.subf %1, %13 : vector<16x32xf32>
    %cst_4 = arith.constant 9.99999974E-6 : f32
    %15 = vector.broadcast %cst_4 : f32 to vector<16x1xf32>
    %16 = arith.addf %12, %15 : vector<16x1xf32>
    %17 = math.rsqrt %16 : vector<16x1xf32>
    %18 = vector.broadcast %17 : vector<16x1xf32> to vector<16x32xf32>
    %19 = arith.mulf %14, %18 : vector<16x32xf32>
    %c0_5 = arith.constant 0 : index
    %c0_6 = arith.constant 0 : index
    %20 = vector.load %arg2[%c0_5, %c0_6] : memref<1x32xf32, #tpu.memory_space<vmem>>, vector<1x32xf32>
    %21 = vector.broadcast %20 : vector<1x32xf32> to vector<16x32xf32>
    %22 = arith.mulf %19, %21 : vector<16x32xf32>
    %c0_7 = arith.constant 0 : index
    %c0_8 = arith.constant 0 : index
    %23 = vector.load %arg3[%c0_7, %c0_8] : memref<1x32xf32, #tpu.memory_space<vmem>>, vector<1x32xf32>
    %24 = vector.broadcast %23 : vector<1x32xf32> to vector<16x32xf32>
    %25 = arith.addf %22, %24 : vector<16x32xf32>
    %26 = arith.truncf %25 : vector<16x32xf32> to vector<16x32xbf16>
    %c0_9 = arith.constant 0 : index
    %c0_10 = arith.constant 0 : index
    %27 = vector.load %arg4[%c0_9, %c0_10] : memref<32x32xbf16, #tpu.memory_space<vmem>>, vector<32x32xbf16>
    %cst_11 = arith.constant dense<0.000000e+00> : vector<16x32xf32>
    %28 = tpu.matmul %26, %27, %cst_11 {dimension_numbers = #tpu.dot_dimension_numbers<[1], [0], [0], [1], [0, 0, 1, 1], [], []>} : vector<16x32xbf16>, vector<32x32xbf16>, vector<16x32xf32> -> vector<16x32xf32>
    %c0_12 = arith.constant 0 : index
    %c0_13 = arith.constant 0 : index
    %29 = vector.load %arg5[%c0_12, %c0_13] : memref<1x32xf32, #tpu.memory_space<vmem>>, vector<1x32xf32>
    %30 = vector.broadcast %29 : vector<1x32xf32> to vector<16x32xf32>
    %31 = arith.mulf %28, %30 : vector<16x32xf32>
    %c0_14 = arith.constant 0 : index
    %c0_15 = arith.constant 0 : index
    %32 = vector.load %arg6[%c0_14, %c0_15] : memref<1x32xf32, #tpu.memory_space<vmem>>, vector<1x32xf32>
    %33 = vector.broadcast %32 : vector<1x32xf32> to vector<16x32xf32>
    %34 = arith.addf %31, %33 : vector<16x32xf32>
    %35 = arith.truncf %34 : vector<16x32xf32> to vector<16x32xbf16>
    %c0_16 = arith.constant 0 : index
    %c0_17 = arith.constant 0 : index
    %36 = vector.load %arg7[%c0_16, %c0_17] : memref<16x32xbf16, #tpu.memory_space<vmem>>, vector<16x32xbf16>
    tpu.vector_store %arg7[%c0_16, %c0_17], %35 {strides = array<i32>} : memref<16x32xbf16, #tpu.memory_space<vmem>>, vector<16x32xbf16>,
    return
  }
  func.func @transform_0(%arg0: i32) -> (i32, i32) {
    %c0_i32 = arith.constant 0 : i32
    %c0_i32_0 = arith.constant 0 : i32
    return %arg0, %c0_i32 : i32, i32
  }
  func.func @transform_1(%arg0: i32) -> (i32, i32) {
    %c0_i32 = arith.constant 0 : i32
    %c0_i32_0 = arith.constant 0 : i32
    %c0_i32_1 = arith.constant 0 : i32
    return %c0_i32, %c0_i32_0 : i32, i32
  }
  func.func @transform_2(%arg0: i32) -> (i32, i32) {
    %c0_i32 = arith.constant 0 : i32
    %c0_i32_0 = arith.constant 0 : i32
    %c0_i32_1 = arith.constant 0 : i32
    return %c0_i32, %c0_i32_0 : i32, i32
  }
  func.func @transform_3(%arg0: i32) -> (i32, i32) {
    %c0_i32 = arith.constant 0 : i32
    %c0_i32_0 = arith.constant 0 : i32
    %c0_i32_1 = arith.constant 0 : i32
    return %c0_i32, %c0_i32_0 : i32, i32
  }
  func.func @transform_4(%arg0: i32) -> (i32, i32) {
    %c0_i32 = arith.constant 0 : i32
    %c0_i32_0 = arith.constant 0 : i32
    %c0_i32_1 = arith.constant 0 : i32
    return %c0_i32, %c0_i32_0 : i32, i32
  }
  func.func @transform_5(%arg0: i32) -> (i32, i32) {
    %c0_i32 = arith.constant 0 : i32
    %c0_i32_0 = arith.constant 0 : i32
    %c0_i32_1 = arith.constant 0 : i32
    return %c0_i32, %c0_i32_0 : i32, i32
  }
  func.func @transform_6(%arg0: i32) -> (i32, i32) {
    %c0_i32 = arith.constant 0 : i32
    %c0_i32_0 = arith.constant 0 : i32
    return %arg0, %c0_i32 : i32, i32
  }
}

module attributes {stable_mosaic.version = 11 : i64} {
  func.func @_ln_ffn_kernel(%arg0: i32, %arg1: memref<16x32xbf16, #tpu.memory_space<vmem>>, %arg2: memref<1x32xf32, #tpu.memory_space<vmem>>, %arg3: memref<1x32xf32, #tpu.memory_space<vmem>>, %arg4: memref<32x64xbf16, #tpu.memory_space<vmem>>, %arg5: memref<1x64xf32, #tpu.memory_space<vmem>>, %arg6: memref<64x32xbf16, #tpu.memory_space<vmem>>, %arg7: memref<1x32xf32, #tpu.memory_space<vmem>>, %arg8: memref<16x32xbf16, #tpu.memory_space<vmem>>) attributes {dimension_semantics = [#tpu.dimension_semantics<parallel>], iteration_bounds = array<i64: 1>, scalar_prefetch = 0 : i64, scratch_operands = 0 : i64, tpu.core_type = #tpu.core_type<tc>, window_params = [{transform_indices = @transform_0, window_bounds = array<i64: 16, 32>}, {pipeline_mode = #tpu.pipeline_mode<synchronous>, transform_indices = @transform_1, window_bounds = array<i64: 1, 32>}, {pipeline_mode = #tpu.pipeline_mode<synchronous>, transform_indices = @transform_2, window_bounds = array<i64: 1, 32>}, {pipeline_mode = #tpu.pipeline_mode<synchronous>, transform_indices = @transform_3, window_bounds = array<i64: 32, 64>}, {pipeline_mode = #tpu.pipeline_mode<synchronous>, transform_indices = @transform_4, window_bounds = array<i64: 1, 64>}, {pipeline_mode = #tpu.pipeline_mode<synchronous>, transform_indices = @transform_5, window_bounds = array<i64: 64, 32>}, {pipeline_mode = #tpu.pipeline_mode<synchronous>, transform_indices = @transform_6, window_bounds = array<i64: 1, 32>}, {transform_indices = @transform_7, window_bounds = array<i64: 16, 32>}]} {
    %c0 = arith.constant 0 : index
    %c0_0 = arith.constant 0 : index
    %0 = vector.load %arg1[%c0, %c0_0] : memref<16x32xbf16, #tpu.memory_space<vmem>>, vector<16x32xbf16>
    %1 = arith.extf %0 : vector<16x32xbf16> to vector<16x32xf32>
    %cst = arith.constant dense<0.000000e+00> : vector<16xf32>
    %2 = vector.multi_reduction <add>, %1, %cst [1] : vector<16x32xf32> to vector<16xf32>
    %3 = vector.shape_cast %2 : vector<16xf32> to vector<16x1xf32>
    %cst_1 = arith.constant 3.200000e+01 : f32
    %4 = vector.broadcast %cst_1 : f32 to vector<16x1xf32>
    %5 = arith.divf %3, %4 : vector<16x1xf32>
    %6 = vector.broadcast %5 : vector<16x1xf32> to vector<16x32xf32>
    %7 = arith.subf %1, %6 : vector<16x32xf32>
    %8 = arith.mulf %7, %7 : vector<16x32xf32>
    %cst_2 = arith.constant dense<0.000000e+00> : vector<16xf32>
    %9 = vector.multi_reduction <add>, %8, %cst_2 [1] : vector<16x32xf32> to vector<16xf32>
    %10 = vector.shape_cast %9 : vector<16xf32> to vector<16x1xf32>
    %cst_3 = arith.constant 3.200000e+01 : f32
    %11 = vector.broadcast %cst_3 : f32 to vector<16x1xf32>
    %12 = arith.divf %10, %11 : vector<16x1xf32>
    %13 = vector.broadcast %5 : vector<16x1xf32> to vector<16x32xf32>
    %14 = arith.subf %1, %13 : vector<16x32xf32>
    %cst_4 = arith.constant 9.99999974E-6 : f32
    %15 = vector.broadcast %cst_4 : f32 to vector<16x1xf32>
    %16 = arith.addf %12, %15 : vector<16x1xf32>
    %17 = math.rsqrt %16 : vector<16x1xf32>
    %18 = vector.broadcast %17 : vector<16x1xf32> to vector<16x32xf32>
    %19 = arith.mulf %14, %18 : vector<16x32xf32>
    %c0_5 = arith.constant 0 : index
    %c0_6 = arith.constant 0 : index
    %20 = vector.load %arg2[%c0_5, %c0_6] : memref<1x32xf32, #tpu.memory_space<vmem>>, vector<1x32xf32>
    %21 = vector.broadcast %20 : vector<1x32xf32> to vector<16x32xf32>
    %22 = arith.mulf %19, %21 : vector<16x32xf32>
    %c0_7 = arith.constant 0 : index
    %c0_8 = arith.constant 0 : index
    %23 = vector.load %arg3[%c0_7, %c0_8] : memref<1x32xf32, #tpu.memory_space<vmem>>, vector<1x32xf32>
    %24 = vector.broadcast %23 : vector<1x32xf32> to vector<16x32xf32>
    %25 = arith.addf %22, %24 : vector<16x32xf32>
    %26 = arith.truncf %25 : vector<16x32xf32> to vector<16x32xbf16>
    %c0_9 = arith.constant 0 : index
    %c0_10 = arith.constant 0 : index
    %27 = vector.load %arg4[%c0_9, %c0_10] : memref<32x64xbf16, #tpu.memory_space<vmem>>, vector<32x64xbf16>
    %cst_11 = arith.constant dense<0.000000e+00> : vector<16x64xf32>
    %28 = tpu.matmul %26, %27, %cst_11 {dimension_numbers = #tpu.dot_dimension_numbers<[1], [0], [0], [1], [0, 0, 1, 1], [], []>} : vector<16x32xbf16>, vector<32x64xbf16>, vector<16x64xf32> -> vector<16x64xf32>
    %c0_12 = arith.constant 0 : index
    %c0_13 = arith.constant 0 : index
    %29 = vector.load %arg5[%c0_12, %c0_13] : memref<1x64xf32, #tpu.memory_space<vmem>>, vector<1x64xf32>
    %30 = vector.broadcast %29 : vector<1x64xf32> to vector<16x64xf32>
    %31 = arith.addf %28, %30 : vector<16x64xf32>
    %cst_14 = arith.constant 0.000000e+00 : f32
    %32 = vector.broadcast %cst_14 : f32 to vector<16x64xf32>
    %33 = arith.maximumf %31, %32 : vector<16x64xf32>
    %34 = arith.truncf %33 : vector<16x64xf32> to vector<16x64xbf16>
    %c0_15 = arith.constant 0 : index
    %c0_16 = arith.constant 0 : index
    %35 = vector.load %arg6[%c0_15, %c0_16] : memref<64x32xbf16, #tpu.memory_space<vmem>>, vector<64x32xbf16>
    %cst_17 = arith.constant dense<0.000000e+00> : vector<16x32xf32>
    %36 = tpu.matmul %34, %35, %cst_17 {dimension_numbers = #tpu.dot_dimension_numbers<[1], [0], [0], [1], [0, 0, 1, 1], [], []>} : vector<16x64xbf16>, vector<64x32xbf16>, vector<16x32xf32> -> vector<16x32xf32>
    %c0_18 = arith.constant 0 : index
    %c0_19 = arith.constant 0 : index
    %37 = vector.load %arg7[%c0_18, %c0_19] : memref<1x32xf32, #tpu.memory_space<vmem>>, vector<1x32xf32>
    %38 = vector.broadcast %37 : vector<1x32xf32> to vector<16x32xf32>
    %39 = arith.addf %36, %38 : vector<16x32xf32>
    %40 = arith.addf %1, %39 : vector<16x32xf32>
    %41 = arith.truncf %40 : vector<16x32xf32> to vector<16x32xbf16>
    %c0_20 = arith.constant 0 : index
    %c0_21 = arith.constant 0 : index
    %42 = vector.load %arg8[%c0_20, %c0_21] : memref<16x32xbf16, #tpu.memory_space<vmem>>, vector<16x32xbf16>
    tpu.vector_store %arg8[%c0_20, %c0_21], %41 {strides = array<i32>} : memref<16x32xbf16, #tpu.memory_space<vmem>>, vector<16x32xbf16>,
    return
  }
  func.func @transform_0(%arg0: i32) -> (i32, i32) {
    %c0_i32 = arith.constant 0 : i32
    %c0_i32_0 = arith.constant 0 : i32
    return %arg0, %c0_i32 : i32, i32
  }
  func.func @transform_1(%arg0: i32) -> (i32, i32) {
    %c0_i32 = arith.constant 0 : i32
    %c0_i32_0 = arith.constant 0 : i32
    %c0_i32_1 = arith.constant 0 : i32
    return %c0_i32, %c0_i32_0 : i32, i32
  }
  func.func @transform_2(%arg0: i32) -> (i32, i32) {
    %c0_i32 = arith.constant 0 : i32
    %c0_i32_0 = arith.constant 0 : i32
    %c0_i32_1 = arith.constant 0 : i32
    return %c0_i32, %c0_i32_0 : i32, i32
  }
  func.func @transform_3(%arg0: i32) -> (i32, i32) {
    %c0_i32 = arith.constant 0 : i32
    %c0_i32_0 = arith.constant 0 : i32
    %c0_i32_1 = arith.constant 0 : i32
    return %c0_i32, %c0_i32_0 : i32, i32
  }
  func.func @transform_4(%arg0: i32) -> (i32, i32) {
    %c0_i32 = arith.constant 0 : i32
    %c0_i32_0 = arith.constant 0 : i32
    %c0_i32_1 = arith.constant 0 : i32
    return %c0_i32, %c0_i32_0 : i32, i32
  }
  func.func @transform_5(%arg0: i32) -> (i32, i32) {
    %c0_i32 = arith.constant 0 : i32
    %c0_i32_0 = arith.constant 0 : i32
    %c0_i32_1 = arith.constant 0 : i32
    return %c0_i32, %c0_i32_0 : i32, i32
  }
  func.func @transform_6(%arg0: i32) -> (i32, i32) {
    %c0_i32 = arith.constant 0 : i32
    %c0_i32_0 = arith.constant 0 : i32
    %c0_i32_1 = arith.constant 0 : i32
    return %c0_i32, %c0_i32_0 : i32, i32
  }
  func.func @transform_7(%arg0: i32) -> (i32, i32) {
    %c0_i32 = arith.constant 0 : i32
    %c0_i32_0 = arith.constant 0 : i32
    return %arg0, %c0_i32 : i32, i32
  }
}

module attributes {stable_mosaic.version = 11 : i64} {
  func.func @_layernorm_kernel(%arg0: i32, %arg1: memref<16x32xbf16, #tpu.memory_space<vmem>>, %arg2: memref<1x32xf32, #tpu.memory_space<vmem>>, %arg3: memref<1x32xf32, #tpu.memory_space<vmem>>, %arg4: memref<16x32xbf16, #tpu.memory_space<vmem>>) attributes {dimension_semantics = [#tpu.dimension_semantics<parallel>], iteration_bounds = array<i64: 1>, scalar_prefetch = 0 : i64, scratch_operands = 0 : i64, tpu.core_type = #tpu.core_type<tc>, window_params = [{transform_indices = @transform_0, window_bounds = array<i64: 16, 32>}, {pipeline_mode = #tpu.pipeline_mode<synchronous>, transform_indices = @transform_1, window_bounds = array<i64: 1, 32>}, {pipeline_mode = #tpu.pipeline_mode<synchronous>, transform_indices = @transform_2, window_bounds = array<i64: 1, 32>}, {transform_indices = @transform_3, window_bounds = array<i64: 16, 32>}]} {
    %c0 = arith.constant 0 : index
    %c0_0 = arith.constant 0 : index
    %0 = vector.load %arg1[%c0, %c0_0] : memref<16x32xbf16, #tpu.memory_space<vmem>>, vector<16x32xbf16>
    %1 = arith.extf %0 : vector<16x32xbf16> to vector<16x32xf32>
    %cst = arith.constant dense<0.000000e+00> : vector<16xf32>
    %2 = vector.multi_reduction <add>, %1, %cst [1] : vector<16x32xf32> to vector<16xf32>
    %3 = vector.shape_cast %2 : vector<16xf32> to vector<16x1xf32>
    %cst_1 = arith.constant 3.200000e+01 : f32
    %4 = vector.broadcast %cst_1 : f32 to vector<16x1xf32>
    %5 = arith.divf %3, %4 : vector<16x1xf32>
    %6 = vector.broadcast %5 : vector<16x1xf32> to vector<16x32xf32>
    %7 = arith.subf %1, %6 : vector<16x32xf32>
    %8 = arith.mulf %7, %7 : vector<16x32xf32>
    %cst_2 = arith.constant dense<0.000000e+00> : vector<16xf32>
    %9 = vector.multi_reduction <add>, %8, %cst_2 [1] : vector<16x32xf32> to vector<16xf32>
    %10 = vector.shape_cast %9 : vector<16xf32> to vector<16x1xf32>
    %cst_3 = arith.constant 3.200000e+01 : f32
    %11 = vector.broadcast %cst_3 : f32 to vector<16x1xf32>
    %12 = arith.divf %10, %11 : vector<16x1xf32>
    %13 = vector.broadcast %5 : vector<16x1xf32> to vector<16x32xf32>
    %14 = arith.subf %1, %13 : vector<16x32xf32>
    %cst_4 = arith.constant 9.99999974E-6 : f32
    %15 = vector.broadcast %cst_4 : f32 to vector<16x1xf32>
    %16 = arith.addf %12, %15 : vector<16x1xf32>
    %17 = math.rsqrt %16 : vector<16x1xf32>
    %18 = vector.broadcast %17 : vector<16x1xf32> to vector<16x32xf32>
    %19 = arith.mulf %14, %18 : vector<16x32xf32>
    %c0_5 = arith.constant 0 : index
    %c0_6 = arith.constant 0 : index
    %20 = vector.load %arg2[%c0_5, %c0_6] : memref<1x32xf32, #tpu.memory_space<vmem>>, vector<1x32xf32>
    %21 = vector.broadcast %20 : vector<1x32xf32> to vector<16x32xf32>
    %22 = arith.mulf %19, %21 : vector<16x32xf32>
    %c0_7 = arith.constant 0 : index
    %c0_8 = arith.constant 0 : index
    %23 = vector.load %arg3[%c0_7, %c0_8] : memref<1x32xf32, #tpu.memory_space<vmem>>, vector<1x32xf32>
    %24 = vector.broadcast %23 : vector<1x32xf32> to vector<16x32xf32>
    %25 = arith.addf %22, %24 : vector<16x32xf32>
    %26 = arith.truncf %25 : vector<16x32xf32> to vector<16x32xbf16>
    %c0_9 = arith.constant 0 : index
    %c0_10 = arith.constant 0 : index
    %27 = vector.load %arg4[%c0_9, %c0_10] : memref<16x32xbf16, #tpu.memory_space<vmem>>, vector<16x32xbf16>
    tpu.vector_store %arg4[%c0_9, %c0_10], %26 {strides = array<i32>} : memref<16x32xbf16, #tpu.memory_space<vmem>>, vector<16x32xbf16>,
    return
  }
  func.func @transform_0(%arg0: i32) -> (i32, i32) {
    %c0_i32 = arith.constant 0 : i32
    %c0_i32_0 = arith.constant 0 : i32
    return %arg0, %c0_i32 : i32, i32
  }
  func.func @transform_1(%arg0: i32) -> (i32, i32) {
    %c0_i32 = arith.constant 0 : i32
    %c0_i32_0 = arith.constant 0 : i32
    %c0_i32_1 = arith.constant 0 : i32
    return %c0_i32, %c0_i32_0 : i32, i32
  }
  func.func @transform_2(%arg0: i32) -> (i32, i32) {
    %c0_i32 = arith.constant 0 : i32
    %c0_i32_0 = arith.constant 0 : i32
    %c0_i32_1 = arith.constant 0 : i32
    return %c0_i32, %c0_i32_0 : i32, i32
  }
  func.func @transform_3(%arg0: i32) -> (i32, i32) {
    %c0_i32 = arith.constant 0 : i32
    %c0_i32_0 = arith.constant 0 : i32
    return %arg0, %c0_i32 : i32, i32
  }
}

module attributes {stable_mosaic.version = 11 : i64} {
  func.func @_attention_kernel(%arg0: i32, %arg1: i32, %arg2: memref<2xi32, #tpu.memory_space<smem>>, %arg3: memref<1x4x8x8xbf16, #tpu.memory_space<vmem>>, %arg4: memref<1x4x8x8xbf16, #tpu.memory_space<vmem>>, %arg5: memref<1x4x8x8xbf16, #tpu.memory_space<vmem>>, %arg6: memref<32x32xbf16, #tpu.memory_space<vmem>>, %arg7: memref<1x32xf32, #tpu.memory_space<vmem>>, %arg8: memref<1x8x32xbf16, #tpu.memory_space<vmem>>, %arg9: memref<1x8x32xbf16, #tpu.memory_space<vmem>>) attributes {dimension_semantics = [#tpu.dimension_semantics<parallel>, #tpu.dimension_semantics<parallel>], iteration_bounds = array<i64: 2, 1>, scalar_prefetch = 1 : i64, scratch_operands = 0 : i64, tpu.core_type = #tpu.core_type<tc>, window_params = [{transform_indices = @transform_0, window_bounds = array<i64: 1, 4, 8, 8>}, {transform_indices = @transform_1, window_bounds = array<i64: 1, 4, 8, 8>}, {transform_indices = @transform_2, window_bounds = array<i64: 1, 4, 8, 8>}, {pipeline_mode = #tpu.pipeline_mode<synchronous>, transform_indices = @transform_3, window_bounds = array<i64: 32, 32>}, {pipeline_mode = #tpu.pipeline_mode<synchronous>, transform_indices = @transform_4, window_bounds = array<i64: 1, 32>}, {transform_indices = @transform_5, window_bounds = array<i64: 1, 8, 32>}, {transform_indices = @transform_6, window_bounds = array<i64: 1, 8, 32>}]} {
    %c8_i32 = arith.constant 8 : i32
    %0 = arith.muli %arg1, %c8_i32 : i32
    %1 = arith.index_cast %arg0 : i32 to index
    %2 = memref.load %arg2[%1] : memref<2xi32, #tpu.memory_space<smem>>
    %3 = tpu.iota {dimensions = array<i32: 0>} : vector<8x8xi32>
    %4 = vector.broadcast %0 : i32 to vector<8x8xi32>
    %5 = arith.addi %4, %3 : vector<8x8xi32>
    %6 = tpu.iota {dimensions = array<i32: 1>} : vector<8x8xi32>
    %7 = vector.broadcast %2 : i32 to vector<8x8xi32>
    %8 = arith.cmpi sge, %6, %7 : vector<8x8xi32>
    %c3_i32 = arith.constant 3 : i32
    %9 = vector.broadcast %c3_i32 : i32 to vector<8x8xi32>
    %10 = arith.addi %5, %9 : vector<8x8xi32>
    %11 = arith.cmpi sge, %6, %10 : vector<8x8xi32>
    %12 = arith.ori %8, %11 : vector<8x8xi1>
    %cst = arith.constant -1.000000e+09 : f32
    %cst_0 = arith.constant 0.000000e+00 : f32
    %13 = vector.broadcast %cst : f32 to vector<8x8xf32>
    %14 = vector.broadcast %cst_0 : f32 to vector<8x8xf32>
    %15 = arith.select %12, %13, %14 : vector<8x8xi1>, vector<8x8xf32>
    %c0 = arith.constant 0 : index
    %c0_1 = arith.constant 0 : index
    %c0_2 = arith.constant 0 : index
    %c0_3 = arith.constant 0 : index
    %16 = vector.load %arg3[%c0, %c0_1, %c0_2, %c0_3] : memref<1x4x8x8xbf16, #tpu.memory_space<vmem>>, vector<1x1x8x8xbf16>
    %17 = vector.shape_cast %16 : vector<1x1x8x8xbf16> to vector<8x8xbf16>
    %c0_4 = arith.constant 0 : index
    %c0_5 = arith.constant 0 : index
    %c0_6 = arith.constant 0 : index
    %c0_7 = arith.constant 0 : index
    %18 = vector.load %arg4[%c0_4, %c0_5, %c0_6, %c0_7] : memref<1x4x8x8xbf16, #tpu.memory_space<vmem>>, vector<1x1x8x8xbf16>
    %19 = vector.shape_cast %18 : vector<1x1x8x8xbf16> to vector<8x8xbf16>
    %c0_8 = arith.constant 0 : index
    %c0_9 = arith.constant 0 : index
    %c0_10 = arith.constant 0 : index
    %c0_11 = arith.constant 0 : index
    %20 = vector.load %arg5[%c0_8, %c0_9, %c0_10, %c0_11] : memref<1x4x8x8xbf16, #tpu.memory_space<vmem>>, vector<1x1x8x8xbf16>
    %21 = vector.shape_cast %20 : vector<1x1x8x8xbf16> to vector<8x8xbf16>
    %cst_12 = arith.constant dense<0.000000e+00> : vector<8x8xf32>
    %22 = tpu.matmul %17, %19, %cst_12 {dimension_numbers = #tpu.dot_dimension_numbers<[1], [1], [0], [0], [0, 0, 1, 0], [], []>} : vector<8x8xbf16>, vector<8x8xbf16>, vector<8x8xf32> -> vector<8x8xf32>
    %23 = arith.addf %22, %15 : vector<8x8xf32>
    %cst_13 = arith.constant dense<0xFF800000> : vector<8xf32>
    %24 = vector.multi_reduction <maximumf>, %23, %cst_13 [1] : vector<8x8xf32> to vector<8xf32>
    %25 = vector.shape_cast %24 : vector<8xf32> to vector<8x1xf32>
    %26 = vector.broadcast %25 : vector<8x1xf32> to vector<8x8xf32>
    %27 = arith.subf %23, %26 : vector<8x8xf32>
    %28 = math.exp %27 : vector<8x8xf32>
    %cst_14 = arith.constant dense<0.000000e+00> : vector<8xf32>
    %29 = vector.multi_reduction <add>, %28, %cst_14 [1] : vector<8x8xf32> to vector<8xf32>
    %30 = vector.shape_cast %29 : vector<8xf32> to vector<8x1xf32>
    %31 = tpu.reciprocal %30 {approx = true} : vector<8x1xf32> -> vector<8x1xf32>
    %32 = vector.broadcast %31 : vector<8x1xf32> to vector<8x8xf32>
    %33 = arith.mulf %28, %32 : vector<8x8xf32>
    %34 = arith.truncf %33 : vector<8x8xf32> to vector<8x8xbf16>
    %cst_15 = arith.constant dense<0.000000e+00> : vector<8x8xf32>
    %35 = tpu.matmul %34, %21, %cst_15 {dimension_numbers = #tpu.dot_dimension_numbers<[1], [0], [0], [1], [0, 0, 1, 1], [], []>} : vector<8x8xbf16>, vector<8x8xbf16>, vector<8x8xf32> -> vector<8x8xf32>
    %c0_16 = arith.constant 0 : index
    %c1 = arith.constant 1 : index
    %c0_17 = arith.constant 0 : index
    %c0_18 = arith.constant 0 : index
    %36 = vector.load %arg3[%c0_16, %c1, %c0_17, %c0_18] : memref<1x4x8x8xbf16, #tpu.memory_space<vmem>>, vector<1x1x8x8xbf16>
    %37 = vector.shape_cast %36 : vector<1x1x8x8xbf16> to vector<8x8xbf16>
    %c0_19 = arith.constant 0 : index
    %c1_20 = arith.constant 1 : index
    %c0_21 = arith.constant 0 : index
    %c0_22 = arith.constant 0 : index
    %38 = vector.load %arg4[%c0_19, %c1_20, %c0_21, %c0_22] : memref<1x4x8x8xbf16, #tpu.memory_space<vmem>>, vector<1x1x8x8xbf16>
    %39 = vector.shape_cast %38 : vector<1x1x8x8xbf16> to vector<8x8xbf16>
    %c0_23 = arith.constant 0 : index
    %c1_24 = arith.constant 1 : index
    %c0_25 = arith.constant 0 : index
    %c0_26 = arith.constant 0 : index
    %40 = vector.load %arg5[%c0_23, %c1_24, %c0_25, %c0_26] : memref<1x4x8x8xbf16, #tpu.memory_space<vmem>>, vector<1x1x8x8xbf16>
    %41 = vector.shape_cast %40 : vector<1x1x8x8xbf16> to vector<8x8xbf16>
    %cst_27 = arith.constant dense<0.000000e+00> : vector<8x8xf32>
    %42 = tpu.matmul %37, %39, %cst_27 {dimension_numbers = #tpu.dot_dimension_numbers<[1], [1], [0], [0], [0, 0, 1, 0], [], []>} : vector<8x8xbf16>, vector<8x8xbf16>, vector<8x8xf32> -> vector<8x8xf32>
    %43 = arith.addf %42, %15 : vector<8x8xf32>
    %cst_28 = arith.constant dense<0xFF800000> : vector<8xf32>
    %44 = vector.multi_reduction <maximumf>, %43, %cst_28 [1] : vector<8x8xf32> to vector<8xf32>
    %45 = vector.shape_cast %44 : vector<8xf32> to vector<8x1xf32>
    %46 = vector.broadcast %45 : vector<8x1xf32> to vector<8x8xf32>
    %47 = arith.subf %43, %46 : vector<8x8xf32>
    %48 = math.exp %47 : vector<8x8xf32>
    %cst_29 = arith.constant dense<0.000000e+00> : vector<8xf32>
    %49 = vector.multi_reduction <add>, %48, %cst_29 [1] : vector<8x8xf32> to vector<8xf32>
    %50 = vector.shape_cast %49 : vector<8xf32> to vector<8x1xf32>
    %51 = tpu.reciprocal %50 {approx = true} : vector<8x1xf32> -> vector<8x1xf32>
    %52 = vector.broadcast %51 : vector<8x1xf32> to vector<8x8xf32>
    %53 = arith.mulf %48, %52 : vector<8x8xf32>
    %54 = arith.truncf %53 : vector<8x8xf32> to vector<8x8xbf16>
    %cst_30 = arith.constant dense<0.000000e+00> : vector<8x8xf32>
    %55 = tpu.matmul %54, %41, %cst_30 {dimension_numbers = #tpu.dot_dimension_numbers<[1], [0], [0], [1], [0, 0, 1, 1], [], []>} : vector<8x8xbf16>, vector<8x8xbf16>, vector<8x8xf32> -> vector<8x8xf32>
    %c0_31 = arith.constant 0 : index
    %c2 = arith.constant 2 : index
    %c0_32 = arith.constant 0 : index
    %c0_33 = arith.constant 0 : index
    %56 = vector.load %arg3[%c0_31, %c2, %c0_32, %c0_33] : memref<1x4x8x8xbf16, #tpu.memory_space<vmem>>, vector<1x1x8x8xbf16>
    %57 = vector.shape_cast %56 : vector<1x1x8x8xbf16> to vector<8x8xbf16>
    %c0_34 = arith.constant 0 : index
    %c2_35 = arith.constant 2 : index
    %c0_36 = arith.constant 0 : index
    %c0_37 = arith.constant 0 : index
    %58 = vector.load %arg4[%c0_34, %c2_35, %c0_36, %c0_37] : memref<1x4x8x8xbf16, #tpu.memory_space<vmem>>, vector<1x1x8x8xbf16>
    %59 = vector.shape_cast %58 : vector<1x1x8x8xbf16> to vector<8x8xbf16>
    %c0_38 = arith.constant 0 : index
    %c2_39 = arith.constant 2 : index
    %c0_40 = arith.constant 0 : index
    %c0_41 = arith.constant 0 : index
    %60 = vector.load %arg5[%c0_38, %c2_39, %c0_40, %c0_41] : memref<1x4x8x8xbf16, #tpu.memory_space<vmem>>, vector<1x1x8x8xbf16>
    %61 = vector.shape_cast %60 : vector<1x1x8x8xbf16> to vector<8x8xbf16>
    %cst_42 = arith.constant dense<0.000000e+00> : vector<8x8xf32>
    %62 = tpu.matmul %57, %59, %cst_42 {dimension_numbers = #tpu.dot_dimension_numbers<[1], [1], [0], [0], [0, 0, 1, 0], [], []>} : vector<8x8xbf16>, vector<8x8xbf16>, vector<8x8xf32> -> vector<8x8xf32>
    %63 = arith.addf %62, %15 : vector<8x8xf32>
    %cst_43 = arith.constant dense<0xFF800000> : vector<8xf32>
    %64 = vector.multi_reduction <maximumf>, %63, %cst_43 [1] : vector<8x8xf32> to vector<8xf32>
    %65 = vector.shape_cast %64 : vector<8xf32> to vector<8x1xf32>
    %66 = vector.broadcast %65 : vector<8x1xf32> to vector<8x8xf32>
    %67 = arith.subf %63, %66 : vector<8x8xf32>
    %68 = math.exp %67 : vector<8x8xf32>
    %cst_44 = arith.constant dense<0.000000e+00> : vector<8xf32>
    %69 = vector.multi_reduction <add>, %68, %cst_44 [1] : vector<8x8xf32> to vector<8xf32>
    %70 = vector.shape_cast %69 : vector<8xf32> to vector<8x1xf32>
    %71 = tpu.reciprocal %70 {approx = true} : vector<8x1xf32> -> vector<8x1xf32>
    %72 = vector.broadcast %71 : vector<8x1xf32> to vector<8x8xf32>
    %73 = arith.mulf %68, %72 : vector<8x8xf32>
    %74 = arith.truncf %73 : vector<8x8xf32> to vector<8x8xbf16>
    %cst_45 = arith.constant dense<0.000000e+00> : vector<8x8xf32>
    %75 = tpu.matmul %74, %61, %cst_45 {dimension_numbers = #tpu.dot_dimension_numbers<[1], [0], [0], [1], [0, 0, 1, 1], [], []>} : vector<8x8xbf16>, vector<8x8xbf16>, vector<8x8xf32> -> vector<8x8xf32>
    %c0_46 = arith.constant 0 : index
    %c3 = arith.constant 3 : index
    %c0_47 = arith.constant 0 : index
    %c0_48 = arith.constant 0 : index
    %76 = vector.load %arg3[%c0_46, %c3, %c0_47, %c0_48] : memref<1x4x8x8xbf16, #tpu.memory_space<vmem>>, vector<1x1x8x8xbf16>
    %77 = vector.shape_cast %76 : vector<1x1x8x8xbf16> to vector<8x8xbf16>
    %c0_49 = arith.constant 0 : index
    %c3_50 = arith.constant 3 : index
    %c0_51 = arith.constant 0 : index
    %c0_52 = arith.constant 0 : index
    %78 = vector.load %arg4[%c0_49, %c3_50, %c0_51, %c0_52] : memref<1x4x8x8xbf16, #tpu.memory_space<vmem>>, vector<1x1x8x8xbf16>
    %79 = vector.shape_cast %78 : vector<1x1x8x8xbf16> to vector<8x8xbf16>
    %c0_53 = arith.constant 0 : index
    %c3_54 = arith.constant 3 : index
    %c0_55 = arith.constant 0 : index
    %c0_56 = arith.constant 0 : index
    %80 = vector.load %arg5[%c0_53, %c3_54, %c0_55, %c0_56] : memref<1x4x8x8xbf16, #tpu.memory_space<vmem>>, vector<1x1x8x8xbf16>
    %81 = vector.shape_cast %80 : vector<1x1x8x8xbf16> to vector<8x8xbf16>
    %cst_57 = arith.constant dense<0.000000e+00> : vector<8x8xf32>
    %82 = tpu.matmul %77, %79, %cst_57 {dimension_numbers = #tpu.dot_dimension_numbers<[1], [1], [0], [0], [0, 0, 1, 0], [], []>} : vector<8x8xbf16>, vector<8x8xbf16>, vector<8x8xf32> -> vector<8x8xf32>
    %83 = arith.addf %82, %15 : vector<8x8xf32>
    %cst_58 = arith.constant dense<0xFF800000> : vector<8xf32>
    %84 = vector.multi_reduction <maximumf>, %83, %cst_58 [1] : vector<8x8xf32> to vector<8xf32>
    %85 = vector.shape_cast %84 : vector<8xf32> to vector<8x1xf32>
    %86 = vector.broadcast %85 : vector<8x1xf32> to vector<8x8xf32>
    %87 = arith.subf %83, %86 : vector<8x8xf32>
    %88 = math.exp %87 : vector<8x8xf32>
    %cst_59 = arith.constant dense<0.000000e+00> : vector<8xf32>
    %89 = vector.multi_reduction <add>, %88, %cst_59 [1] : vector<8x8xf32> to vector<8xf32>
    %90 = vector.shape_cast %89 : vector<8xf32> to vector<8x1xf32>
    %91 = tpu.reciprocal %90 {approx = true} : vector<8x1xf32> -> vector<8x1xf32>
    %92 = vector.broadcast %91 : vector<8x1xf32> to vector<8x8xf32>
    %93 = arith.mulf %88, %92 : vector<8x8xf32>
    %94 = arith.truncf %93 : vector<8x8xf32> to vector<8x8xbf16>
    %cst_60 = arith.constant dense<0.000000e+00> : vector<8x8xf32>
    %95 = tpu.matmul %94, %81, %cst_60 {dimension_numbers = #tpu.dot_dimension_numbers<[1], [0], [0], [1], [0, 0, 1, 1], [], []>} : vector<8x8xbf16>, vector<8x8xbf16>, vector<8x8xf32> -> vector<8x8xf32>
    %96 = tpu.concatenate %35, %55, %75, %95 in 1 : vector<8x8xf32>, vector<8x8xf32>, vector<8x8xf32>, vector<8x8xf32> -> vector<8x32xf32>
    %97 = arith.truncf %96 : vector<8x32xf32> to vector<8x32xbf16>
    %c0_61 = arith.constant 0 : index
    %c0_62 = arith.constant 0 : index
    %98 = vector.load %arg6[%c0_61, %c0_62] : memref<32x32xbf16, #tpu.memory_space<vmem>>, vector<32x32xbf16>
    %cst_63 = arith.constant dense<0.000000e+00> : vector<8x32xf32>
    %99 = tpu.matmul %97, %98, %cst_63 {dimension_numbers = #tpu.dot_dimension_numbers<[1], [0], [0], [1], [0, 0, 1, 1], [], []>} : vector<8x32xbf16>, vector<32x32xbf16>, vector<8x32xf32> -> vector<8x32xf32>
    %c0_64 = arith.constant 0 : index
    %c0_65 = arith.constant 0 : index
    %c0_66 = arith.constant 0 : index
    %100 = vector.load %arg8[%c0_64, %c0_65, %c0_66] : memref<1x8x32xbf16, #tpu.memory_space<vmem>>, vector<1x8x32xbf16>
    %101 = vector.shape_cast %100 : vector<1x8x32xbf16> to vector<8x32xbf16>
    %102 = arith.extf %101 : vector<8x32xbf16> to vector<8x32xf32>
    %103 = arith.addf %102, %99 : vector<8x32xf32>
    %c0_67 = arith.constant 0 : index
    %c0_68 = arith.constant 0 : index
    %104 = vector.load %arg7[%c0_67, %c0_68] : memref<1x32xf32, #tpu.memory_space<vmem>>, vector<1x32xf32>
    %105 = vector.broadcast %104 : vector<1x32xf32> to vector<8x32xf32>
    %106 = arith.addf %103, %105 : vector<8x32xf32>
    %107 = arith.truncf %106 : vector<8x32xf32> to vector<8x32xbf16>
    %c0_69 = arith.constant 0 : index
    %c0_70 = arith.constant 0 : index
    %c0_71 = arith.constant 0 : index
    %108 = vector.load %arg9[%c0_69, %c0_70, %c0_71] : memref<1x8x32xbf16, #tpu.memory_space<vmem>>, vector<1x8x32xbf16>
    %109 = vector.shape_cast %108 : vector<1x8x32xbf16> to vector<8x32xbf16>
    %110 = vector.shape_cast %107 : vector<8x32xbf16> to vector<1x8x32xbf16>
    tpu.vector_store %arg9[%c0_69, %c0_70, %c0_71], %110 {strides = array<i32>} : memref<1x8x32xbf16, #tpu.memory_space<vmem>>, vector<1x8x32xbf16>,
    return
  }
  func.func @transform_0(%arg0: i32, %arg1: i32, %arg2: memref<2xi32, #tpu.memory_space<smem>>) -> (i32, i32, i32, i32) {
    %c0_i32 = arith.constant 0 : i32
    %c0_i32_0 = arith.constant 0 : i32
    %c0_i32_1 = arith.constant 0 : i32
    return %arg0, %c0_i32, %arg1, %c0_i32_0 : i32, i32, i32, i32
  }
  func.func @transform_1(%arg0: i32, %arg1: i32, %arg2: memref<2xi32, #tpu.memory_space<smem>>) -> (i32, i32, i32, i32) {
    %c0_i32 = arith.constant 0 : i32
    %c0_i32_0 = arith.constant 0 : i32
    %c0_i32_1 = arith.constant 0 : i32
    %c0_i32_2 = arith.constant 0 : i32
    return %arg0, %c0_i32, %c0_i32_0, %c0_i32_1 : i32, i32, i32, i32
  }
  func.func @transform_2(%arg0: i32, %arg1: i32, %arg2: memref<2xi32, #tpu.memory_space<smem>>) -> (i32, i32, i32, i32) {
    %c0_i32 = arith.constant 0 : i32
    %c0_i32_0 = arith.constant 0 : i32
    %c0_i32_1 = arith.constant 0 : i32
    %c0_i32_2 = arith.constant 0 : i32
    return %arg0, %c0_i32, %c0_i32_0, %c0_i32_1 : i32, i32, i32, i32
  }
  func.func @transform_3(%arg0: i32, %arg1: i32, %arg2: memref<2xi32, #tpu.memory_space<smem>>) -> (i32, i32) {
    %c0_i32 = arith.constant 0 : i32
    %c0_i32_0 = arith.constant 0 : i32
    %c0_i32_1 = arith.constant 0 : i32
    return %c0_i32, %c0_i32_0 : i32, i32
  }
  func.func @transform_4(%arg0: i32, %arg1: i32, %arg2: memref<2xi32, #tpu.memory_space<smem>>) -> (i32, i32) {
    %c0_i32 = arith.constant 0 : i32
    %c0_i32_0 = arith.constant 0 : i32
    %c0_i32_1 = arith.constant 0 : i32
    return %c0_i32, %c0_i32_0 : i32, i32
  }
  func.func @transform_5(%arg0: i32, %arg1: i32, %arg2: memref<2xi32, #tpu.memory_space<smem>>) -> (i32, i32, i32) {
    %c0_i32 = arith.constant 0 : i32
    %c0_i32_0 = arith.constant 0 : i32
    return %arg0, %arg1, %c0_i32 : i32, i32, i32
  }
  func.func @transform_6(%arg0: i32, %arg1: i32, %arg2: memref<2xi32, #tpu.memory_space<smem>>) -> (i32, i32, i32) {
    %c0_i32 = arith.constant 0 : i32
    %c0_i32_0 = arith.constant 0 : i32
    return %arg0, %arg1, %c0_i32 : i32, i32, i32
  }
}

module attributes {stable_mosaic.version = 11 : i64} {
  func.func @_matmul_bias_kernel(%arg0: i32, %arg1: memref<16x32xbf16, #tpu.memory_space<vmem>>, %arg2: memref<32x64xbf16, #tpu.memory_space<vmem>>, %arg3: memref<1x64xf32, #tpu.memory_space<vmem>>, %arg4: memref<16x64xbf16, #tpu.memory_space<vmem>>) attributes {dimension_semantics = [#tpu.dimension_semantics<parallel>], iteration_bounds = array<i64: 1>, scalar_prefetch = 0 : i64, scratch_operands = 0 : i64, tpu.core_type = #tpu.core_type<tc>, window_params = [{transform_indices = @transform_0, window_bounds = array<i64: 16, 32>}, {pipeline_mode = #tpu.pipeline_mode<synchronous>, transform_indices = @transform_1, window_bounds = array<i64: 32, 64>}, {pipeline_mode = #tpu.pipeline_mode<synchronous>, transform_indices = @transform_2, window_bounds = array<i64: 1, 64>}, {transform_indices = @transform_3, window_bounds = array<i64: 16, 64>}]} {
    %c0 = arith.constant 0 : index
    %c0_0 = arith.constant 0 : index
    %0 = vector.load %arg1[%c0, %c0_0] : memref<16x32xbf16, #tpu.memory_space<vmem>>, vector<16x32xbf16>
    %c0_1 = arith.constant 0 : index
    %c0_2 = arith.constant 0 : index
    %1 = vector.load %arg2[%c0_1, %c0_2] : memref<32x64xbf16, #tpu.memory_space<vmem>>, vector<32x64xbf16>
    %cst = arith.constant dense<0.000000e+00> : vector<16x64xf32>
    %2 = tpu.matmul %0, %1, %cst {dimension_numbers = #tpu.dot_dimension_numbers<[1], [0], [0], [1], [0, 0, 1, 1], [], []>} : vector<16x32xbf16>, vector<32x64xbf16>, vector<16x64xf32> -> vector<16x64xf32>
    %c0_3 = arith.constant 0 : index
    %c0_4 = arith.constant 0 : index
    %3 = vector.load %arg3[%c0_3, %c0_4] : memref<1x64xf32, #tpu.memory_space<vmem>>, vector<1x64xf32>
    %4 = vector.broadcast %3 : vector<1x64xf32> to vector<16x64xf32>
    %5 = arith.addf %2, %4 : vector<16x64xf32>
    %6 = arith.truncf %5 : vector<16x64xf32> to vector<16x64xbf16>
    %c0_5 = arith.constant 0 : index
    %c0_6 = arith.constant 0 : index
    %7 = vector.load %arg4[%c0_5, %c0_6] : memref<16x64xbf16, #tpu.memory_space<vmem>>, vector<16x64xbf16>
    tpu.vector_store %arg4[%c0_5, %c0_6], %6 {strides = array<i32>} : memref<16x64xbf16, #tpu.memory_space<vmem>>, vector<16x64xbf16>,
    return
  }
  func.func @transform_0(%arg0: i32) -> (i32, i32) {
    %c0_i32 = arith.constant 0 : i32
    %c0_i32_0 = arith.constant 0 : i32
    return %arg0, %c0_i32 : i32, i32
  }
  func.func @transform_1(%arg0: i32) -> (i32, i32) {
    %c0_i32 = arith.constant 0 : i32
    %c0_i32_0 = arith.constant 0 : i32
    %c0_i32_1 = arith.constant 0 : i32
    return %c0_i32, %c0_i32_0 : i32, i32
  }
  func.func @transform_2(%arg0: i32) -> (i32, i32) {
    %c0_i32 = arith.constant 0 : i32
    %c0_i32_0 = arith.constant 0 : i32
    %c0_i32_1 = arith.constant 0 : i32
    return %c0_i32, %c0_i32_0 : i32, i32
  }
  func.func @transform_3(%arg0: i32) -> (i32, i32) {
    %c0_i32 = arith.constant 0 : i32
    %c0_i32_0 = arith.constant 0 : i32
    return %arg0, %c0_i32 : i32, i32
  }
}

module attributes {stable_mosaic.version = 11 : i64} {
  func.func @_ln_ce_kernel(%arg0: i32, %arg1: i32, %arg2: memref<16x32xbf16, #tpu.memory_space<vmem>>, %arg3: memref<1x32xf32, #tpu.memory_space<vmem>>, %arg4: memref<1x32xf32, #tpu.memory_space<vmem>>, %arg5: memref<16x1xi32, #tpu.memory_space<vmem>>, %arg6: memref<16x1xf32, #tpu.memory_space<vmem>>, %arg7: memref<32x32xbf16, #tpu.memory_space<vmem>>, %arg8: memref<1x128xf32, #tpu.memory_space<vmem>>, %arg9: memref<16x32xbf16, #tpu.memory_space<vmem>>, %arg10: memref<16x1xf32, #tpu.memory_space<vmem>>, %arg11: memref<16x1xf32, #tpu.memory_space<vmem>>, %arg12: memref<16x1xf32, #tpu.memory_space<vmem>>, %arg13: memref<16x1xf32, #tpu.memory_space<vmem>>) attributes {dimension_semantics = [#tpu.dimension_semantics<parallel>, #tpu.dimension_semantics<arbitrary>], iteration_bounds = array<i64: 1, 1>, scalar_prefetch = 0 : i64, scratch_operands = 5 : i64, tpu.core_type = #tpu.core_type<tc>, window_params = [{transform_indices = @transform_0, window_bounds = array<i64: 16, 32>}, {pipeline_mode = #tpu.pipeline_mode<synchronous>, transform_indices = @transform_1, window_bounds = array<i64: 1, 32>}, {pipeline_mode = #tpu.pipeline_mode<synchronous>, transform_indices = @transform_2, window_bounds = array<i64: 1, 32>}, {transform_indices = @transform_3, window_bounds = array<i64: 16, 1>}, {transform_indices = @transform_4, window_bounds = array<i64: 16, 1>}, {transform_indices = @transform_5, window_bounds = array<i64: 32, 32>}, {transform_indices = @transform_6, window_bounds = array<i64: 1, 128>}]} {
    %c0_i32 = arith.constant 0 : i32
    %0 = arith.cmpi eq, %arg1, %c0_i32 : i32
    %1 = arith.extui %0 : i1 to i32
    %c0_i32_0 = arith.constant 0 : i32
    %2 = arith.cmpi ne, %1, %c0_i32_0 : i32
    scf.if %2 {
      %c0_31 = arith.constant 0 : index
      %c0_32 = arith.constant 0 : index
      %45 = vector.load %arg2[%c0_31, %c0_32] : memref<16x32xbf16, #tpu.memory_space<vmem>>, vector<16x32xbf16>
      %46 = arith.extf %45 : vector<16x32xbf16> to vector<16x32xf32>
      %cst_33 = arith.constant dense<0.000000e+00> : vector<16xf32>
      %47 = vector.multi_reduction <add>, %46, %cst_33 [1] : vector<16x32xf32> to vector<16xf32>
      %48 = vector.shape_cast %47 : vector<16xf32> to vector<16x1xf32>
      %cst_34 = arith.constant 3.200000e+01 : f32
      %49 = vector.broadcast %cst_34 : f32 to vector<16x1xf32>
      %50 = arith.divf %48, %49 : vector<16x1xf32>
      %51 = vector.broadcast %50 : vector<16x1xf32> to vector<16x32xf32>
      %52 = arith.subf %46, %51 : vector<16x32xf32>
      %53 = arith.mulf %52, %52 : vector<16x32xf32>
      %cst_35 = arith.constant dense<0.000000e+00> : vector<16xf32>
      %54 = vector.multi_reduction <add>, %53, %cst_35 [1] : vector<16x32xf32> to vector<16xf32>
      %55 = vector.shape_cast %54 : vector<16xf32> to vector<16x1xf32>
      %cst_36 = arith.constant 3.200000e+01 : f32
      %56 = vector.broadcast %cst_36 : f32 to vector<16x1xf32>
      %57 = arith.divf %55, %56 : vector<16x1xf32>
      %58 = vector.broadcast %50 : vector<16x1xf32> to vector<16x32xf32>
      %59 = arith.subf %46, %58 : vector<16x32xf32>
      %cst_37 = arith.constant 9.99999974E-6 : f32
      %60 = vector.broadcast %cst_37 : f32 to vector<16x1xf32>
      %61 = arith.addf %57, %60 : vector<16x1xf32>
      %62 = math.rsqrt %61 : vector<16x1xf32>
      %63 = vector.broadcast %62 : vector<16x1xf32> to vector<16x32xf32>
      %64 = arith.mulf %59, %63 : vector<16x32xf32>
      %c0_38 = arith.constant 0 : index
      %c0_39 = arith.constant 0 : index
      %65 = vector.load %arg3[%c0_38, %c0_39] : memref<1x32xf32, #tpu.memory_space<vmem>>, vector<1x32xf32>
      %66 = vector.broadcast %65 : vector<1x32xf32> to vector<16x32xf32>
      %67 = arith.mulf %64, %66 : vector<16x32xf32>
      %c0_40 = arith.constant 0 : index
      %c0_41 = arith.constant 0 : index
      %68 = vector.load %arg4[%c0_40, %c0_41] : memref<1x32xf32, #tpu.memory_space<vmem>>, vector<1x32xf32>
      %69 = vector.broadcast %68 : vector<1x32xf32> to vector<16x32xf32>
      %70 = arith.addf %67, %69 : vector<16x32xf32>
      %71 = arith.truncf %70 : vector<16x32xf32> to vector<16x32xbf16>
      %c0_42 = arith.constant 0 : index
      %c0_43 = arith.constant 0 : index
      %72 = vector.load %arg9[%c0_42, %c0_43] : memref<16x32xbf16, #tpu.memory_space<vmem>>, vector<16x32xbf16>
      tpu.vector_store %arg9[%c0_42, %c0_43], %71 {strides = array<i32>} : memref<16x32xbf16, #tpu.memory_space<vmem>>, vector<16x32xbf16>,
      %cst_44 = arith.constant 0xFF800000 : f32
      %73 = vector.broadcast %cst_44 : f32 to vector<16x1xf32>
      %c0_45 = arith.constant 0 : index
      %c0_46 = arith.constant 0 : index
      %74 = vector.load %arg10[%c0_45, %c0_46] : memref<16x1xf32, #tpu.memory_space<vmem>>, vector<16x1xf32>
      tpu.vector_store %arg10[%c0_45, %c0_46], %73 {strides = array<i32>} : memref<16x1xf32, #tpu.memory_space<vmem>>, vector<16x1xf32>,
      %cst_47 = arith.constant 0.000000e+00 : f32
      %75 = vector.broadcast %cst_47 : f32 to vector<16x1xf32>
      %c0_48 = arith.constant 0 : index
      %c0_49 = arith.constant 0 : index
      %76 = vector.load %arg11[%c0_48, %c0_49] : memref<16x1xf32, #tpu.memory_space<vmem>>, vector<16x1xf32>
      tpu.vector_store %arg11[%c0_48, %c0_49], %75 {strides = array<i32>} : memref<16x1xf32, #tpu.memory_space<vmem>>, vector<16x1xf32>,
      %cst_50 = arith.constant 0.000000e+00 : f32
      %77 = vector.broadcast %cst_50 : f32 to vector<16x1xf32>
      %c0_51 = arith.constant 0 : index
      %c0_52 = arith.constant 0 : index
      %78 = vector.load %arg12[%c0_51, %c0_52] : memref<16x1xf32, #tpu.memory_space<vmem>>, vector<16x1xf32>
      tpu.vector_store %arg12[%c0_51, %c0_52], %77 {strides = array<i32>} : memref<16x1xf32, #tpu.memory_space<vmem>>, vector<16x1xf32>,
      %cst_53 = arith.constant 0.000000e+00 : f32
      %79 = vector.broadcast %cst_53 : f32 to vector<16x1xf32>
      %c0_54 = arith.constant 0 : index
      %c0_55 = arith.constant 0 : index
      %80 = vector.load %arg13[%c0_54, %c0_55] : memref<16x1xf32, #tpu.memory_space<vmem>>, vector<16x1xf32>
      tpu.vector_store %arg13[%c0_54, %c0_55], %79 {strides = array<i32>} : memref<16x1xf32, #tpu.memory_space<vmem>>, vector<16x1xf32>,
      %cst_56 = arith.constant 0.000000e+00 : f32
      %81 = vector.broadcast %cst_56 : f32 to vector<1x128xf32>
      %c0_57 = arith.constant 0 : index
      %c0_58 = arith.constant 0 : index
      %82 = vector.load %arg8[%c0_57, %c0_58] : memref<1x128xf32, #tpu.memory_space<vmem>>, vector<1x128xf32>
      tpu.vector_store %arg8[%c0_57, %c0_58], %81 {strides = array<i32>} : memref<1x128xf32, #tpu.memory_space<vmem>>, vector<1x128xf32>,
    } else {
    }
    %c0 = arith.constant 0 : index
    %c0_1 = arith.constant 0 : index
    %3 = vector.load %arg9[%c0, %c0_1] : memref<16x32xbf16, #tpu.memory_space<vmem>>, vector<16x32xbf16>
    %c0_2 = arith.constant 0 : index
    %c0_3 = arith.constant 0 : index
    %4 = vector.load %arg7[%c0_2, %c0_3] : memref<32x32xbf16, #tpu.memory_space<vmem>>, vector<32x32xbf16>
    %cst = arith.constant dense<0.000000e+00> : vector<16x32xf32>
    %5 = tpu.matmul %3, %4, %cst {dimension_numbers = #tpu.dot_dimension_numbers<[1], [1], [0], [0], [0, 0, 1, 0], [], []>} : vector<16x32xbf16>, vector<32x32xbf16>, vector<16x32xf32> -> vector<16x32xf32>
    %c0_4 = arith.constant 0 : index
    %c0_5 = arith.constant 0 : index
    %6 = vector.load %arg10[%c0_4, %c0_5] : memref<16x1xf32, #tpu.memory_space<vmem>>, vector<16x1xf32>
    %cst_6 = arith.constant dense<0xFF800000> : vector<16xf32>
    %7 = vector.multi_reduction <maximumf>, %5, %cst_6 [1] : vector<16x32xf32> to vector<16xf32>
    %8 = vector.shape_cast %7 : vector<16xf32> to vector<16x1xf32>
    %9 = arith.maximumf %6, %8 : vector<16x1xf32>
    %c0_7 = arith.constant 0 : index
    %c0_8 = arith.constant 0 : index
    %10 = vector.load %arg11[%c0_7, %c0_8] : memref<16x1xf32, #tpu.memory_space<vmem>>, vector<16x1xf32>
    %c0_9 = arith.constant 0 : index
    %c0_10 = arith.constant 0 : index
    %11 = vector.load %arg10[%c0_9, %c0_10] : memref<16x1xf32, #tpu.memory_space<vmem>>, vector<16x1xf32>
    %12 = arith.subf %11, %9 : vector<16x1xf32>
    %13 = math.exp %12 : vector<16x1xf32>
    %14 = arith.mulf %10, %13 : vector<16x1xf32>
    %15 = vector.broadcast %9 : vector<16x1xf32> to vector<16x32xf32>
    %16 = arith.subf %5, %15 : vector<16x32xf32>
    %17 = math.exp %16 : vector<16x32xf32>
    %cst_11 = arith.constant dense<0.000000e+00> : vector<16xf32>
    %18 = vector.multi_reduction <add>, %17, %cst_11 [1] : vector<16x32xf32> to vector<16xf32>
    %19 = vector.shape_cast %18 : vector<16xf32> to vector<16x1xf32>
    %20 = arith.addf %14, %19 : vector<16x1xf32>
    %c0_12 = arith.constant 0 : index
    %c0_13 = arith.constant 0 : index
    %21 = vector.load %arg11[%c0_12, %c0_13] : memref<16x1xf32, #tpu.memory_space<vmem>>, vector<16x1xf32>
    tpu.vector_store %arg11[%c0_12, %c0_13], %20 {strides = array<i32>} : memref<16x1xf32, #tpu.memory_space<vmem>>, vector<16x1xf32>,
    %c0_14 = arith.constant 0 : index
    %c0_15 = arith.constant 0 : index
    %22 = vector.load %arg10[%c0_14, %c0_15] : memref<16x1xf32, #tpu.memory_space<vmem>>, vector<16x1xf32>
    tpu.vector_store %arg10[%c0_14, %c0_15], %9 {strides = array<i32>} : memref<16x1xf32, #tpu.memory_space<vmem>>, vector<16x1xf32>,
    %c0_16 = arith.constant 0 : index
    %c0_17 = arith.constant 0 : index
    %23 = vector.load %arg12[%c0_16, %c0_17] : memref<16x1xf32, #tpu.memory_space<vmem>>, vector<16x1xf32>
    %cst_18 = arith.constant dense<0.000000e+00> : vector<16xf32>
    %24 = vector.multi_reduction <add>, %5, %cst_18 [1] : vector<16x32xf32> to vector<16xf32>
    %25 = vector.shape_cast %24 : vector<16xf32> to vector<16x1xf32>
    %26 = arith.addf %23, %25 : vector<16x1xf32>
    %c0_19 = arith.constant 0 : index
    %c0_20 = arith.constant 0 : index
    %27 = vector.load %arg12[%c0_19, %c0_20] : memref<16x1xf32, #tpu.memory_space<vmem>>, vector<16x1xf32>
    tpu.vector_store %arg12[%c0_19, %c0_20], %26 {strides = array<i32>} : memref<16x1xf32, #tpu.memory_space<vmem>>, vector<16x1xf32>,
    %c32_i32 = arith.constant 32 : i32
    %28 = arith.muli %arg1, %c32_i32 : i32
    %29 = tpu.iota {dimensions = array<i32: 1>} : vector<16x32xi32>
    %30 = vector.broadcast %28 : i32 to vector<16x32xi32>
    %31 = arith.addi %30, %29 : vector<16x32xi32>
    %c0_21 = arith.constant 0 : index
    %c0_22 = arith.constant 0 : index
    %32 = vector.load %arg13[%c0_21, %c0_22] : memref<16x1xf32, #tpu.memory_space<vmem>>, vector<16x1xf32>
    %c0_23 = arith.constant 0 : index
    %c0_24 = arith.constant 0 : index
    %33 = vector.load %arg5[%c0_23, %c0_24] : memref<16x1xi32, #tpu.memory_space<vmem>>, vector<16x1xi32>
    %34 = vector.broadcast %33 : vector<16x1xi32> to vector<16x32xi32>
    %35 = arith.cmpi eq, %31, %34 : vector<16x32xi32>
    %cst_25 = arith.constant 0.000000e+00 : f32
    %36 = vector.broadcast %cst_25 : f32 to vector<16x32xf32>
    %37 = arith.select %35, %5, %36 : vector<16x32xi1>, vector<16x32xf32>
    %cst_26 = arith.constant dense<0.000000e+00> : vector<16xf32>
    %38 = vector.multi_reduction <add>, %37, %cst_26 [1] : vector<16x32xf32> to vector<16xf32>
    %39 = vector.shape_cast %38 : vector<16xf32> to vector<16x1xf32>
    %40 = arith.addf %32, %39 : vector<16x1xf32>
    %c0_27 = arith.constant 0 : index
    %c0_28 = arith.constant 0 : index
    %41 = vector.load %arg13[%c0_27, %c0_28] : memref<16x1xf32, #tpu.memory_space<vmem>>, vector<16x1xf32>
    tpu.vector_store %arg13[%c0_27, %c0_28], %40 {strides = array<i32>} : memref<16x1xf32, #tpu.memory_space<vmem>>, vector<16x1xf32>,
    %c0_i32_29 = arith.constant 0 : i32
    %42 = arith.cmpi eq, %arg1, %c0_i32_29 : i32
    %43 = arith.extui %42 : i1 to i32
    %c0_i32_30 = arith.constant 0 : i32
    %44 = arith.cmpi ne, %43, %c0_i32_30 : i32
    scf.if %44 {
      %c0_31 = arith.constant 0 : index
      %c0_32 = arith.constant 0 : index
      %45 = vector.load %arg10[%c0_31, %c0_32] : memref<16x1xf32, #tpu.memory_space<vmem>>, vector<16x1xf32>
      %c0_33 = arith.constant 0 : index
      %c0_34 = arith.constant 0 : index
      %46 = vector.load %arg11[%c0_33, %c0_34] : memref<16x1xf32, #tpu.memory_space<vmem>>, vector<16x1xf32>
      %47 = math.log %46 : vector<16x1xf32>
      %48 = arith.addf %45, %47 : vector<16x1xf32>
      %c0_35 = arith.constant 0 : index
      %c0_36 = arith.constant 0 : index
      %49 = vector.load %arg13[%c0_35, %c0_36] : memref<16x1xf32, #tpu.memory_space<vmem>>, vector<16x1xf32>
      %50 = arith.subf %48, %49 : vector<16x1xf32>
      %cst_37 = arith.constant 0.899999976 : f32
      %51 = vector.broadcast %cst_37 : f32 to vector<16x1xf32>
      %52 = arith.mulf %51, %50 : vector<16x1xf32>
      %cst_38 = arith.constant 3.200000e+01 : f32
      %53 = vector.broadcast %cst_38 : f32 to vector<16x1xf32>
      %54 = arith.mulf %53, %48 : vector<16x1xf32>
      %c0_39 = arith.constant 0 : index
      %c0_40 = arith.constant 0 : index
      %55 = vector.load %arg12[%c0_39, %c0_40] : memref<16x1xf32, #tpu.memory_space<vmem>>, vector<16x1xf32>
      %56 = arith.subf %54, %55 : vector<16x1xf32>
      %cst_41 = arith.constant 3.125000e-03 : f32
      %57 = vector.broadcast %cst_41 : f32 to vector<16x1xf32>
      %58 = arith.mulf %57, %56 : vector<16x1xf32>
      %59 = arith.addf %52, %58 : vector<16x1xf32>
      %c0_42 = arith.constant 0 : index
      %c0_43 = arith.constant 0 : index
      %60 = vector.load %arg6[%c0_42, %c0_43] : memref<16x1xf32, #tpu.memory_space<vmem>>, vector<16x1xf32>
      %61 = arith.mulf %59, %60 : vector<16x1xf32>
      %cst_44 = arith.constant dense<0.000000e+00> : vector<1xf32>
      %62 = vector.multi_reduction <add>, %61, %cst_44 [0] : vector<16x1xf32> to vector<1xf32>
      %63 = vector.shape_cast %62 : vector<1xf32> to vector<1x1xf32>
      %64 = tpu.iota {dimensions = array<i32: 1>} : vector<1x128xi32>
      %c0_i32_45 = arith.constant 0 : i32
      %65 = vector.broadcast %c0_i32_45 : i32 to vector<1x128xi32>
      %66 = arith.cmpi eq, %64, %65 : vector<1x128xi32>
      %cst_46 = arith.constant 0.000000e+00 : f32
      %67 = vector.shape_cast %63 : vector<1x1xf32> to vector<1x1xf32>
      %68 = vector.broadcast %67 : vector<1x1xf32> to vector<1x128xf32>
      %69 = vector.broadcast %cst_46 : f32 to vector<1x128xf32>
      %70 = arith.select %66, %68, %69 : vector<1x128xi1>, vector<1x128xf32>
      %c0_47 = arith.constant 0 : index
      %c0_48 = arith.constant 0 : index
      %71 = vector.load %arg8[%c0_47, %c0_48] : memref<1x128xf32, #tpu.memory_space<vmem>>, vector<1x128xf32>
      tpu.vector_store %arg8[%c0_47, %c0_48], %70 {strides = array<i32>} : memref<1x128xf32, #tpu.memory_space<vmem>>, vector<1x128xf32>,
    } else {
    }
    return
  }
  func.func @transform_0(%arg0: i32, %arg1: i32) -> (i32, i32) {
    %c0_i32 = arith.constant 0 : i32
    %c0_i32_0 = arith.constant 0 : i32
    return %arg0, %c0_i32 : i32, i32
  }
  func.func @transform_1(%arg0: i32, %arg1: i32) -> (i32, i32) {
    %c0_i32 = arith.constant 0 : i32
    %c0_i32_0 = arith.constant 0 : i32
    %c0_i32_1 = arith.constant 0 : i32
    return %c0_i32, %c0_i32_0 : i32, i32
  }
  func.func @transform_2(%arg0: i32, %arg1: i32) -> (i32, i32) {
    %c0_i32 = arith.constant 0 : i32
    %c0_i32_0 = arith.constant 0 : i32
    %c0_i32_1 = arith.constant 0 : i32
    return %c0_i32, %c0_i32_0 : i32, i32
  }
  func.func @transform_3(%arg0: i32, %arg1: i32) -> (i32, i32) {
    %c0_i32 = arith.constant 0 : i32
    %c0_i32_0 = arith.constant 0 : i32
    return %arg0, %c0_i32 : i32, i32
  }
  func.func @transform_4(%arg0: i32, %arg1: i32) -> (i32, i32) {
    %c0_i32 = arith.constant 0 : i32
    %c0_i32_0 = arith.constant 0 : i32
    return %arg0, %c0_i32 : i32, i32
  }
  func.func @transform_5(%arg0: i32, %arg1: i32) -> (i32, i32) {
    %c0_i32 = arith.constant 0 : i32
    %c0_i32_0 = arith.constant 0 : i32
    return %arg1, %c0_i32 : i32, i32
  }
  func.func @transform_6(%arg0: i32, %arg1: i32) -> (i32, i32) {
    %c0_i32 = arith.constant 0 : i32
    %c0_i32_0 = arith.constant 0 : i32
    return %c0_i32, %arg0 : i32, i32
  }
}

</mosaic_0001>

<llo_original>
// kernel: wait_k_transformer_train_forward.27
$region0: #{wait_k_transformer_train_forward.27}
  #allocation0 [shape = 'u32[]', space=smem, size = 0x4, offset = 0x4, fixed_abs, tag = 'smem constant byte address 0x4 - core index']
  #allocation1 [shape = 'u32[72,128]{1,0:T(1,128)}', space=vmem, size = 0x9000, scoped, tag = 'internal scratch']
  %s0 = inlined_call_operand.vmem [shape: bf16[16,32], index: 0, kind: input, shape index: {}]
  %s1 = inlined_call_operand.vmem [shape: f32[1,32], index: 1, kind: input, shape index: {}]
  %s2 = inlined_call_operand.vmem [shape: f32[1,32], index: 2, kind: input, shape index: {}]
  %s3 = inlined_call_operand.vmem [shape: bf16[32,96], index: 3, kind: input, shape index: {}]
  %s4 = inlined_call_operand.vmem [shape: f32[1,96], index: 4, kind: input, shape index: {}]
  %s5 = inlined_call_operand.vmem [shape: f32[1,96], index: 5, kind: input, shape index: {}]
  %s6 = inlined_call_operand.vmem [shape: bf16[16,96], index: 6, kind: output, shape index: {}]
  %s7 = sld [smem:[#allocation0]]
  $region34: #{wait_k_transformer_train_forward.27} parent=0
    _
  %s9 = ssub.s32 1, %s7
  %s10 = scalar_select 0, %s9, %s7
  // Predicated region
  $region2: #{wait_k_transformer_train_forward.27} parent=0 // pred_check
    _
  $region3: #{wait_k_transformer_train_forward.27} parent=0 // pred_check_branch
    %12 = sbr.rel (0) target = $region5
  $region4: #{wait_k_transformer_train_forward.27} parent=0 // pred_region
    _
  $region5: #{wait_k_transformer_train_forward.27} parent=0 // pred_fallthru
    _
  // Predicated region
  $region6: #{wait_k_transformer_train_forward.27} parent=0 // pred_check
    _
  $region7: #{wait_k_transformer_train_forward.27} parent=0 // pred_check_branch
    %14 = sbr.rel (0) target = $region9
  $region8: #{wait_k_transformer_train_forward.27} parent=0 // pred_region
    _
  $region9: #{wait_k_transformer_train_forward.27} parent=0 // pred_fallthru
    _
  // Predicated region
  $region10: #{wait_k_transformer_train_forward.27} parent=0 // pred_check
    _
  $region11: #{wait_k_transformer_train_forward.27} parent=0 // pred_check_branch
    %16 = sbr.rel (0) target = $region13
  $region12: #{wait_k_transformer_train_forward.27} parent=0 // pred_region
    _
  $region13: #{wait_k_transformer_train_forward.27} parent=0 // pred_fallthru
    _
  // Predicated region
  $region14: #{wait_k_transformer_train_forward.27} parent=0 // pred_check
    _
  $region15: #{wait_k_transformer_train_forward.27} parent=0 // pred_check_branch
    %18 = sbr.rel (0) target = $region17
  $region16: #{wait_k_transformer_train_forward.27} parent=0 // pred_region
    _
  $region17: #{wait_k_transformer_train_forward.27} parent=0 // pred_fallthru
    _
  // Predicated region
  $region18: #{wait_k_transformer_train_forward.27} parent=0 // pred_check
    _
  $region19: #{wait_k_transformer_train_forward.27} parent=0 // pred_check_branch
    %20 = sbr.rel (0) target = $region21
  $region20: #{wait_k_transformer_train_forward.27} parent=0 // pred_region
    _
  $region21: #{wait_k_transformer_train_forward.27} parent=0 // pred_fallthru
    _
  // Predicated region
  $region22: #{wait_k_transformer_train_forward.27} parent=0 // pred_check
    _
  $region23: #{wait_k_transformer_train_forward.27} parent=0 // pred_check_branch
    %22 = sbr.rel (0) target = $region25
  $region24: #{wait_k_transformer_train_forward.27} parent=0 // pred_region
    _
  $region25: #{wait_k_transformer_train_forward.27} parent=0 // pred_fallthru
    _
  %v24 = vld [vmem:[%s0] sm:$0xf]
  %v25 = vld [vmem:[%s0 + $0x4] sm:$0xf]
  %v26 = vunpack.c.l.bf16 %v24
  %v27 = vunpack.c.l.bf16 %v25
  %vm28 = vcmask 261120
  %v29 = vsel %vm28, %v26, 0.0
  %30 = vadd.xlane.f32.xlu0 %v29
  %v31 = vpop.xlane.xlu0 %30
  %v32 = vsel %vm28, %v27, 0.0
  %33 = vadd.xlane.f32.xlu0 %v32
  %v34 = vpop.xlane.xlu0 %33
  %v35 = vrcp.pop 32.0
  %v36 = vmul.f32 32.0, %v35
  %v37 = vsub.f32 1.0, %v36
  %v38 = vmul.f32 %v35, %v37
  %v39 = vadd.f32 %v35, %v38
  %vm40 = vweird.f32 %v35
  %v41 = vsel %vm40, %v35, %v39
  %v42 = vmul.f32 %v31, %v41
  %v43 = vmul.f32 %v34, %v41
  %v44 = vsub.f32 %v26, %v42
  %v45 = vsub.f32 %v27, %v43
  %v46 = vmul.f32 %v44, %v44
  %v47 = vmul.f32 %v45, %v45
  %v48 = vsel %vm28, %v46, 0.0
  %49 = vadd.xlane.f32.xlu0 %v48
  %v50 = vpop.xlane.xlu0 %49
  %v51 = vsel %vm28, %v47, 0.0
  %52 = vadd.xlane.f32.xlu0 %v51
  %v53 = vpop.xlane.xlu0 %52
  %v54 = vmul.f32 %v50, %v41
  %v55 = vmul.f32 %v53, %v41
  %v56 = vadd.f32 %v54, 1e-05
  %v57 = vadd.f32 %v55, 1e-05
  %v58 = vrsqrt.pop %v56
  %v59 = vmul.f32 %v58, %v56
  %v60 = vmul.f32 %v59, %v58
  %v61 = vmul.f32 0.5, %v60
  %v62 = vsub.f32 1.5, %v61
  %v63 = vmul.f32 %v58, %v62
  %vm64 = vweird.f32 %v56
  %vm65 = vweird.f32 %v58
  %vm66 = vmor %vm64, %vm65
  %v67 = vsel %vm66, %v58, %v63
  %v68 = vrsqrt.pop %v57
  %v69 = vmul.f32 %v68, %v57
  %v70 = vmul.f32 %v69, %v68
  %v71 = vmul.f32 0.5, %v70
  %v72 = vsub.f32 1.5, %v71
  %v73 = vmul.f32 %v68, %v72
  %vm74 = vweird.f32 %v57
  %vm75 = vweird.f32 %v68
  %vm76 = vmor %vm74, %vm75
  %v77 = vsel %vm76, %v68, %v73
  %v78 = vmul.f32 %v44, %v67
  %v79 = vmul.f32 %v45, %v77
  %v80 = vld [vmem:[%s1] sm:$0x1]
  %v82 = vperm.slane %v80, 0
  %v84 = vmul.f32 %v78, %v82
  %v85 = vmul.f32 %v79, %v82
  %v86 = vld [vmem:[%s2] sm:$0x1]
  %v88 = vperm.slane %v86, 0
  %v90 = vadd.f32 %v84, %v88
  %v91 = vadd.f32 %v85, %v88
  %v92 = vpack.c.bf16 %v91, %v90
  %v93 = vld [vmem:[%s3] sm:$0xf]
  %v94 = vld [vmem:[%s3 + $0x4] sm:$0xf]
  %v95 = vld [vmem:[%s3 + $0x8] sm:$0xf]
  %v96 = vld [vmem:[%s3 + $0xc] sm:$0xf]
  %v101 = vunpack.c.l.b16 %v93
  %v102 = vunpack.c.l.b16 %v94
  %v103 = vunpack.c.l.b16 %v95
  %v104 = vunpack.c.l.b16 %v96
  %v105 = vpack.c.b16 %v102, %v101
  %v106 = vpack.c.b16 %v104, %v103
  %v110 = vsel %vm28, %v92, 0
  %112 = vmatpush.bf16.msra.mxu0 0
  %113 = vmatpush.bf16.msra.mxu0 0
  %114 = vmatpush.bf16.msra.mxu0 0
  %115 = vmatpush.bf16.msra.mxu0 0
  %116 = vmatpush.bf16.msra.mxu0 0
  %117 = vmatpush.bf16.msra.mxu0 0
  %118 = vmatpush.bf16.msra.mxu0 %v106
  %119 = vmatpush.bf16.msra.mxu0 %v105
  %120 = vmatmul.bf16.gmra.mxu0 %v110
  %v121 = vpop.f32.mrf.mxu0
  %v122 = vadd.f32 0.0, %v121
  %v123 = vpop.f32.mrf.mxu0
  %v124 = vadd.f32 0.0, %v123
  %125 = vdwg.mxu0
  %v126 = vld [vmem:[%s4] sm:$0x1]
  %v128 = vperm.slane %v126, 0
  %v130 = vmul.f32 %v122, %v128
  %v131 = vmul.f32 %v124, %v128
  %v132 = vld [vmem:[%s5] sm:$0x1]
  %v134 = vperm.slane %v132, 0
  %v136 = vadd.f32 %v130, %v134
  %v137 = vadd.f32 %v131, %v134
  %v138 = vpack.c.bf16 %v136, %v136
  %v139 = vpack.c.bf16 %v137, %v137
  %vm140 = vcmask 781312
  %141 = vst.msk [vmem:[%s6] sm:$0xf] %vm140, %v138
  %142 = vst.msk [vmem:[%s6 + $0x4] sm:$0xf] %vm140, %v139
  // Predicated region
  $region26: #{wait_k_transformer_train_forward.27} parent=0 // pred_check
    _
  $region27: #{wait_k_transformer_train_forward.27} parent=0 // pred_check_branch
    %144 = sbr.rel (0) target = $region29
  $region28: #{wait_k_transformer_train_forward.27} parent=0 // pred_region
    _
  $region29: #{wait_k_transformer_train_forward.27} parent=0 // pred_fallthru
    _
  // Predicated region
  $region30: #{wait_k_transformer_train_forward.27} parent=0 // pred_check
    _
  $region31: #{wait_k_transformer_train_forward.27} parent=0 // pred_check_branch
    %146 = sbr.rel (0) target = $region33
  $region32: #{wait_k_transformer_train_forward.27} parent=0 // pred_region
    _
  $region33: #{wait_k_transformer_train_forward.27} parent=0 // pred_fallthru
    _

// kernel: wait_k_transformer_train_forward.28
$region0: #{wait_k_transformer_train_forward.28}
  #allocation0 [shape = 'u32[]', space=smem, size = 0x4, offset = 0x4, fixed_abs, tag = 'smem constant byte address 0x4 - core index']
  #allocation1 [shape = 'u32[72,128]{1,0:T(1,128)}', space=vmem, size = 0x9000, scoped, tag = 'internal scratch']
  #allocation2 [shape = 's32[1]{0}', space=sflag, size = 0x4, scoped, tag = 'scoped memory for wait_k_transformer_train_forward.28']
  #allocation3 [shape = 'u8[512]{0}', space=smem, size = 0x200, scoped, tag = 'prefetched SMEM operand 0']
  %s0 = inlined_call_operand.vmem [shape: s32[2], index: 0, kind: input, shape index: {}]
  %s1 = inlined_call_operand.vmem [shape: bf16[2,4,8,8], index: 1, kind: input, shape index: {}]
  %s2 = inlined_call_operand.vmem [shape: bf16[2,4,8,8], index: 2, kind: input, shape index: {}]
  %s3 = inlined_call_operand.vmem [shape: bf16[2,4,8,8], index: 3, kind: input, shape index: {}]
  %s4 = inlined_call_operand.vmem [shape: bf16[32,32], index: 4, kind: input, shape index: {}]
  %s5 = inlined_call_operand.vmem [shape: f32[1,32], index: 5, kind: input, shape index: {}]
  %s6 = inlined_call_operand.vmem [shape: bf16[2,8,32], index: 6, kind: input, shape index: {}]
  %s7 = inlined_call_operand.vmem [shape: bf16[2,8,32], index: 7, kind: output, shape index: {}]
  %s8 = sld [smem:[#allocation0]]
  $region57: #{wait_k_transformer_train_forward.28} parent=0
    _
  %s10 = ssub.s32 1, %s8
  %s11 = scalar_select 0, %s10, %s8
  %s13 = sshll.u32 %s0, 4
  %s14 = int_to_ptr.vmem [resolvable:$true] %s13
  %16 = dma.vmem_to_smem %s14, 16, [#allocation3], [#allocation2]
  %18 = dma.done [#allocation2], 16
  %19 = sfence
  loop: start=0, step=1, limit=4
  $region2: #{wait_k_transformer_train_forward.28} parent=0 // loop_pre_header
    _
  $region3: #{wait_k_transformer_train_forward.28} parent=0 // loop_header
    %s21 = sphi 0, %s25
    %p22 = scmp.ge.s32.totalorder %s21, 4
    %s28 = sphi 0, %s40
    %s29 = sphi 0, %s36
    %s30 = sphi 0, %s28
    %s31 = sphi 0, %s29
    %s32 = sphi 0, %s30
    %s33 = sphi 0, %s31
    %s45 = sphi 0, %s47
    %s48 = sphi 0, %s45
    %s49 = sphi 0, %s48
    %s65 = sphi 0, %s49
    %s71 = sphi 0, %s73
    %s74 = sphi 0, %s71
    %s75 = sphi 0, %s74
    %s91 = sphi 0, %s75
    %s97 = sphi 0, %s99
    %s100 = sphi 0, %s97
    %s101 = sphi 0, %s100
    %s117 = sphi 0, %s101
    %s121 = sphi 0, %s121
    %s123 = sphi 0, %s121
    %s124 = sphi 0, %s123
    %s138 = sphi 0, %s124
    %s142 = sphi 0, %s142
    %s144 = sphi 0, %s142
    %s145 = sphi 0, %s144
    %s159 = sphi 0, %s145
    %s167 = sphi 0, %s169
    %s170 = sphi 0, %s167
    %s171 = sphi 0, %s170
    %s187 = sphi 0, %s171
    %s195 = sphi 0, %s197
    %s198 = sphi 0, %s195
    %s199 = sphi 0, %s198
    %s215 = sphi 0, %s199
  $region4: #{wait_k_transformer_train_forward.28} parent=0 // loop_header_branch
    %24 = sbr.rel (%p22) target = $region8
  $region5: #{wait_k_transformer_train_forward.28} parent=0 // loop_body
    %s26 = ssub.s32 %s21, 1
    %s27 = ssub.s32 %s21, 2
    %s34 = sadd.s32 1, %s29
    %p35 = scmp.ge.s32.totalorder %s34, 1
    %s36 = scalar_select %p35, 0, %s34
    %s37 = sadd.s32 1, %s28
    %s38 = scalar_select %p35, %s37, %s28
    %p39 = scmp.ge.s32.totalorder %s38, 2
    %s40 = scalar_select %p39, 0, %s38
    %s41 = ssub.s32 %s28, %s40
    %s42 = ssub.s32 %s29, %s36
    %s43 = sor.u32 %s41, %s42
    %p44 = scmp.eq.s32.totalorder %s43, 0
    %s46 = sadd.s32 %s45, 1
    %s47 = scalar_select %p44, %s45, %s46
    %p50 = pneg %p44
    %p51 = scmp.eq.s32.totalorder %s21, 1
    %p52 = por %p50, %p51
    %p53 = scmp.ne.s32.totalorder %s45, %s48
    %p54 = scmp.eq.s32.totalorder %s21, 0
    %p55 = por %p53, %p54
    %p56 = scmp.ne.s32.totalorder %s45, %s48
    %p57 = scmp.eq.s32.totalorder %s26, 1
    %p58 = por %p56, %p57
    %p59 = scmp.ne.s32.totalorder %s48, %s49
    %p60 = scmp.eq.s32.totalorder %s26, 0
    %p61 = por %p59, %p60
    %p62 = scmp.ne.s32.totalorder %s48, %s49
    %p63 = scmp.eq.s32.totalorder %s27, 1
    %p64 = por %p62, %p63
    %p66 = scmp.ne.s32.totalorder %s49, %s65
    %p67 = scmp.eq.s32.totalorder %s27, 0
    %p68 = por %p66, %p67
    %s69 = ssub.s32 %s28, %s40
    %p70 = scmp.eq.s32.totalorder %s69, 0
    %s72 = sadd.s32 %s71, 1
    %s73 = scalar_select %p70, %s71, %s72
    %p76 = pneg %p70
    %p77 = scmp.eq.s32.totalorder %s21, 1
    %p78 = por %p76, %p77
    %p79 = scmp.ne.s32.totalorder %s71, %s74
    %p80 = scmp.eq.s32.totalorder %s21, 0
    %p81 = por %p79, %p80
    %p82 = scmp.ne.s32.totalorder %s71, %s74
    %p83 = scmp.eq.s32.totalorder %s26, 1
    %p84 = por %p82, %p83
    %p85 = scmp.ne.s32.totalorder %s74, %s75
    %p86 = scmp.eq.s32.totalorder %s26, 0
    %p87 = por %p85, %p86
    %p88 = scmp.ne.s32.totalorder %s74, %s75
    %p89 = scmp.eq.s32.totalorder %s27, 1
    %p90 = por %p88, %p89
    %p92 = scmp.ne.s32.totalorder %s75, %s91
    %p93 = scmp.eq.s32.totalorder %s27, 0
    %p94 = por %p92, %p93
    %s95 = ssub.s32 %s28, %s40
    %p96 = scmp.eq.s32.totalorder %s95, 0
    %s98 = sadd.s32 %s97, 1
    %s99 = scalar_select %p96, %s97, %s98
    %p102 = pneg %p96
    %p103 = scmp.eq.s32.totalorder %s21, 1
    %p104 = por %p102, %p103
    %p105 = scmp.ne.s32.totalorder %s97, %s100
    %p106 = scmp.eq.s32.totalorder %s21, 0
    %p107 = por %p105, %p106
    %p108 = scmp.ne.s32.totalorder %s97, %s100
    %p109 = scmp.eq.s32.totalorder %s26, 1
    %p110 = por %p108, %p109
    %p111 = scmp.ne.s32.totalorder %s100, %s101
    %p112 = scmp.eq.s32.totalorder %s26, 0
    %p113 = por %p111, %p112
    %p114 = scmp.ne.s32.totalorder %s100, %s101
    %p115 = scmp.eq.s32.totalorder %s27, 1
    %p116 = por %p114, %p115
    %p118 = scmp.ne.s32.totalorder %s101, %s117
    %p119 = scmp.eq.s32.totalorder %s27, 0
    %p120 = por %p118, %p119
    %s122 = sadd.s32 %s121, 1
    %p125 = scmp.eq.s32.totalorder %s21, 1
    %p126 = scmp.ne.s32.totalorder %s121, %s123
    %p127 = scmp.eq.s32.totalorder %s21, 0
    %p128 = por %p126, %p127
    %p129 = scmp.ne.s32.totalorder %s121, %s123
    %p130 = scmp.eq.s32.totalorder %s26, 1
    %p131 = por %p129, %p130
    %p132 = scmp.ne.s32.totalorder %s123, %s124
    %p133 = scmp.eq.s32.totalorder %s26, 0
    %p134 = por %p132, %p133
    %p135 = scmp.ne.s32.totalorder %s123, %s124
    %p136 = scmp.eq.s32.totalorder %s27, 1
    %p137 = por %p135, %p136
    %p139 = scmp.ne.s32.totalorder %s124, %s138
    %p140 = scmp.eq.s32.totalorder %s27, 0
    %p141 = por %p139, %p140
    %s143 = sadd.s32 %s142, 1
    %p146 = scmp.eq.s32.totalorder %s21, 1
    %p147 = scmp.ne.s32.totalorder %s142, %s144
    %p148 = scmp.eq.s32.totalorder %s21, 0
    %p149 = por %p147, %p148
    %p150 = scmp.ne.s32.totalorder %s142, %s144
    %p151 = scmp.eq.s32.totalorder %s26, 1
    %p152 = por %p150, %p151
    %p153 = scmp.ne.s32.totalorder %s144, %s145
    %p154 = scmp.eq.s32.totalorder %s26, 0
    %p155 = por %p153, %p154
    %p156 = scmp.ne.s32.totalorder %s144, %s145
    %p157 = scmp.eq.s32.totalorder %s27, 1
    %p158 = por %p156, %p157
    %p160 = scmp.ne.s32.totalorder %s145, %s159
    %p161 = scmp.eq.s32.totalorder %s27, 0
    %p162 = por %p160, %p161
    %s163 = ssub.s32 %s28, %s40
    %s164 = ssub.s32 %s29, %s36
    %s165 = sor.u32 %s163, %s164
    %p166 = scmp.eq.s32.totalorder %s165, 0
    %s168 = sadd.s32 %s167, 1
    %s169 = scalar_select %p166, %s167, %s168
    %p172 = pneg %p166
    %p173 = scmp.eq.s32.totalorder %s21, 1
    %p174 = por %p172, %p173
    %p175 = scmp.ne.s32.totalorder %s167, %s170
    %p176 = scmp.eq.s32.totalorder %s21, 0
    %p177 = por %p175, %p176
    %p178 = scmp.ne.s32.totalorder %s167, %s170
    %p179 = scmp.eq.s32.totalorder %s26, 1
    %p180 = por %p178, %p179
    %p181 = scmp.ne.s32.totalorder %s170, %s171
    %p182 = scmp.eq.s32.totalorder %s26, 0
    %p183 = por %p181, %p182
    %p184 = scmp.ne.s32.totalorder %s170, %s171
    %p185 = scmp.eq.s32.totalorder %s27, 1
    %p186 = por %p184, %p185
    %p188 = scmp.ne.s32.totalorder %s171, %s187
    %p189 = scmp.eq.s32.totalorder %s27, 0
    %p190 = por %p188, %p189
    %s191 = ssub.s32 %s28, %s40
    %s192 = ssub.s32 %s29, %s36
    %s193 = sor.u32 %s191, %s192
    %p194 = scmp.eq.s32.totalorder %s193, 0
    %s196 = sadd.s32 %s195, 1
    %s197 = scalar_select %p194, %s195, %s196
    %p200 = pneg %p194
    %p201 = scmp.eq.s32.totalorder %s21, 1
    %p202 = por %p200, %p201
    %p203 = scmp.ne.s32.totalorder %s195, %s198
    %p204 = scmp.eq.s32.totalorder %s21, 0
    %p205 = por %p203, %p204
    %p206 = scmp.ne.s32.totalorder %s195, %s198
    %p207 = scmp.eq.s32.totalorder %s26, 1
    %p208 = por %p206, %p207
    %p209 = scmp.ne.s32.totalorder %s198, %s199
    %p210 = scmp.eq.s32.totalorder %s26, 0
    %p211 = por %p209, %p210
    %p212 = scmp.ne.s32.totalorder %s198, %s199
    %p213 = scmp.eq.s32.totalorder %s27, 1
    %p214 = por %p212, %p213
    %p216 = scmp.ne.s32.totalorder %s199, %s215
    %p217 = scmp.eq.s32.totalorder %s27, 0
    %p218 = por %p216, %p217
    %p219 = scmp.le.s32.totalorder 1, %s21
    %p220 = scmp.lt.s32.totalorder %s21, 3
    %p221 = pnand %p219, %p220
    %p222 = pneg %p221
    // Predicated region
    $region9: #{wait_k_transformer_train_forward.28} parent=5 // pred_check
      _
    $region10: #{wait_k_transformer_train_forward.28} parent=5 // pred_check_branch
      %224 = sbr.rel (%p221) target = $region12
    $region11: #{wait_k_transformer_train_forward.28} parent=5 // pred_region
      %s225 = ssub.s32 %s21, 1
      // Predicated region
      $region13: #{wait_k_transformer_train_forward.28} parent=11 // pred_check
        %p226 = pneg %p134
      $region14: #{wait_k_transformer_train_forward.28} parent=11 // pred_check_branch
        %228 = sbr.rel (%p226) target = $region16
      $region15: #{wait_k_transformer_train_forward.28} parent=11 // pred_region
        _
      $region16: #{wait_k_transformer_train_forward.28} parent=11 // pred_fallthru
        _
      // Predicated region
      $region17: #{wait_k_transformer_train_forward.28} parent=11 // pred_check
        %p229 = pneg %p155
      $region18: #{wait_k_transformer_train_forward.28} parent=11 // pred_check_branch
        %231 = sbr.rel (%p229) target = $region20
      $region19: #{wait_k_transformer_train_forward.28} parent=11 // pred_region
        _
      $region20: #{wait_k_transformer_train_forward.28} parent=11 // pred_fallthru
        _
    $region12: #{wait_k_transformer_train_forward.28} parent=5 // pred_fallthru
      _
    %p232 = scmp.lt.s32.totalorder %s21, 2
    // Predicated region
    $region21: #{wait_k_transformer_train_forward.28} parent=5 // pred_check
      %p233 = pneg %p232
    $region22: #{wait_k_transformer_train_forward.28} parent=5 // pred_check_branch
      %235 = sbr.rel (%p233) target = $region24
    $region23: #{wait_k_transformer_train_forward.28} parent=5 // pred_region
      // Predicated region
      $region25: #{wait_k_transformer_train_forward.28} parent=23 // pred_check
        %p236 = pneg %p55
      $region26: #{wait_k_transformer_train_forward.28} parent=23 // pred_check_branch
        %238 = sbr.rel (%p236) target = $region28
      $region27: #{wait_k_transformer_train_forward.28} parent=23 // pred_region
        %p239 = scmp.lt.s32.totalorder %s28, 1
        %s240 = scalar_select %p239, %s28, 1
        %p241 = scmp.lt.s32.totalorder %s29, 0
        %s242 = scalar_select %p241, %s29, 0
        %s243 = smul.addr %s240, 4
        %s244 = sadd.s32 %s242, %s243
        %s245 = smul.addr %s244, 4
        %s246 = scalar_lea.vmem %s1, %s245
      $region28: #{wait_k_transformer_train_forward.28} parent=23 // pred_fallthru
        _
      // Predicated region
      $region29: #{wait_k_transformer_train_forward.28} parent=23 // pred_check
        %p247 = pneg %p81
      $region30: #{wait_k_transformer_train_forward.28} parent=23 // pred_check_branch
        %249 = sbr.rel (%p247) target = $region32
      $region31: #{wait_k_transformer_train_forward.28} parent=23 // pred_region
        %p250 = scmp.lt.s32.totalorder %s28, 1
        %s251 = scalar_select %p250, %s28, 1
        %s252 = smul.addr %s251, 4
        %s253 = smul.addr %s252, 4
        %s254 = scalar_lea.vmem %s2, %s253
      $region32: #{wait_k_transformer_train_forward.28} parent=23 // pred_fallthru
        _
      // Predicated region
      $region33: #{wait_k_transformer_train_forward.28} parent=23 // pred_check
        %p255 = pneg %p107
      $region34: #{wait_k_transformer_train_forward.28} parent=23 // pred_check_branch
        %257 = sbr.rel (%p255) target = $region36
      $region35: #{wait_k_transformer_train_forward.28} parent=23 // pred_region
        %p258 = scmp.lt.s32.totalorder %s28, 1
        %s259 = scalar_select %p258, %s28, 1
        %s260 = smul.addr %s259, 4
        %s261 = smul.addr %s260, 4
        %s262 = scalar_lea.vmem %s3, %s261
      $region36: #{wait_k_transformer_train_forward.28} parent=23 // pred_fallthru
        _
      // Predicated region
      $region37: #{wait_k_transformer_train_forward.28} parent=23 // pred_check
        %p263 = pneg %p177
      $region38: #{wait_k_transformer_train_forward.28} parent=23 // pred_check_branch
        %265 = sbr.rel (%p263) target = $region40
      $region39: #{wait_k_transformer_train_forward.28} parent=23 // pred_region
        %p266 = scmp.lt.s32.totalorder %s28, 1
        %s267 = scalar_select %p266, %s28, 1
        %p268 = scmp.lt.s32.totalorder %s29, 0
        %s269 = scalar_select %p268, %s29, 0
        %s270 = sadd.s32 %s269, %s267
        %s271 = smul.addr %s270, 4
        %s272 = scalar_lea.vmem %s6, %s271
      $region40: #{wait_k_transformer_train_forward.28} parent=23 // pred_fallthru
        _
    $region24: #{wait_k_transformer_train_forward.28} parent=5 // pred_fallthru
      _
    %p273 = scmp.le.s32.totalorder 1, %s21
    %p274 = scmp.lt.s32.totalorder %s21, 3
    %p275 = pnand %p273, %p274
    %p276 = pneg %p275
    // Predicated region
    $region41: #{wait_k_transformer_train_forward.28} parent=5 // pred_check
      _
    $region42: #{wait_k_transformer_train_forward.28} parent=5 // pred_check_branch
      %278 = sbr.rel (%p275) target = $region44
    $region43: #{wait_k_transformer_train_forward.28} parent=5 // pred_region
      %s279 = ssub.s32 %s21, 1
      %p280 = scmp.lt.s32.totalorder %s30, 1
      %s281 = scalar_select %p280, %s30, 1
      %p282 = scmp.lt.s32.totalorder %s31, 0
      %s283 = scalar_select %p282, %s31, 0
      %s284 = smul.addr %s281, 4
      %s285 = sadd.s32 %s283, %s284
      %s286 = smul.addr %s285, 4
      %s287 = scalar_lea.vmem %s1, %s286
      %p288 = pneg %p61
      %p289 = pneg %p58
      %p290 = scmp.lt.s32.totalorder %s30, 1
      %s291 = scalar_select %p290, %s30, 1
      %s292 = smul.addr %s291, 4
      %s293 = smul.addr %s292, 4
      %s294 = scalar_lea.vmem %s2, %s293
      %p295 = pneg %p87
      %p296 = pneg %p84
      %p297 = scmp.lt.s32.totalorder %s30, 1
      %s298 = scalar_select %p297, %s30, 1
      %s299 = smul.addr %s298, 4
      %s300 = smul.addr %s299, 4
      %s301 = scalar_lea.vmem %s3, %s300
      %p302 = pneg %p113
      %p303 = pneg %p110
      %p304 = pneg %p134
      %p305 = pneg %p131
      %p306 = pneg %p155
      %p307 = pneg %p152
      %p308 = scmp.lt.s32.totalorder %s30, 1
      %s309 = scalar_select %p308, %s30, 1
      %p310 = scmp.lt.s32.totalorder %s31, 0
      %s311 = scalar_select %p310, %s31, 0
      %s312 = sadd.s32 %s311, %s309
      %s313 = smul.addr %s312, 4
      %s314 = scalar_lea.vmem %s6, %s313
      %p315 = pneg %p183
      %p316 = pneg %p180
      %p317 = pneg %p211
      %p318 = pneg %p208
      %p319 = scmp.lt.s32.totalorder %s30, 1
      %s320 = scalar_select %p319, %s30, 1
      %p321 = scmp.lt.s32.totalorder %s31, 0
      %s322 = scalar_select %p321, %s31, 0
      %s323 = sadd.s32 %s322, %s320
      %s324 = smul.addr %s323, 4
      %s325 = scalar_lea.vmem %s7, %s324
      %p326 = scmp.lt.s32.totalorder %s30, 1
      %s327 = scalar_select %p326, %s30, 1
      %p328 = scmp.lt.s32.totalorder %s31, 0
      %s329 = scalar_select %p328, %s31, 0
      %s330 = smul.addr %s327, 4
      %s331 = sadd.s32 %s329, %s330
      %s332 = smul.addr %s331, 4
      %s333 = scalar_lea.vmem %s1, %s332
      %p334 = scmp.lt.s32.totalorder %s30, 1
      %s335 = scalar_select %p334, %s30, 1
      %s336 = smul.addr %s335, 4
      %s337 = smul.addr %s336, 4
      %s338 = scalar_lea.vmem %s2, %s337
      %p339 = scmp.lt.s32.totalorder %s30, 1
      %s340 = scalar_select %p339, %s30, 1
      %s341 = smul.addr %s340, 4
      %s342 = smul.addr %s341, 4
      %s343 = scalar_lea.vmem %s3, %s342
      %p344 = scmp.lt.s32.totalorder %s30, 1
      %s345 = scalar_select %p344, %s30, 1
      %p346 = scmp.lt.s32.totalorder %s31, 0
      %s347 = scalar_select %p346, %s31, 0
      %s348 = sadd.s32 %s347, %s345
      %s349 = smul.addr %s348, 4
      %s350 = scalar_lea.vmem %s6, %s349
      %p351 = scmp.lt.s32.totalorder %s30, 1
      %s352 = scalar_select %p351, %s30, 1
      %p353 = scmp.lt.s32.totalorder %s31, 0
      %s354 = scalar_select %p353, %s31, 0
      %s355 = sadd.s32 %s354, %s352
      %s356 = smul.addr %s355, 4
      %s357 = scalar_lea.vmem %s7, %s356
      %s359 = smul.u32 %s31, 8
      %s360 = sld [smem:[#allocation3 + %s30]]
      %v361 = vlaneseq
      %v362 = vshrl.u32 %v361, 7
      %v363 = vstv %s359
      %v364 = vadd.s32 %v363, %v362
      %v365 = vlaneseq
      %v366 = vand.u32 %v365, 127
      %v367 = vstv %s360
      %vm368 = vcmp.ge.s32.totalorder %v366, %v367
      %vm369 = vcmp.gt.s32.totalorder %v366, %v364
      %vm370 = vmor %vm368, %vm369
      %v371 = vsel %vm370, -1e+09, 0.0
      %v372 = vld [vmem:[%s333] sm:$0xf]
      %v373 = vld [vmem:[%s338] sm:$0xf]
      %v374 = vld [vmem:[%s343] sm:$0xf]
      %vm375 = vcmask 64512
      %v377 = vsel %vm375, %v372, 0
      %v380 = vsel %vm375, %v373, 0
      %382 = vmatpush.bf16.xpose.msra.mxu0 0
      %383 = vmatpush.bf16.xpose.msra.mxu0 0
      %384 = vmatpush.bf16.xpose.msra.mxu0 0
      %385 = vmatpush.bf16.xpose.msra.mxu0 0
      %386 = vmatpush.bf16.xpose.msra.mxu0 0
      %387 = vmatpush.bf16.xpose.msra.mxu0 0
      %388 = vmatpush.bf16.xpose.msra.mxu0 0
      %389 = vmatpush.bf16.xpose.msra.mxu0 %v380
      %390 = vmatmul.bf16.gmra.mxu0 %v377
      %v391 = vpop.f32.mrf.mxu0
      %v392 = vadd.f32 %v371, %v391
      %v393 = vpop.f32.mrf.mxu0
      %394 = vdwg.mxu0
      %v395 = vsel %vm375, %v392, -inf
      %396 = vmax.xlane.f32.xlu0 %v395
      %v397 = vpop.xlane.xlu0 %396
      %v398 = vsub.f32 %v392, %v397
      %v399 = vmul.f32 %v398, 1.442695
      %v400 = vpow.pop %v399
      %v401 = vsel %vm375, %v400, 0.0
      %402 = vadd.xlane.f32.xlu0 %v401
      %v403 = vpop.xlane.xlu0 %402
      %v404 = vrcp.pop %v403
      %v405 = vmul.f32 %v400, %v404
      %v406 = vpack.c.bf16 %v405, %v405
      %v408 = vsel %vm375, %v406, 0
      %vm410 = vcmask 1043456
      %v412 = vsel %vm410, %v374, 0
      %414 = vmatpush.bf16.msra.mxu0 0
      %415 = vmatpush.bf16.msra.mxu0 0
      %416 = vmatpush.bf16.msra.mxu0 0
      %417 = vmatpush.bf16.msra.mxu0 0
      %418 = vmatpush.bf16.msra.mxu0 0
      %419 = vmatpush.bf16.msra.mxu0 0
      %420 = vmatpush.bf16.msra.mxu0 0
      %421 = vmatpush.bf16.msra.mxu0 %v412
      %422 = vmatmul.bf16.gmra.mxu0 %v408
      %v423 = vpop.f32.mrf.mxu0
      %v424 = vadd.f32 0.0, %v423
      %v425 = vpop.f32.mrf.mxu0
      %426 = vdwg.mxu0
      %s427 = scalar_lea.vmem %s333, 4
      %v428 = vld [vmem:[%s427] sm:$0xf]
      %s429 = scalar_lea.vmem %s338, 4
      %v430 = vld [vmem:[%s429] sm:$0xf]
      %s431 = scalar_lea.vmem %s343, 4
      %v432 = vld [vmem:[%s431] sm:$0xf]
      %v434 = vsel %vm375, %v428, 0
      %v437 = vsel %vm375, %v430, 0
      %439 = vmatpush.bf16.xpose.msra.mxu0 0
      %440 = vmatpush.bf16.xpose.msra.mxu0 0
      %441 = vmatpush.bf16.xpose.msra.mxu0 0
      %442 = vmatpush.bf16.xpose.msra.mxu0 0
      %443 = vmatpush.bf16.xpose.msra.mxu0 0
      %444 = vmatpush.bf16.xpose.msra.mxu0 0
      %445 = vmatpush.bf16.xpose.msra.mxu0 0
      %446 = vmatpush.bf16.xpose.msra.mxu0 %v437
      %447 = vmatmul.bf16.gmra.mxu0 %v434
      %v448 = vpop.f32.mrf.mxu0
      %v449 = vadd.f32 %v371, %v448
      %v450 = vpop.f32.mrf.mxu0
      %451 = vdwg.mxu0
      %v452 = vsel %vm375, %v449, -inf
      %453 = vmax.xlane.f32.xlu0 %v452
      %v454 = vpop.xlane.xlu0 %453
      %v455 = vsub.f32 %v449, %v454
      %v456 = vmul.f32 %v455, 1.442695
      %v457 = vpow.pop %v456
      %v458 = vsel %vm375, %v457, 0.0
      %459 = vadd.xlane.f32.xlu0 %v458
      %v460 = vpop.xlane.xlu0 %459
      %v461 = vrcp.pop %v460
      %v462 = vmul.f32 %v457, %v461
      %v463 = vpack.c.bf16 %v462, %v462
      %v465 = vsel %vm375, %v463, 0
      %v468 = vsel %vm410, %v432, 0
      %470 = vmatpush.bf16.msra.mxu0 0
      %471 = vmatpush.bf16.msra.mxu0 0
      %472 = vmatpush.bf16.msra.mxu0 0
      %473 = vmatpush.bf16.msra.mxu0 0
      %474 = vmatpush.bf16.msra.mxu0 0
      %475 = vmatpush.bf16.msra.mxu0 0
      %476 = vmatpush.bf16.msra.mxu0 0
      %477 = vmatpush.bf16.msra.mxu0 %v468
      %478 = vmatmul.bf16.gmra.mxu0 %v465
      %v479 = vpop.f32.mrf.mxu0
      %v480 = vadd.f32 0.0, %v479
      %v481 = vpop.f32.mrf.mxu0
      %482 = vdwg.mxu0
      %s483 = scalar_lea.vmem %s333, 8
      %v484 = vld [vmem:[%s483] sm:$0xf]
      %s485 = scalar_lea.vmem %s338, 8
      %v486 = vld [vmem:[%s485] sm:$0xf]
      %s487 = scalar_lea.vmem %s343, 8
      %v488 = vld [vmem:[%s487] sm:$0xf]
      %v490 = vsel %vm375, %v484, 0
      %v493 = vsel %vm375, %v486, 0
      %495 = vmatpush.bf16.xpose.msra.mxu0 0
      %496 = vmatpush.bf16.xpose.msra.mxu0 0
      %497 = vmatpush.bf16.xpose.msra.mxu0 0
      %498 = vmatpush.bf16.xpose.msra.mxu0 0
      %499 = vmatpush.bf16.xpose.msra.mxu0 0
      %500 = vmatpush.bf16.xpose.msra.mxu0 0
      %501 = vmatpush.bf16.xpose.msra.mxu0 0
      %502 = vmatpush.bf16.xpose.msra.mxu0 %v493
      %503 = vmatmul.bf16.gmra.mxu0 %v490
      %v504 = vpop.f32.mrf.mxu0
      %v505 = vadd.f32 %v371, %v504
      %v506 = vpop.f32.mrf.mxu0
      %507 = vdwg.mxu0
      %v508 = vsel %vm375, %v505, -inf
      %509 = vmax.xlane.f32.xlu0 %v508
      %v510 = vpop.xlane.xlu0 %509
      %v511 = vsub.f32 %v505, %v510
      %v512 = vmul.f32 %v511, 1.442695
      %v513 = vpow.pop %v512
      %v514 = vsel %vm375, %v513, 0.0
      %515 = vadd.xlane.f32.xlu0 %v514
      %v516 = vpop.xlane.xlu0 %515
      %v517 = vrcp.pop %v516
      %v518 = vmul.f32 %v513, %v517
      %v519 = vpack.c.bf16 %v518, %v518
      %v521 = vsel %vm375, %v519, 0
      %v524 = vsel %vm410, %v488, 0
      %526 = vmatpush.bf16.msra.mxu0 0
      %527 = vmatpush.bf16.msra.mxu0 0
      %528 = vmatpush.bf16.msra.mxu0 0
      %529 = vmatpush.bf16.msra.mxu0 0
      %530 = vmatpush.bf16.msra.mxu0 0
      %531 = vmatpush.bf16.msra.mxu0 0
      %532 = vmatpush.bf16.msra.mxu0 0
      %533 = vmatpush.bf16.msra.mxu0 %v524
      %534 = vmatmul.bf16.gmra.mxu0 %v521
      %v535 = vpop.f32.mrf.mxu0
      %v536 = vadd.f32 0.0, %v535
      %v537 = vpop.f32.mrf.mxu0
      %538 = vdwg.mxu0
      %s539 = scalar_lea.vmem %s333, 12
      %v540 = vld [vmem:[%s539] sm:$0xf]
      %s541 = scalar_lea.vmem %s338, 12
      %v542 = vld [vmem:[%s541] sm:$0xf]
      %s543 = scalar_lea.vmem %s343, 12
      %v544 = vld [vmem:[%s543] sm:$0xf]
      %v546 = vsel %vm375, %v540, 0
      %v549 = vsel %vm375, %v542, 0
      %551 = vmatpush.bf16.xpose.msra.mxu0 0
      %552 = vmatpush.bf16.xpose.msra.mxu0 0
      %553 = vmatpush.bf16.xpose.msra.mxu0 0
      %554 = vmatpush.bf16.xpose.msra.mxu0 0
      %555 = vmatpush.bf16.xpose.msra.mxu0 0
      %556 = vmatpush.bf16.xpose.msra.mxu0 0
      %557 = vmatpush.bf16.xpose.msra.mxu0 0
      %558 = vmatpush.bf16.xpose.msra.mxu0 %v549
      %559 = vmatmul.bf16.gmra.mxu0 %v546
      %v560 = vpop.f32.mrf.mxu0
      %v561 = vadd.f32 %v371, %v560
      %v562 = vpop.f32.mrf.mxu0
      %563 = vdwg.mxu0
      %v564 = vsel %vm375, %v561, -inf
      %565 = vmax.xlane.f32.xlu0 %v564
      %v566 = vpop.xlane.xlu0 %565
      %v567 = vsub.f32 %v561, %v566
      %v568 = vmul.f32 %v567, 1.442695
      %v569 = vpow.pop %v568
      %v570 = vsel %vm375, %v569, 0.0
      %571 = vadd.xlane.f32.xlu0 %v570
      %v572 = vpop.xlane.xlu0 %571
      %v573 = vrcp.pop %v572
      %v574 = vmul.f32 %v569, %v573
      %v575 = vpack.c.bf16 %v574, %v574
      %v577 = vsel %vm375, %v575, 0
      %v580 = vsel %vm410, %v544, 0
      %582 = vmatpush.bf16.msra.mxu0 0
      %583 = vmatpush.bf16.msra.mxu0 0
      %584 = vmatpush.bf16.msra.mxu0 0
      %585 = vmatpush.bf16.msra.mxu0 0
      %586 = vmatpush.bf16.msra.mxu0 0
      %587 = vmatpush.bf16.msra.mxu0 0
      %588 = vmatpush.bf16.msra.mxu0 0
      %589 = vmatpush.bf16.msra.mxu0 %v580
      %590 = vmatmul.bf16.gmra.mxu0 %v577
      %v591 = vpop.f32.mrf.mxu0
      %v592 = vadd.f32 0.0, %v591
      %v593 = vpop.f32.mrf.mxu0
      %594 = vdwg.mxu0
      %596 = vrot.lane.b32.xlu0 %v480, 8
      %v597 = vpop.permute.xlu0 %596
      %600 = vrot.lane.b32.xlu0 %v536, 16
      %v601 = vpop.permute.xlu0 %600
      %604 = vrot.lane.b32.xlu0 %v592, 24
      %v605 = vpop.permute.xlu0 %604
      %v607 = vsel %vm375, %v424, %v597
      %vm608 = vcmask 130048
      %v609 = vsel %vm608, %v607, %v601
      %vm610 = vcmask 195584
      %v611 = vsel %vm610, %v609, %v605
      %v612 = vpack.c.bf16 %v611, %v611
      %v613 = vld [vmem:[%s4] sm:$0xf]
      %v614 = vld [vmem:[%s4 + $0x4] sm:$0xf]
      %v615 = vld [vmem:[%s4 + $0x8] sm:$0xf]
      %v616 = vld [vmem:[%s4 + $0xc] sm:$0xf]
      %v621 = vunpack.c.l.b16 %v613
      %v622 = vunpack.c.l.b16 %v614
      %v623 = vunpack.c.l.b16 %v615
      %v624 = vunpack.c.l.b16 %v616
      %v625 = vpack.c.b16 %v622, %v621
      %v626 = vpack.c.b16 %v624, %v623
      %vm629 = vcmask 261120
      %v631 = vsel %vm629, %v612, 0
      %633 = vmatpush.bf16.msra.mxu0 0
      %634 = vmatpush.bf16.msra.mxu0 0
      %635 = vmatpush.bf16.msra.mxu0 0
      %636 = vmatpush.bf16.msra.mxu0 0
      %637 = vmatpush.bf16.msra.mxu0 0
      %638 = vmatpush.bf16.msra.mxu0 0
      %639 = vmatpush.bf16.msra.mxu0 %v626
      %640 = vmatpush.bf16.msra.mxu0 %v625
      %641 = vmatmul.bf16.gmra.mxu0 %v631
      %v642 = vpop.f32.mrf.mxu0
      %v643 = vadd.f32 0.0, %v642
      %v644 = vpop.f32.mrf.mxu0
      %645 = vdwg.mxu0
      %v646 = vld [vmem:[%s350] sm:$0xf]
      %v647 = vunpack.c.l.bf16 %v646
      %v648 = vadd.f32 %v647, %v643
      %v649 = vld [vmem:[%s5] sm:$0x1]
      %v651 = vperm.slane %v649, 0
      %v653 = vadd.f32 %v648, %v651
      %v654 = vpack.c.bf16 %v653, %v653
      %vm655 = vcmask 257024
      %656 = vst.msk [vmem:[%s357] sm:$0xf] %vm655, %v654
      %p657 = scmp.lt.s32.totalorder %s30, 1
      %s658 = scalar_select %p657, %s30, 1
      %p659 = scmp.lt.s32.totalorder %s31, 0
      %s660 = scalar_select %p659, %s31, 0
      %s661 = sadd.s32 %s660, %s658
      %s662 = smul.addr %s661, 4
      %s663 = scalar_lea.vmem %s7, %s662
      // Predicated region
      $region45: #{wait_k_transformer_train_forward.28} parent=43 // pred_check
        %p664 = pneg %p208
      $region46: #{wait_k_transformer_train_forward.28} parent=43 // pred_check_branch
        %666 = sbr.rel (%p664) target = $region48
      $region47: #{wait_k_transformer_train_forward.28} parent=43 // pred_region
        _
      $region48: #{wait_k_transformer_train_forward.28} parent=43 // pred_fallthru
        _
    $region44: #{wait_k_transformer_train_forward.28} parent=5 // pred_fallthru
      _
    %p667 = scmp.le.s32.totalorder 2, %s21
    // Predicated region
    $region49: #{wait_k_transformer_train_forward.28} parent=5 // pred_check
      %p668 = pneg %p667
    $region50: #{wait_k_transformer_train_forward.28} parent=5 // pred_check_branch
      %670 = sbr.rel (%p668) target = $region52
    $region51: #{wait_k_transformer_train_forward.28} parent=5 // pred_region
      %s671 = ssub.s32 %s21, 2
      // Predicated region
      $region53: #{wait_k_transformer_train_forward.28} parent=51 // pred_check
        %p672 = pneg %p214
      $region54: #{wait_k_transformer_train_forward.28} parent=51 // pred_check_branch
        %674 = sbr.rel (%p672) target = $region56
      $region55: #{wait_k_transformer_train_forward.28} parent=51 // pred_region
        %p675 = scmp.lt.s32.totalorder %s32, 1
        %s676 = scalar_select %p675, %s32, 1
        %p677 = scmp.lt.s32.totalorder %s33, 0
        %s678 = scalar_select %p677, %s33, 0
        %s679 = sadd.s32 %s678, %s676
        %s680 = smul.addr %s679, 4
        %s681 = scalar_lea.vmem %s7, %s680
      $region56: #{wait_k_transformer_train_forward.28} parent=51 // pred_fallthru
        _
    $region52: #{wait_k_transformer_train_forward.28} parent=5 // pred_fallthru
      _
  $region6: #{wait_k_transformer_train_forward.28} parent=0 // loop_footer
    %s25 = sadd.s32 1, %s21
  $region7: #{wait_k_transformer_train_forward.28} parent=0 // loop_footer_branch
    %20 = sbr.rel target = $region3
  $region8: #{wait_k_transformer_train_forward.28} parent=0 // loop_exit
    _

// kernel: wait_k_transformer_train_forward.29
$region0: #{wait_k_transformer_train_forward.29}
  #allocation0 [shape = 'u32[]', space=smem, size = 0x4, offset = 0x4, fixed_abs, tag = 'smem constant byte address 0x4 - core index']
  #allocation1 [shape = 'u32[72,128]{1,0:T(1,128)}', space=vmem, size = 0x9000, scoped, tag = 'internal scratch']
  %s0 = inlined_call_operand.vmem [shape: bf16[16,32], index: 0, kind: input, shape index: {}]
  %s1 = inlined_call_operand.vmem [shape: f32[1,32], index: 1, kind: input, shape index: {}]
  %s2 = inlined_call_operand.vmem [shape: f32[1,32], index: 2, kind: input, shape index: {}]
  %s3 = inlined_call_operand.vmem [shape: bf16[32,32], index: 3, kind: input, shape index: {}]
  %s4 = inlined_call_operand.vmem [shape: f32[1,32], index: 4, kind: input, shape index: {}]
  %s5 = inlined_call_operand.vmem [shape: f32[1,32], index: 5, kind: input, shape index: {}]
  %s6 = inlined_call_operand.vmem [shape: bf16[16,32], index: 6, kind: output, shape index: {}]
  %s7 = sld [smem:[#allocation0]]
  $region34: #{wait_k_transformer_train_forward.29} parent=0
    _
  %s9 = ssub.s32 1, %s7
  %s10 = scalar_select 0, %s9, %s7
  // Predicated region
  $region2: #{wait_k_transformer_train_forward.29} parent=0 // pred_check
    _
  $region3: #{wait_k_transformer_train_forward.29} parent=0 // pred_check_branch
    %12 = sbr.rel (0) target = $region5
  $region4: #{wait_k_transformer_train_forward.29} parent=0 // pred_region
    _
  $region5: #{wait_k_transformer_train_forward.29} parent=0 // pred_fallthru
    _
  // Predicated region
  $region6: #{wait_k_transformer_train_forward.29} parent=0 // pred_check
    _
  $region7: #{wait_k_transformer_train_forward.29} parent=0 // pred_check_branch
    %14 = sbr.rel (0) target = $region9
  $region8: #{wait_k_transformer_train_forward.29} parent=0 // pred_region
    _
  $region9: #{wait_k_transformer_train_forward.29} parent=0 // pred_fallthru
    _
  // Predicated region
  $region10: #{wait_k_transformer_train_forward.29} parent=0 // pred_check
    _
  $region11: #{wait_k_transformer_train_forward.29} parent=0 // pred_check_branch
    %16 = sbr.rel (0) target = $region13
  $region12: #{wait_k_transformer_train_forward.29} parent=0 // pred_region
    _
  $region13: #{wait_k_transformer_train_forward.29} parent=0 // pred_fallthru
    _
  // Predicated region
  $region14: #{wait_k_transformer_train_forward.29} parent=0 // pred_check
    _
  $region15: #{wait_k_transformer_train_forward.29} parent=0 // pred_check_branch
    %18 = sbr.rel (0) target = $region17
  $region16: #{wait_k_transformer_train_forward.29} parent=0 // pred_region
    _
  $region17: #{wait_k_transformer_train_forward.29} parent=0 // pred_fallthru
    _
  // Predicated region
  $region18: #{wait_k_transformer_train_forward.29} parent=0 // pred_check
    _
  $region19: #{wait_k_transformer_train_forward.29} parent=0 // pred_check_branch
    %20 = sbr.rel (0) target = $region21
  $region20: #{wait_k_transformer_train_forward.29} parent=0 // pred_region
    _
  $region21: #{wait_k_transformer_train_forward.29} parent=0 // pred_fallthru
    _
  // Predicated region
  $region22: #{wait_k_transformer_train_forward.29} parent=0 // pred_check
    _
  $region23: #{wait_k_transformer_train_forward.29} parent=0 // pred_check_branch
    %22 = sbr.rel (0) target = $region25
  $region24: #{wait_k_transformer_train_forward.29} parent=0 // pred_region
    _
  $region25: #{wait_k_transformer_train_forward.29} parent=0 // pred_fallthru
    _
  %v24 = vld [vmem:[%s0] sm:$0xf]
  %v25 = vld [vmem:[%s0 + $0x4] sm:$0xf]
  %v26 = vunpack.c.l.bf16 %v24
  %v27 = vunpack.c.l.bf16 %v25
  %vm28 = vcmask 261120
  %v29 = vsel %vm28, %v26, 0.0
  %30 = vadd.xlane.f32.xlu0 %v29
  %v31 = vpop.xlane.xlu0 %30
  %v32 = vsel %vm28, %v27, 0.0
  %33 = vadd.xlane.f32.xlu0 %v32
  %v34 = vpop.xlane.xlu0 %33
  %v35 = vrcp.pop 32.0
  %v36 = vmul.f32 32.0, %v35
  %v37 = vsub.f32 1.0, %v36
  %v38 = vmul.f32 %v35, %v37
  %v39 = vadd.f32 %v35, %v38
  %vm40 = vweird.f32 %v35
  %v41 = vsel %vm40, %v35, %v39
  %v42 = vmul.f32 %v31, %v41
  %v43 = vmul.f32 %v34, %v41
  %v44 = vsub.f32 %v26, %v42
  %v45 = vsub.f32 %v27, %v43
  %v46 = vmul.f32 %v44, %v44
  %v47 = vmul.f32 %v45, %v45
  %v48 = vsel %vm28, %v46, 0.0
  %49 = vadd.xlane.f32.xlu0 %v48
  %v50 = vpop.xlane.xlu0 %49
  %v51 = vsel %vm28, %v47, 0.0
  %52 = vadd.xlane.f32.xlu0 %v51
  %v53 = vpop.xlane.xlu0 %52
  %v54 = vmul.f32 %v50, %v41
  %v55 = vmul.f32 %v53, %v41
  %v56 = vadd.f32 %v54, 1e-05
  %v57 = vadd.f32 %v55, 1e-05
  %v58 = vrsqrt.pop %v56
  %v59 = vmul.f32 %v58, %v56
  %v60 = vmul.f32 %v59, %v58
  %v61 = vmul.f32 0.5, %v60
  %v62 = vsub.f32 1.5, %v61
  %v63 = vmul.f32 %v58, %v62
  %vm64 = vweird.f32 %v56
  %vm65 = vweird.f32 %v58
  %vm66 = vmor %vm64, %vm65
  %v67 = vsel %vm66, %v58, %v63
  %v68 = vrsqrt.pop %v57
  %v69 = vmul.f32 %v68, %v57
  %v70 = vmul.f32 %v69, %v68
  %v71 = vmul.f32 0.5, %v70
  %v72 = vsub.f32 1.5, %v71
  %v73 = vmul.f32 %v68, %v72
  %vm74 = vweird.f32 %v57
  %vm75 = vweird.f32 %v68
  %vm76 = vmor %vm74, %vm75
  %v77 = vsel %vm76, %v68, %v73
  %v78 = vmul.f32 %v44, %v67
  %v79 = vmul.f32 %v45, %v77
  %v80 = vld [vmem:[%s1] sm:$0x1]
  %v82 = vperm.slane %v80, 0
  %v84 = vmul.f32 %v78, %v82
  %v85 = vmul.f32 %v79, %v82
  %v86 = vld [vmem:[%s2] sm:$0x1]
  %v88 = vperm.slane %v86, 0
  %v90 = vadd.f32 %v84, %v88
  %v91 = vadd.f32 %v85, %v88
  %v92 = vpack.c.bf16 %v91, %v90
  %v93 = vld [vmem:[%s3] sm:$0xf]
  %v94 = vld [vmem:[%s3 + $0x4] sm:$0xf]
  %v95 = vld [vmem:[%s3 + $0x8] sm:$0xf]
  %v96 = vld [vmem:[%s3 + $0xc] sm:$0xf]
  %v101 = vunpack.c.l.b16 %v93
  %v102 = vunpack.c.l.b16 %v94
  %v103 = vunpack.c.l.b16 %v95
  %v104 = vunpack.c.l.b16 %v96
  %v105 = vpack.c.b16 %v102, %v101
  %v106 = vpack.c.b16 %v104, %v103
  %v110 = vsel %vm28, %v92, 0
  %112 = vmatpush.bf16.msra.mxu0 0
  %113 = vmatpush.bf16.msra.mxu0 0
  %114 = vmatpush.bf16.msra.mxu0 0
  %115 = vmatpush.bf16.msra.mxu0 0
  %116 = vmatpush.bf16.msra.mxu0 0
  %117 = vmatpush.bf16.msra.mxu0 0
  %118 = vmatpush.bf16.msra.mxu0 %v106
  %119 = vmatpush.bf16.msra.mxu0 %v105
  %120 = vmatmul.bf16.gmra.mxu0 %v110
  %v121 = vpop.f32.mrf.mxu0
  %v122 = vadd.f32 0.0, %v121
  %v123 = vpop.f32.mrf.mxu0
  %v124 = vadd.f32 0.0, %v123
  %125 = vdwg.mxu0
  %v126 = vld [vmem:[%s4] sm:$0x1]
  %v128 = vperm.slane %v126, 0
  %v130 = vmul.f32 %v122, %v128
  %v131 = vmul.f32 %v124, %v128
  %v132 = vld [vmem:[%s5] sm:$0x1]
  %v134 = vperm.slane %v132, 0
  %v136 = vadd.f32 %v130, %v134
  %v137 = vadd.f32 %v131, %v134
  %v138 = vpack.c.bf16 %v136, %v136
  %v139 = vpack.c.bf16 %v137, %v137
  %vm140 = vcmask 257024
  %141 = vst.msk [vmem:[%s6] sm:$0xf] %vm140, %v138
  %142 = vst.msk [vmem:[%s6 + $0x4] sm:$0xf] %vm140, %v139
  // Predicated region
  $region26: #{wait_k_transformer_train_forward.29} parent=0 // pred_check
    _
  $region27: #{wait_k_transformer_train_forward.29} parent=0 // pred_check_branch
    %144 = sbr.rel (0) target = $region29
  $region28: #{wait_k_transformer_train_forward.29} parent=0 // pred_region
    _
  $region29: #{wait_k_transformer_train_forward.29} parent=0 // pred_fallthru
    _
  // Predicated region
  $region30: #{wait_k_transformer_train_forward.29} parent=0 // pred_check
    _
  $region31: #{wait_k_transformer_train_forward.29} parent=0 // pred_check_branch
    %146 = sbr.rel (0) target = $region33
  $region32: #{wait_k_transformer_train_forward.29} parent=0 // pred_region
    _
  $region33: #{wait_k_transformer_train_forward.29} parent=0 // pred_fallthru
    _

// kernel: wait_k_transformer_train_forward.26
$region0: #{wait_k_transformer_train_forward.26}
  #allocation0 [shape = 'u32[]', space=smem, size = 0x4, offset = 0x4, fixed_abs, tag = 'smem constant byte address 0x4 - core index']
  #allocation1 [shape = 'u32[72,128]{1,0:T(1,128)}', space=vmem, size = 0x9000, scoped, tag = 'internal scratch']
  %s0 = inlined_call_operand.vmem [shape: bf16[16,32], index: 0, kind: input, shape index: {}]
  %s1 = inlined_call_operand.vmem [shape: f32[1,32], index: 1, kind: input, shape index: {}]
  %s2 = inlined_call_operand.vmem [shape: f32[1,32], index: 2, kind: input, shape index: {}]
  %s3 = inlined_call_operand.vmem [shape: bf16[16,32], index: 3, kind: output, shape index: {}]
  %s4 = sld [smem:[#allocation0]]
  $region22: #{wait_k_transformer_train_forward.26} parent=0
    _
  %s6 = ssub.s32 1, %s4
  %s7 = scalar_select 0, %s6, %s4
  // Predicated region
  $region2: #{wait_k_transformer_train_forward.26} parent=0 // pred_check
    _
  $region3: #{wait_k_transformer_train_forward.26} parent=0 // pred_check_branch
    %9 = sbr.rel (0) target = $region5
  $region4: #{wait_k_transformer_train_forward.26} parent=0 // pred_region
    _
  $region5: #{wait_k_transformer_train_forward.26} parent=0 // pred_fallthru
    _
  // Predicated region
  $region6: #{wait_k_transformer_train_forward.26} parent=0 // pred_check
    _
  $region7: #{wait_k_transformer_train_forward.26} parent=0 // pred_check_branch
    %11 = sbr.rel (0) target = $region9
  $region8: #{wait_k_transformer_train_forward.26} parent=0 // pred_region
    _
  $region9: #{wait_k_transformer_train_forward.26} parent=0 // pred_fallthru
    _
  // Predicated region
  $region10: #{wait_k_transformer_train_forward.26} parent=0 // pred_check
    _
  $region11: #{wait_k_transformer_train_forward.26} parent=0 // pred_check_branch
    %13 = sbr.rel (0) target = $region13
  $region12: #{wait_k_transformer_train_forward.26} parent=0 // pred_region
    _
  $region13: #{wait_k_transformer_train_forward.26} parent=0 // pred_fallthru
    _
  %v14 = vld [vmem:[%s0] sm:$0xf]
  %v15 = vld [vmem:[%s0 + $0x4] sm:$0xf]
  %v16 = vunpack.c.l.bf16 %v14
  %v17 = vunpack.c.l.bf16 %v15
  %vm18 = vcmask 261120
  %v19 = vsel %vm18, %v16, 0.0
  %20 = vadd.xlane.f32.xlu0 %v19
  %v21 = vpop.xlane.xlu0 %20
  %v22 = vsel %vm18, %v17, 0.0
  %23 = vadd.xlane.f32.xlu0 %v22
  %v24 = vpop.xlane.xlu0 %23
  %v25 = vrcp.pop 32.0
  %v26 = vmul.f32 32.0, %v25
  %v27 = vsub.f32 1.0, %v26
  %v28 = vmul.f32 %v25, %v27
  %v29 = vadd.f32 %v25, %v28
  %vm30 = vweird.f32 %v25
  %v31 = vsel %vm30, %v25, %v29
  %v32 = vmul.f32 %v21, %v31
  %v33 = vmul.f32 %v24, %v31
  %v34 = vsub.f32 %v16, %v32
  %v35 = vsub.f32 %v17, %v33
  %v36 = vmul.f32 %v34, %v34
  %v37 = vmul.f32 %v35, %v35
  %v38 = vsel %vm18, %v36, 0.0
  %39 = vadd.xlane.f32.xlu0 %v38
  %v40 = vpop.xlane.xlu0 %39
  %v41 = vsel %vm18, %v37, 0.0
  %42 = vadd.xlane.f32.xlu0 %v41
  %v43 = vpop.xlane.xlu0 %42
  %v44 = vmul.f32 %v40, %v31
  %v45 = vmul.f32 %v43, %v31
  %v46 = vadd.f32 %v44, 1e-05
  %v47 = vadd.f32 %v45, 1e-05
  %v48 = vrsqrt.pop %v46
  %v49 = vmul.f32 %v48, %v46
  %v50 = vmul.f32 %v49, %v48
  %v51 = vmul.f32 0.5, %v50
  %v52 = vsub.f32 1.5, %v51
  %v53 = vmul.f32 %v48, %v52
  %vm54 = vweird.f32 %v46
  %vm55 = vweird.f32 %v48
  %vm56 = vmor %vm54, %vm55
  %v57 = vsel %vm56, %v48, %v53
  %v58 = vrsqrt.pop %v47
  %v59 = vmul.f32 %v58, %v47
  %v60 = vmul.f32 %v59, %v58
  %v61 = vmul.f32 0.5, %v60
  %v62 = vsub.f32 1.5, %v61
  %v63 = vmul.f32 %v58, %v62
  %vm64 = vweird.f32 %v47
  %vm65 = vweird.f32 %v58
  %vm66 = vmor %vm64, %vm65
  %v67 = vsel %vm66, %v58, %v63
  %v68 = vmul.f32 %v34, %v57
  %v69 = vmul.f32 %v35, %v67
  %v70 = vld [vmem:[%s1] sm:$0x1]
  %v72 = vperm.slane %v70, 0
  %v74 = vmul.f32 %v68, %v72
  %v75 = vmul.f32 %v69, %v72
  %v76 = vld [vmem:[%s2] sm:$0x1]
  %v78 = vperm.slane %v76, 0
  %v80 = vadd.f32 %v74, %v78
  %v81 = vadd.f32 %v75, %v78
  %v82 = vpack.c.bf16 %v80, %v80
  %v83 = vpack.c.bf16 %v81, %v81
  %vm84 = vcmask 257024
  %85 = vst.msk [vmem:[%s3] sm:$0xf] %vm84, %v82
  %86 = vst.msk [vmem:[%s3 + $0x4] sm:$0xf] %vm84, %v83
  // Predicated region
  $region14: #{wait_k_transformer_train_forward.26} parent=0 // pred_check
    _
  $region15: #{wait_k_transformer_train_forward.26} parent=0 // pred_check_branch
    %88 = sbr.rel (0) target = $region17
  $region16: #{wait_k_transformer_train_forward.26} parent=0 // pred_region
    _
  $region17: #{wait_k_transformer_train_forward.26} parent=0 // pred_fallthru
    _
  // Predicated region
  $region18: #{wait_k_transformer_train_forward.26} parent=0 // pred_check
    _
  $region19: #{wait_k_transformer_train_forward.26} parent=0 // pred_check_branch
    %90 = sbr.rel (0) target = $region21
  $region20: #{wait_k_transformer_train_forward.26} parent=0 // pred_region
    _
  $region21: #{wait_k_transformer_train_forward.26} parent=0 // pred_fallthru
    _

// kernel: wait_k_transformer_train_forward.22
$region0: #{wait_k_transformer_train_forward.22}
  #allocation0 [shape = 'u32[]', space=smem, size = 0x4, offset = 0x4, fixed_abs, tag = 'smem constant byte address 0x4 - core index']
  #allocation1 [shape = 'u32[72,128]{1,0:T(1,128)}', space=vmem, size = 0x9000, scoped, tag = 'internal scratch']
  %s0 = inlined_call_operand.vmem [shape: bf16[16,32], index: 0, kind: input, shape index: {}]
  %s1 = inlined_call_operand.vmem [shape: f32[1,32], index: 1, kind: input, shape index: {}]
  %s2 = inlined_call_operand.vmem [shape: f32[1,32], index: 2, kind: input, shape index: {}]
  %s3 = inlined_call_operand.vmem [shape: bf16[32,64], index: 3, kind: input, shape index: {}]
  %s4 = inlined_call_operand.vmem [shape: f32[1,64], index: 4, kind: input, shape index: {}]
  %s5 = inlined_call_operand.vmem [shape: bf16[64,32], index: 5, kind: input, shape index: {}]
  %s6 = inlined_call_operand.vmem [shape: f32[1,32], index: 6, kind: input, shape index: {}]
  %s7 = inlined_call_operand.vmem [shape: bf16[16,32], index: 7, kind: output, shape index: {}]
  %s8 = sld [smem:[#allocation0]]
  $region38: #{wait_k_transformer_train_forward.22} parent=0
    _
  %s10 = ssub.s32 1, %s8
  %s11 = scalar_select 0, %s10, %s8
  // Predicated region
  $region2: #{wait_k_transformer_train_forward.22} parent=0 // pred_check
    _
  $region3: #{wait_k_transformer_train_forward.22} parent=0 // pred_check_branch
    %13 = sbr.rel (0) target = $region5
  $region4: #{wait_k_transformer_train_forward.22} parent=0 // pred_region
    _
  $region5: #{wait_k_transformer_train_forward.22} parent=0 // pred_fallthru
    _
  // Predicated region
  $region6: #{wait_k_transformer_train_forward.22} parent=0 // pred_check
    _
  $region7: #{wait_k_transformer_train_forward.22} parent=0 // pred_check_branch
    %15 = sbr.rel (0) target = $region9
  $region8: #{wait_k_transformer_train_forward.22} parent=0 // pred_region
    _
  $region9: #{wait_k_transformer_train_forward.22} parent=0 // pred_fallthru
    _
  // Predicated region
  $region10: #{wait_k_transformer_train_forward.22} parent=0 // pred_check
    _
  $region11: #{wait_k_transformer_train_forward.22} parent=0 // pred_check_branch
    %17 = sbr.rel (0) target = $region13
  $region12: #{wait_k_transformer_train_forward.22} parent=0 // pred_region
    _
  $region13: #{wait_k_transformer_train_forward.22} parent=0 // pred_fallthru
    _
  // Predicated region
  $region14: #{wait_k_transformer_train_forward.22} parent=0 // pred_check
    _
  $region15: #{wait_k_transformer_train_forward.22} parent=0 // pred_check_branch
    %19 = sbr.rel (0) target = $region17
  $region16: #{wait_k_transformer_train_forward.22} parent=0 // pred_region
    _
  $region17: #{wait_k_transformer_train_forward.22} parent=0 // pred_fallthru
    _
  // Predicated region
  $region18: #{wait_k_transformer_train_forward.22} parent=0 // pred_check
    _
  $region19: #{wait_k_transformer_train_forward.22} parent=0 // pred_check_branch
    %21 = sbr.rel (0) target = $region21
  $region20: #{wait_k_transformer_train_forward.22} parent=0 // pred_region
    _
  $region21: #{wait_k_transformer_train_forward.22} parent=0 // pred_fallthru
    _
  // Predicated region
  $region22: #{wait_k_transformer_train_forward.22} parent=0 // pred_check
    _
  $region23: #{wait_k_transformer_train_forward.22} parent=0 // pred_check_branch
    %23 = sbr.rel (0) target = $region25
  $region24: #{wait_k_transformer_train_forward.22} parent=0 // pred_region
    _
  $region25: #{wait_k_transformer_train_forward.22} parent=0 // pred_fallthru
    _
  // Predicated region
  $region26: #{wait_k_transformer_train_forward.22} parent=0 // pred_check
    _
  $region27: #{wait_k_transformer_train_forward.22} parent=0 // pred_check_branch
    %25 = sbr.rel (0) target = $region29
  $region28: #{wait_k_transformer_train_forward.22} parent=0 // pred_region
    _
  $region29: #{wait_k_transformer_train_forward.22} parent=0 // pred_fallthru
    _
  %v27 = vld [vmem:[%s0] sm:$0xf]
  %v28 = vld [vmem:[%s0 + $0x4] sm:$0xf]
  %v29 = vunpack.c.l.bf16 %v27
  %v30 = vunpack.c.l.bf16 %v28
  %vm31 = vcmask 261120
  %v32 = vsel %vm31, %v29, 0.0
  %33 = vadd.xlane.f32.xlu0 %v32
  %v34 = vpop.xlane.xlu0 %33
  %v35 = vsel %vm31, %v30, 0.0
  %36 = vadd.xlane.f32.xlu0 %v35
  %v37 = vpop.xlane.xlu0 %36
  %v38 = vrcp.pop 32.0
  %v39 = vmul.f32 32.0, %v38
  %v40 = vsub.f32 1.0, %v39
  %v41 = vmul.f32 %v38, %v40
  %v42 = vadd.f32 %v38, %v41
  %vm43 = vweird.f32 %v38
  %v44 = vsel %vm43, %v38, %v42
  %v45 = vmul.f32 %v34, %v44
  %v46 = vmul.f32 %v37, %v44
  %v47 = vsub.f32 %v29, %v45
  %v48 = vsub.f32 %v30, %v46
  %v49 = vmul.f32 %v47, %v47
  %v50 = vmul.f32 %v48, %v48
  %v51 = vsel %vm31, %v49, 0.0
  %52 = vadd.xlane.f32.xlu0 %v51
  %v53 = vpop.xlane.xlu0 %52
  %v54 = vsel %vm31, %v50, 0.0
  %55 = vadd.xlane.f32.xlu0 %v54
  %v56 = vpop.xlane.xlu0 %55
  %v57 = vmul.f32 %v53, %v44
  %v58 = vmul.f32 %v56, %v44
  %v59 = vadd.f32 %v57, 1e-05
  %v60 = vadd.f32 %v58, 1e-05
  %v61 = vrsqrt.pop %v59
  %v62 = vmul.f32 %v61, %v59
  %v63 = vmul.f32 %v62, %v61
  %v64 = vmul.f32 0.5, %v63
  %v65 = vsub.f32 1.5, %v64
  %v66 = vmul.f32 %v61, %v65
  %vm67 = vweird.f32 %v59
  %vm68 = vweird.f32 %v61
  %vm69 = vmor %vm67, %vm68
  %v70 = vsel %vm69, %v61, %v66
  %v71 = vrsqrt.pop %v60
  %v72 = vmul.f32 %v71, %v60
  %v73 = vmul.f32 %v72, %v71
  %v74 = vmul.f32 0.5, %v73
  %v75 = vsub.f32 1.5, %v74
  %v76 = vmul.f32 %v71, %v75
  %vm77 = vweird.f32 %v60
  %vm78 = vweird.f32 %v71
  %vm79 = vmor %vm77, %vm78
  %v80 = vsel %vm79, %v71, %v76
  %v81 = vmul.f32 %v47, %v70
  %v82 = vmul.f32 %v48, %v80
  %v83 = vld [vmem:[%s1] sm:$0x1]
  %v85 = vperm.slane %v83, 0
  %v87 = vmul.f32 %v81, %v85
  %v88 = vmul.f32 %v82, %v85
  %v89 = vld [vmem:[%s2] sm:$0x1]
  %v91 = vperm.slane %v89, 0
  %v93 = vadd.f32 %v87, %v91
  %v94 = vadd.f32 %v88, %v91
  %v95 = vpack.c.bf16 %v94, %v93
  %v96 = vld [vmem:[%s3] sm:$0xf]
  %v97 = vld [vmem:[%s3 + $0x4] sm:$0xf]
  %v98 = vld [vmem:[%s3 + $0x8] sm:$0xf]
  %v99 = vld [vmem:[%s3 + $0xc] sm:$0xf]
  %v100 = vld [vmem:[%s4] sm:$0x1]
  %v102 = vperm.slane %v100, 0
  %v108 = vunpack.c.l.b16 %v96
  %v109 = vunpack.c.l.b16 %v97
  %v110 = vunpack.c.l.b16 %v98
  %v111 = vunpack.c.l.b16 %v99
  %v112 = vpack.c.b16 %v109, %v108
  %v113 = vpack.c.b16 %v111, %v110
  %v117 = vsel %vm31, %v95, 0
  %119 = vmatpush.bf16.msra.mxu0 0
  %120 = vmatpush.bf16.msra.mxu0 0
  %121 = vmatpush.bf16.msra.mxu0 0
  %122 = vmatpush.bf16.msra.mxu0 0
  %123 = vmatpush.bf16.msra.mxu0 0
  %124 = vmatpush.bf16.msra.mxu0 0
  %125 = vmatpush.bf16.msra.mxu0 %v113
  %126 = vmatpush.bf16.msra.mxu0 %v112
  %127 = vmatmul.bf16.gmra.mxu0 %v117
  %v128 = vpop.f32.mrf.mxu0
  %v129 = vadd.f32 %v102, %v128
  %v130 = vpop.f32.mrf.mxu0
  %v131 = vadd.f32 %v102, %v130
  %132 = vdwg.mxu0
  %v133 = vmax.f32 %v129, 0.0
  %v134 = vmax.f32 %v131, 0.0
  %v135 = vpack.c.bf16 %v134, %v133
  %v136 = vld [vmem:[%s5] sm:$0xf]
  %v137 = vld [vmem:[%s5 + $0x4] sm:$0xf]
  %v138 = vld [vmem:[%s5 + $0x8] sm:$0xf]
  %v139 = vld [vmem:[%s5 + $0xc] sm:$0xf]
  %v140 = vld [vmem:[%s5 + $0x10] sm:$0xf]
  %v141 = vld [vmem:[%s5 + $0x14] sm:$0xf]
  %v142 = vld [vmem:[%s5 + $0x18] sm:$0xf]
  %v143 = vld [vmem:[%s5 + $0x1c] sm:$0xf]
  %v144 = vld [vmem:[%s6] sm:$0x1]
  %v146 = vperm.slane %v144, 0
  %v156 = vunpack.c.l.b16 %v136
  %v157 = vunpack.c.l.b16 %v137
  %v158 = vunpack.c.l.b16 %v138
  %v159 = vunpack.c.l.b16 %v139
  %v160 = vunpack.c.l.b16 %v140
  %v161 = vunpack.c.l.b16 %v141
  %v162 = vunpack.c.l.b16 %v142
  %v163 = vunpack.c.l.b16 %v143
  %v164 = vpack.c.b16 %v157, %v156
  %v165 = vpack.c.b16 %v159, %v158
  %v166 = vpack.c.b16 %v161, %v160
  %v167 = vpack.c.b16 %v163, %v162
  %vm172 = vcmask 523264
  %v174 = vsel %vm172, %v135, 0
  %176 = vmatpush.bf16.msra.mxu0 0
  %177 = vmatpush.bf16.msra.mxu0 0
  %178 = vmatpush.bf16.msra.mxu0 0
  %179 = vmatpush.bf16.msra.mxu0 0
  %180 = vmatpush.bf16.msra.mxu0 %v167
  %181 = vmatpush.bf16.msra.mxu0 %v166
  %182 = vmatpush.bf16.msra.mxu0 %v165
  %183 = vmatpush.bf16.msra.mxu0 %v164
  %184 = vmatmul.bf16.gmra.mxu0 %v174
  %v185 = vpop.f32.mrf.mxu0
  %v186 = vadd.f32 %v146, %v185
  %v187 = vpop.f32.mrf.mxu0
  %v188 = vadd.f32 %v146, %v187
  %189 = vdwg.mxu0
  %v190 = vadd.f32 %v29, %v186
  %v191 = vadd.f32 %v30, %v188
  %v192 = vpack.c.bf16 %v190, %v190
  %v193 = vpack.c.bf16 %v191, %v191
  %vm194 = vcmask 257024
  %195 = vst.msk [vmem:[%s7] sm:$0xf] %vm194, %v192
  %196 = vst.msk [vmem:[%s7 + $0x4] sm:$0xf] %vm194, %v193
  // Predicated region
  $region30: #{wait_k_transformer_train_forward.22} parent=0 // pred_check
    _
  $region31: #{wait_k_transformer_train_forward.22} parent=0 // pred_check_branch
    %198 = sbr.rel (0) target = $region33
  $region32: #{wait_k_transformer_train_forward.22} parent=0 // pred_region
    _
  $region33: #{wait_k_transformer_train_forward.22} parent=0 // pred_fallthru
    _
  // Predicated region
  $region34: #{wait_k_transformer_train_forward.22} parent=0 // pred_check
    _
  $region35: #{wait_k_transformer_train_forward.22} parent=0 // pred_check_branch
    %200 = sbr.rel (0) target = $region37
  $region36: #{wait_k_transformer_train_forward.22} parent=0 // pred_region
    _
  $region37: #{wait_k_transformer_train_forward.22} parent=0 // pred_fallthru
    _

// kernel: wait_k_transformer_train_forward.30
$region0: #{wait_k_transformer_train_forward.30}
  #allocation0 [shape = 'u32[]', space=smem, size = 0x4, offset = 0x4, fixed_abs, tag = 'smem constant byte address 0x4 - core index']
  #allocation1 [shape = 'u32[72,128]{1,0:T(1,128)}', space=vmem, size = 0x9000, scoped, tag = 'internal scratch']
  %s0 = inlined_call_operand.vmem [shape: bf16[16,32], index: 0, kind: input, shape index: {}]
  %s1 = inlined_call_operand.vmem [shape: bf16[32,64], index: 1, kind: input, shape index: {}]
  %s2 = inlined_call_operand.vmem [shape: f32[1,64], index: 2, kind: input, shape index: {}]
  %s3 = inlined_call_operand.vmem [shape: bf16[16,64], index: 3, kind: output, shape index: {}]
  %s4 = sld [smem:[#allocation0]]
  $region22: #{wait_k_transformer_train_forward.30} parent=0
    _
  %s6 = ssub.s32 1, %s4
  %s7 = scalar_select 0, %s6, %s4
  // Predicated region
  $region2: #{wait_k_transformer_train_forward.30} parent=0 // pred_check
    _
  $region3: #{wait_k_transformer_train_forward.30} parent=0 // pred_check_branch
    %9 = sbr.rel (0) target = $region5
  $region4: #{wait_k_transformer_train_forward.30} parent=0 // pred_region
    _
  $region5: #{wait_k_transformer_train_forward.30} parent=0 // pred_fallthru
    _
  // Predicated region
  $region6: #{wait_k_transformer_train_forward.30} parent=0 // pred_check
    _
  $region7: #{wait_k_transformer_train_forward.30} parent=0 // pred_check_branch
    %11 = sbr.rel (0) target = $region9
  $region8: #{wait_k_transformer_train_forward.30} parent=0 // pred_region
    _
  $region9: #{wait_k_transformer_train_forward.30} parent=0 // pred_fallthru
    _
  // Predicated region
  $region10: #{wait_k_transformer_train_forward.30} parent=0 // pred_check
    _
  $region11: #{wait_k_transformer_train_forward.30} parent=0 // pred_check_branch
    %13 = sbr.rel (0) target = $region13
  $region12: #{wait_k_transformer_train_forward.30} parent=0 // pred_region
    _
  $region13: #{wait_k_transformer_train_forward.30} parent=0 // pred_fallthru
    _
  %v15 = vld [vmem:[%s0] sm:$0xf]
  %v16 = vld [vmem:[%s0 + $0x4] sm:$0xf]
  %v17 = vld [vmem:[%s1] sm:$0xf]
  %v18 = vld [vmem:[%s1 + $0x4] sm:$0xf]
  %v19 = vld [vmem:[%s1 + $0x8] sm:$0xf]
  %v20 = vld [vmem:[%s1 + $0xc] sm:$0xf]
  %v21 = vld [vmem:[%s2] sm:$0x1]
  %v23 = vperm.slane %v21, 0
  %v27 = vunpack.c.l.b16 %v15
  %v28 = vunpack.c.l.b16 %v16
  %v29 = vpack.c.b16 %v28, %v27
  %v34 = vunpack.c.l.b16 %v17
  %v35 = vunpack.c.l.b16 %v18
  %v36 = vunpack.c.l.b16 %v19
  %v37 = vunpack.c.l.b16 %v20
  %v38 = vpack.c.b16 %v35, %v34
  %v39 = vpack.c.b16 %v37, %v36
  %vm42 = vcmask 261120
  %v44 = vsel %vm42, %v29, 0
  %46 = vmatpush.bf16.msra.mxu0 0
  %47 = vmatpush.bf16.msra.mxu0 0
  %48 = vmatpush.bf16.msra.mxu0 0
  %49 = vmatpush.bf16.msra.mxu0 0
  %50 = vmatpush.bf16.msra.mxu0 0
  %51 = vmatpush.bf16.msra.mxu0 0
  %52 = vmatpush.bf16.msra.mxu0 %v39
  %53 = vmatpush.bf16.msra.mxu0 %v38
  %54 = vmatmul.bf16.gmra.mxu0 %v44
  %v55 = vpop.f32.mrf.mxu0
  %v56 = vadd.f32 %v23, %v55
  %v57 = vpop.f32.mrf.mxu0
  %v58 = vadd.f32 %v23, %v57
  %59 = vdwg.mxu0
  %v60 = vpack.c.bf16 %v56, %v56
  %v61 = vpack.c.bf16 %v58, %v58
  %vm62 = vcmask 519168
  %63 = vst.msk [vmem:[%s3] sm:$0xf] %vm62, %v60
  %64 = vst.msk [vmem:[%s3 + $0x4] sm:$0xf] %vm62, %v61
  // Predicated region
  $region14: #{wait_k_transformer_train_forward.30} parent=0 // pred_check
    _
  $region15: #{wait_k_transformer_train_forward.30} parent=0 // pred_check_branch
    %66 = sbr.rel (0) target = $region17
  $region16: #{wait_k_transformer_train_forward.30} parent=0 // pred_region
    _
  $region17: #{wait_k_transformer_train_forward.30} parent=0 // pred_fallthru
    _
  // Predicated region
  $region18: #{wait_k_transformer_train_forward.30} parent=0 // pred_check
    _
  $region19: #{wait_k_transformer_train_forward.30} parent=0 // pred_check_branch
    %68 = sbr.rel (0) target = $region21
  $region20: #{wait_k_transformer_train_forward.30} parent=0 // pred_region
    _
  $region21: #{wait_k_transformer_train_forward.30} parent=0 // pred_fallthru
    _

// kernel: wait_k_transformer_train_forward.31
$region0: #{wait_k_transformer_train_forward.31}
  #allocation0 [shape = 'u32[]', space=smem, size = 0x4, offset = 0x4, fixed_abs, tag = 'smem constant byte address 0x4 - core index']
  #allocation1 [shape = 'u32[72,128]{1,0:T(1,128)}', space=vmem, size = 0x9000, scoped, tag = 'internal scratch']
  #allocation2 [shape = 's32[1]{0}', space=sflag, size = 0x4, scoped, tag = 'scoped memory for wait_k_transformer_train_forward.31']
  #allocation3 [shape = 'u8[512]{0}', space=smem, size = 0x200, scoped, tag = 'prefetched SMEM operand 0']
  %s0 = inlined_call_operand.vmem [shape: s32[2], index: 0, kind: input, shape index: {}]
  %s1 = inlined_call_operand.vmem [shape: bf16[2,4,8,8], index: 1, kind: input, shape index: {}]
  %s2 = inlined_call_operand.vmem [shape: bf16[2,4,8,8], index: 2, kind: input, shape index: {}]
  %s3 = inlined_call_operand.vmem [shape: bf16[2,4,8,8], index: 3, kind: input, shape index: {}]
  %s4 = inlined_call_operand.vmem [shape: bf16[32,32], index: 4, kind: input, shape index: {}]
  %s5 = inlined_call_operand.vmem [shape: f32[1,32], index: 5, kind: input, shape index: {}]
  %s6 = inlined_call_operand.vmem [shape: bf16[2,8,32], index: 6, kind: input, shape index: {}]
  %s7 = inlined_call_operand.vmem [shape: bf16[2,8,32], index: 7, kind: output, shape index: {}]
  %s8 = sld [smem:[#allocation0]]
  $region57: #{wait_k_transformer_train_forward.31} parent=0
    _
  %s10 = ssub.s32 1, %s8
  %s11 = scalar_select 0, %s10, %s8
  %s13 = sshll.u32 %s0, 4
  %s14 = int_to_ptr.vmem [resolvable:$true] %s13
  %16 = dma.vmem_to_smem %s14, 16, [#allocation3], [#allocation2]
  %18 = dma.done [#allocation2], 16
  %19 = sfence
  loop: start=0, step=1, limit=4
  $region2: #{wait_k_transformer_train_forward.31} parent=0 // loop_pre_header
    _
  $region3: #{wait_k_transformer_train_forward.31} parent=0 // loop_header
    %s21 = sphi 0, %s25
    %p22 = scmp.ge.s32.totalorder %s21, 4
    %s28 = sphi 0, %s40
    %s29 = sphi 0, %s36
    %s30 = sphi 0, %s28
    %s31 = sphi 0, %s29
    %s32 = sphi 0, %s30
    %s33 = sphi 0, %s31
    %s45 = sphi 0, %s47
    %s48 = sphi 0, %s45
    %s49 = sphi 0, %s48
    %s65 = sphi 0, %s49
    %s71 = sphi 0, %s73
    %s74 = sphi 0, %s71
    %s75 = sphi 0, %s74
    %s91 = sphi 0, %s75
    %s97 = sphi 0, %s99
    %s100 = sphi 0, %s97
    %s101 = sphi 0, %s100
    %s117 = sphi 0, %s101
    %s121 = sphi 0, %s121
    %s123 = sphi 0, %s121
    %s124 = sphi 0, %s123
    %s138 = sphi 0, %s124
    %s142 = sphi 0, %s142
    %s144 = sphi 0, %s142
    %s145 = sphi 0, %s144
    %s159 = sphi 0, %s145
    %s167 = sphi 0, %s169
    %s170 = sphi 0, %s167
    %s171 = sphi 0, %s170
    %s187 = sphi 0, %s171
    %s195 = sphi 0, %s197
    %s198 = sphi 0, %s195
    %s199 = sphi 0, %s198
    %s215 = sphi 0, %s199
  $region4: #{wait_k_transformer_train_forward.31} parent=0 // loop_header_branch
    %24 = sbr.rel (%p22) target = $region8
  $region5: #{wait_k_transformer_train_forward.31} parent=0 // loop_body
    %s26 = ssub.s32 %s21, 1
    %s27 = ssub.s32 %s21, 2
    %s34 = sadd.s32 1, %s29
    %p35 = scmp.ge.s32.totalorder %s34, 1
    %s36 = scalar_select %p35, 0, %s34
    %s37 = sadd.s32 1, %s28
    %s38 = scalar_select %p35, %s37, %s28
    %p39 = scmp.ge.s32.totalorder %s38, 2
    %s40 = scalar_select %p39, 0, %s38
    %s41 = ssub.s32 %s28, %s40
    %s42 = ssub.s32 %s29, %s36
    %s43 = sor.u32 %s41, %s42
    %p44 = scmp.eq.s32.totalorder %s43, 0
    %s46 = sadd.s32 %s45, 1
    %s47 = scalar_select %p44, %s45, %s46
    %p50 = pneg %p44
    %p51 = scmp.eq.s32.totalorder %s21, 1
    %p52 = por %p50, %p51
    %p53 = scmp.ne.s32.totalorder %s45, %s48
    %p54 = scmp.eq.s32.totalorder %s21, 0
    %p55 = por %p53, %p54
    %p56 = scmp.ne.s32.totalorder %s45, %s48
    %p57 = scmp.eq.s32.totalorder %s26, 1
    %p58 = por %p56, %p57
    %p59 = scmp.ne.s32.totalorder %s48, %s49
    %p60 = scmp.eq.s32.totalorder %s26, 0
    %p61 = por %p59, %p60
    %p62 = scmp.ne.s32.totalorder %s48, %s49
    %p63 = scmp.eq.s32.totalorder %s27, 1
    %p64 = por %p62, %p63
    %p66 = scmp.ne.s32.totalorder %s49, %s65
    %p67 = scmp.eq.s32.totalorder %s27, 0
    %p68 = por %p66, %p67
    %s69 = ssub.s32 %s28, %s40
    %p70 = scmp.eq.s32.totalorder %s69, 0
    %s72 = sadd.s32 %s71, 1
    %s73 = scalar_select %p70, %s71, %s72
    %p76 = pneg %p70
    %p77 = scmp.eq.s32.totalorder %s21, 1
    %p78 = por %p76, %p77
    %p79 = scmp.ne.s32.totalorder %s71, %s74
    %p80 = scmp.eq.s32.totalorder %s21, 0
    %p81 = por %p79, %p80
    %p82 = scmp.ne.s32.totalorder %s71, %s74
    %p83 = scmp.eq.s32.totalorder %s26, 1
    %p84 = por %p82, %p83
    %p85 = scmp.ne.s32.totalorder %s74, %s75
    %p86 = scmp.eq.s32.totalorder %s26, 0
    %p87 = por %p85, %p86
    %p88 = scmp.ne.s32.totalorder %s74, %s75
    %p89 = scmp.eq.s32.totalorder %s27, 1
    %p90 = por %p88, %p89
    %p92 = scmp.ne.s32.totalorder %s75, %s91
    %p93 = scmp.eq.s32.totalorder %s27, 0
    %p94 = por %p92, %p93
    %s95 = ssub.s32 %s28, %s40
    %p96 = scmp.eq.s32.totalorder %s95, 0
    %s98 = sadd.s32 %s97, 1
    %s99 = scalar_select %p96, %s97, %s98
    %p102 = pneg %p96
    %p103 = scmp.eq.s32.totalorder %s21, 1
    %p104 = por %p102, %p103
    %p105 = scmp.ne.s32.totalorder %s97, %s100
    %p106 = scmp.eq.s32.totalorder %s21, 0
    %p107 = por %p105, %p106
    %p108 = scmp.ne.s32.totalorder %s97, %s100
    %p109 = scmp.eq.s32.totalorder %s26, 1
    %p110 = por %p108, %p109
    %p111 = scmp.ne.s32.totalorder %s100, %s101
    %p112 = scmp.eq.s32.totalorder %s26, 0
    %p113 = por %p111, %p112
    %p114 = scmp.ne.s32.totalorder %s100, %s101
    %p115 = scmp.eq.s32.totalorder %s27, 1
    %p116 = por %p114, %p115
    %p118 = scmp.ne.s32.totalorder %s101, %s117
    %p119 = scmp.eq.s32.totalorder %s27, 0
    %p120 = por %p118, %p119
    %s122 = sadd.s32 %s121, 1
    %p125 = scmp.eq.s32.totalorder %s21, 1
    %p126 = scmp.ne.s32.totalorder %s121, %s123
    %p127 = scmp.eq.s32.totalorder %s21, 0
    %p128 = por %p126, %p127
    %p129 = scmp.ne.s32.totalorder %s121, %s123
    %p130 = scmp.eq.s32.totalorder %s26, 1
    %p131 = por %p129, %p130
    %p132 = scmp.ne.s32.totalorder %s123, %s124
    %p133 = scmp.eq.s32.totalorder %s26, 0
    %p134 = por %p132, %p133
    %p135 = scmp.ne.s32.totalorder %s123, %s124
    %p136 = scmp.eq.s32.totalorder %s27, 1
    %p137 = por %p135, %p136
    %p139 = scmp.ne.s32.totalorder %s124, %s138
    %p140 = scmp.eq.s32.totalorder %s27, 0
    %p141 = por %p139, %p140
    %s143 = sadd.s32 %s142, 1
    %p146 = scmp.eq.s32.totalorder %s21, 1
    %p147 = scmp.ne.s32.totalorder %s142, %s144
    %p148 = scmp.eq.s32.totalorder %s21, 0
    %p149 = por %p147, %p148
    %p150 = scmp.ne.s32.totalorder %s142, %s144
    %p151 = scmp.eq.s32.totalorder %s26, 1
    %p152 = por %p150, %p151
    %p153 = scmp.ne.s32.totalorder %s144, %s145
    %p154 = scmp.eq.s32.totalorder %s26, 0
    %p155 = por %p153, %p154
    %p156 = scmp.ne.s32.totalorder %s144, %s145
    %p157 = scmp.eq.s32.totalorder %s27, 1
    %p158 = por %p156, %p157
    %p160 = scmp.ne.s32.totalorder %s145, %s159
    %p161 = scmp.eq.s32.totalorder %s27, 0
    %p162 = por %p160, %p161
    %s163 = ssub.s32 %s28, %s40
    %s164 = ssub.s32 %s29, %s36
    %s165 = sor.u32 %s163, %s164
    %p166 = scmp.eq.s32.totalorder %s165, 0
    %s168 = sadd.s32 %s167, 1
    %s169 = scalar_select %p166, %s167, %s168
    %p172 = pneg %p166
    %p173 = scmp.eq.s32.totalorder %s21, 1
    %p174 = por %p172, %p173
    %p175 = scmp.ne.s32.totalorder %s167, %s170
    %p176 = scmp.eq.s32.totalorder %s21, 0
    %p177 = por %p175, %p176
    %p178 = scmp.ne.s32.totalorder %s167, %s170
    %p179 = scmp.eq.s32.totalorder %s26, 1
    %p180 = por %p178, %p179
    %p181 = scmp.ne.s32.totalorder %s170, %s171
    %p182 = scmp.eq.s32.totalorder %s26, 0
    %p183 = por %p181, %p182
    %p184 = scmp.ne.s32.totalorder %s170, %s171
    %p185 = scmp.eq.s32.totalorder %s27, 1
    %p186 = por %p184, %p185
    %p188 = scmp.ne.s32.totalorder %s171, %s187
    %p189 = scmp.eq.s32.totalorder %s27, 0
    %p190 = por %p188, %p189
    %s191 = ssub.s32 %s28, %s40
    %s192 = ssub.s32 %s29, %s36
    %s193 = sor.u32 %s191, %s192
    %p194 = scmp.eq.s32.totalorder %s193, 0
    %s196 = sadd.s32 %s195, 1
    %s197 = scalar_select %p194, %s195, %s196
    %p200 = pneg %p194
    %p201 = scmp.eq.s32.totalorder %s21, 1
    %p202 = por %p200, %p201
    %p203 = scmp.ne.s32.totalorder %s195, %s198
    %p204 = scmp.eq.s32.totalorder %s21, 0
    %p205 = por %p203, %p204
    %p206 = scmp.ne.s32.totalorder %s195, %s198
    %p207 = scmp.eq.s32.totalorder %s26, 1
    %p208 = por %p206, %p207
    %p209 = scmp.ne.s32.totalorder %s198, %s199
    %p210 = scmp.eq.s32.totalorder %s26, 0
    %p211 = por %p209, %p210
    %p212 = scmp.ne.s32.totalorder %s198, %s199
    %p213 = scmp.eq.s32.totalorder %s27, 1
    %p214 = por %p212, %p213
    %p216 = scmp.ne.s32.totalorder %s199, %s215
    %p217 = scmp.eq.s32.totalorder %s27, 0
    %p218 = por %p216, %p217
    %p219 = scmp.le.s32.totalorder 1, %s21
    %p220 = scmp.lt.s32.totalorder %s21, 3
    %p221 = pnand %p219, %p220
    %p222 = pneg %p221
    // Predicated region
    $region9: #{wait_k_transformer_train_forward.31} parent=5 // pred_check
      _
    $region10: #{wait_k_transformer_train_forward.31} parent=5 // pred_check_branch
      %224 = sbr.rel (%p221) target = $region12
    $region11: #{wait_k_transformer_train_forward.31} parent=5 // pred_region
      %s225 = ssub.s32 %s21, 1
      // Predicated region
      $region13: #{wait_k_transformer_train_forward.31} parent=11 // pred_check
        %p226 = pneg %p134
      $region14: #{wait_k_transformer_train_forward.31} parent=11 // pred_check_branch
        %228 = sbr.rel (%p226) target = $region16
      $region15: #{wait_k_transformer_train_forward.31} parent=11 // pred_region
        _
      $region16: #{wait_k_transformer_train_forward.31} parent=11 // pred_fallthru
        _
      // Predicated region
      $region17: #{wait_k_transformer_train_forward.31} parent=11 // pred_check
        %p229 = pneg %p155
      $region18: #{wait_k_transformer_train_forward.31} parent=11 // pred_check_branch
        %231 = sbr.rel (%p229) target = $region20
      $region19: #{wait_k_transformer_train_forward.31} parent=11 // pred_region
        _
      $region20: #{wait_k_transformer_train_forward.31} parent=11 // pred_fallthru
        _
    $region12: #{wait_k_transformer_train_forward.31} parent=5 // pred_fallthru
      _
    %p232 = scmp.lt.s32.totalorder %s21, 2
    // Predicated region
    $region21: #{wait_k_transformer_train_forward.31} parent=5 // pred_check
      %p233 = pneg %p232
    $region22: #{wait_k_transformer_train_forward.31} parent=5 // pred_check_branch
      %235 = sbr.rel (%p233) target = $region24
    $region23: #{wait_k_transformer_train_forward.31} parent=5 // pred_region
      // Predicated region
      $region25: #{wait_k_transformer_train_forward.31} parent=23 // pred_check
        %p236 = pneg %p55
      $region26: #{wait_k_transformer_train_forward.31} parent=23 // pred_check_branch
        %238 = sbr.rel (%p236) target = $region28
      $region27: #{wait_k_transformer_train_forward.31} parent=23 // pred_region
        %p239 = scmp.lt.s32.totalorder %s28, 1
        %s240 = scalar_select %p239, %s28, 1
        %p241 = scmp.lt.s32.totalorder %s29, 0
        %s242 = scalar_select %p241, %s29, 0
        %s243 = smul.addr %s240, 4
        %s244 = sadd.s32 %s242, %s243
        %s245 = smul.addr %s244, 4
        %s246 = scalar_lea.vmem %s1, %s245
      $region28: #{wait_k_transformer_train_forward.31} parent=23 // pred_fallthru
        _
      // Predicated region
      $region29: #{wait_k_transformer_train_forward.31} parent=23 // pred_check
        %p247 = pneg %p81
      $region30: #{wait_k_transformer_train_forward.31} parent=23 // pred_check_branch
        %249 = sbr.rel (%p247) target = $region32
      $region31: #{wait_k_transformer_train_forward.31} parent=23 // pred_region
        %p250 = scmp.lt.s32.totalorder %s28, 1
        %s251 = scalar_select %p250, %s28, 1
        %s252 = smul.addr %s251, 4
        %s253 = smul.addr %s252, 4
        %s254 = scalar_lea.vmem %s2, %s253
      $region32: #{wait_k_transformer_train_forward.31} parent=23 // pred_fallthru
        _
      // Predicated region
      $region33: #{wait_k_transformer_train_forward.31} parent=23 // pred_check
        %p255 = pneg %p107
      $region34: #{wait_k_transformer_train_forward.31} parent=23 // pred_check_branch
        %257 = sbr.rel (%p255) target = $region36
      $region35: #{wait_k_transformer_train_forward.31} parent=23 // pred_region
        %p258 = scmp.lt.s32.totalorder %s28, 1
        %s259 = scalar_select %p258, %s28, 1
        %s260 = smul.addr %s259, 4
        %s261 = smul.addr %s260, 4
        %s262 = scalar_lea.vmem %s3, %s261
      $region36: #{wait_k_transformer_train_forward.31} parent=23 // pred_fallthru
        _
      // Predicated region
      $region37: #{wait_k_transformer_train_forward.31} parent=23 // pred_check
        %p263 = pneg %p177
      $region38: #{wait_k_transformer_train_forward.31} parent=23 // pred_check_branch
        %265 = sbr.rel (%p263) target = $region40
      $region39: #{wait_k_transformer_train_forward.31} parent=23 // pred_region
        %p266 = scmp.lt.s32.totalorder %s28, 1
        %s267 = scalar_select %p266, %s28, 1
        %p268 = scmp.lt.s32.totalorder %s29, 0
        %s269 = scalar_select %p268, %s29, 0
        %s270 = sadd.s32 %s269, %s267
        %s271 = smul.addr %s270, 4
        %s272 = scalar_lea.vmem %s6, %s271
      $region40: #{wait_k_transformer_train_forward.31} parent=23 // pred_fallthru
        _
    $region24: #{wait_k_transformer_train_forward.31} parent=5 // pred_fallthru
      _
    %p273 = scmp.le.s32.totalorder 1, %s21
    %p274 = scmp.lt.s32.totalorder %s21, 3
    %p275 = pnand %p273, %p274
    %p276 = pneg %p275
    // Predicated region
    $region41: #{wait_k_transformer_train_forward.31} parent=5 // pred_check
      _
    $region42: #{wait_k_transformer_train_forward.31} parent=5 // pred_check_branch
      %278 = sbr.rel (%p275) target = $region44
    $region43: #{wait_k_transformer_train_forward.31} parent=5 // pred_region
      %s279 = ssub.s32 %s21, 1
      %p280 = scmp.lt.s32.totalorder %s30, 1
      %s281 = scalar_select %p280, %s30, 1
      %p282 = scmp.lt.s32.totalorder %s31, 0
      %s283 = scalar_select %p282, %s31, 0
      %s284 = smul.addr %s281, 4
      %s285 = sadd.s32 %s283, %s284
      %s286 = smul.addr %s285, 4
      %s287 = scalar_lea.vmem %s1, %s286
      %p288 = pneg %p61
      %p289 = pneg %p58
      %p290 = scmp.lt.s32.totalorder %s30, 1
      %s291 = scalar_select %p290, %s30, 1
      %s292 = smul.addr %s291, 4
      %s293 = smul.addr %s292, 4
      %s294 = scalar_lea.vmem %s2, %s293
      %p295 = pneg %p87
      %p296 = pneg %p84
      %p297 = scmp.lt.s32.totalorder %s30, 1
      %s298 = scalar_select %p297, %s30, 1
      %s299 = smul.addr %s298, 4
      %s300 = smul.addr %s299, 4
      %s301 = scalar_lea.vmem %s3, %s300
      %p302 = pneg %p113
      %p303 = pneg %p110
      %p304 = pneg %p134
      %p305 = pneg %p131
      %p306 = pneg %p155
      %p307 = pneg %p152
      %p308 = scmp.lt.s32.totalorder %s30, 1
      %s309 = scalar_select %p308, %s30, 1
      %p310 = scmp.lt.s32.totalorder %s31, 0
      %s311 = scalar_select %p310, %s31, 0
      %s312 = sadd.s32 %s311, %s309
      %s313 = smul.addr %s312, 4
      %s314 = scalar_lea.vmem %s6, %s313
      %p315 = pneg %p183
      %p316 = pneg %p180
      %p317 = pneg %p211
      %p318 = pneg %p208
      %p319 = scmp.lt.s32.totalorder %s30, 1
      %s320 = scalar_select %p319, %s30, 1
      %p321 = scmp.lt.s32.totalorder %s31, 0
      %s322 = scalar_select %p321, %s31, 0
      %s323 = sadd.s32 %s322, %s320
      %s324 = smul.addr %s323, 4
      %s325 = scalar_lea.vmem %s7, %s324
      %p326 = scmp.lt.s32.totalorder %s30, 1
      %s327 = scalar_select %p326, %s30, 1
      %p328 = scmp.lt.s32.totalorder %s31, 0
      %s329 = scalar_select %p328, %s31, 0
      %s330 = smul.addr %s327, 4
      %s331 = sadd.s32 %s329, %s330
      %s332 = smul.addr %s331, 4
      %s333 = scalar_lea.vmem %s1, %s332
      %p334 = scmp.lt.s32.totalorder %s30, 1
      %s335 = scalar_select %p334, %s30, 1
      %s336 = smul.addr %s335, 4
      %s337 = smul.addr %s336, 4
      %s338 = scalar_lea.vmem %s2, %s337
      %p339 = scmp.lt.s32.totalorder %s30, 1
      %s340 = scalar_select %p339, %s30, 1
      %s341 = smul.addr %s340, 4
      %s342 = smul.addr %s341, 4
      %s343 = scalar_lea.vmem %s3, %s342
      %p344 = scmp.lt.s32.totalorder %s30, 1
      %s345 = scalar_select %p344, %s30, 1
      %p346 = scmp.lt.s32.totalorder %s31, 0
      %s347 = scalar_select %p346, %s31, 0
      %s348 = sadd.s32 %s347, %s345
      %s349 = smul.addr %s348, 4
      %s350 = scalar_lea.vmem %s6, %s349
      %p351 = scmp.lt.s32.totalorder %s30, 1
      %s352 = scalar_select %p351, %s30, 1
      %p353 = scmp.lt.s32.totalorder %s31, 0
      %s354 = scalar_select %p353, %s31, 0
      %s355 = sadd.s32 %s354, %s352
      %s356 = smul.addr %s355, 4
      %s357 = scalar_lea.vmem %s7, %s356
      %s359 = smul.u32 %s31, 8
      %s360 = sld [smem:[#allocation3 + %s30]]
      %v361 = vlaneseq
      %v362 = vshrl.u32 %v361, 7
      %v363 = vstv %s359
      %v364 = vadd.s32 %v363, %v362
      %v365 = vlaneseq
      %v366 = vand.u32 %v365, 127
      %v367 = vstv %s360
      %vm368 = vcmp.ge.s32.totalorder %v366, %v367
      %v369 = vadd.s32 %v364, 3
      %vm370 = vcmp.ge.s32.totalorder %v366, %v369
      %vm371 = vmor %vm368, %vm370
      %v372 = vsel %vm371, -1e+09, 0.0
      %v373 = vld [vmem:[%s333] sm:$0xf]
      %v374 = vld [vmem:[%s338] sm:$0xf]
      %v375 = vld [vmem:[%s343] sm:$0xf]
      %vm376 = vcmask 64512
      %v378 = vsel %vm376, %v373, 0
      %v381 = vsel %vm376, %v374, 0
      %383 = vmatpush.bf16.xpose.msra.mxu0 0
      %384 = vmatpush.bf16.xpose.msra.mxu0 0
      %385 = vmatpush.bf16.xpose.msra.mxu0 0
      %386 = vmatpush.bf16.xpose.msra.mxu0 0
      %387 = vmatpush.bf16.xpose.msra.mxu0 0
      %388 = vmatpush.bf16.xpose.msra.mxu0 0
      %389 = vmatpush.bf16.xpose.msra.mxu0 0
      %390 = vmatpush.bf16.xpose.msra.mxu0 %v381
      %391 = vmatmul.bf16.gmra.mxu0 %v378
      %v392 = vpop.f32.mrf.mxu0
      %v393 = vadd.f32 %v372, %v392
      %v394 = vpop.f32.mrf.mxu0
      %395 = vdwg.mxu0
      %v396 = vsel %vm376, %v393, -inf
      %397 = vmax.xlane.f32.xlu0 %v396
      %v398 = vpop.xlane.xlu0 %397
      %v399 = vsub.f32 %v393, %v398
      %v400 = vmul.f32 %v399, 1.442695
      %v401 = vpow.pop %v400
      %v402 = vsel %vm376, %v401, 0.0
      %403 = vadd.xlane.f32.xlu0 %v402
      %v404 = vpop.xlane.xlu0 %403
      %v405 = vrcp.pop %v404
      %v406 = vmul.f32 %v401, %v405
      %v407 = vpack.c.bf16 %v406, %v406
      %v409 = vsel %vm376, %v407, 0
      %vm411 = vcmask 1043456
      %v413 = vsel %vm411, %v375, 0
      %415 = vmatpush.bf16.msra.mxu0 0
      %416 = vmatpush.bf16.msra.mxu0 0
      %417 = vmatpush.bf16.msra.mxu0 0
      %418 = vmatpush.bf16.msra.mxu0 0
      %419 = vmatpush.bf16.msra.mxu0 0
      %420 = vmatpush.bf16.msra.mxu0 0
      %421 = vmatpush.bf16.msra.mxu0 0
      %422 = vmatpush.bf16.msra.mxu0 %v413
      %423 = vmatmul.bf16.gmra.mxu0 %v409
      %v424 = vpop.f32.mrf.mxu0
      %v425 = vadd.f32 0.0, %v424
      %v426 = vpop.f32.mrf.mxu0
      %427 = vdwg.mxu0
      %s428 = scalar_lea.vmem %s333, 4
      %v429 = vld [vmem:[%s428] sm:$0xf]
      %s430 = scalar_lea.vmem %s338, 4
      %v431 = vld [vmem:[%s430] sm:$0xf]
      %s432 = scalar_lea.vmem %s343, 4
      %v433 = vld [vmem:[%s432] sm:$0xf]
      %v435 = vsel %vm376, %v429, 0
      %v438 = vsel %vm376, %v431, 0
      %440 = vmatpush.bf16.xpose.msra.mxu0 0
      %441 = vmatpush.bf16.xpose.msra.mxu0 0
      %442 = vmatpush.bf16.xpose.msra.mxu0 0
      %443 = vmatpush.bf16.xpose.msra.mxu0 0
      %444 = vmatpush.bf16.xpose.msra.mxu0 0
      %445 = vmatpush.bf16.xpose.msra.mxu0 0
      %446 = vmatpush.bf16.xpose.msra.mxu0 0
      %447 = vmatpush.bf16.xpose.msra.mxu0 %v438
      %448 = vmatmul.bf16.gmra.mxu0 %v435
      %v449 = vpop.f32.mrf.mxu0
      %v450 = vadd.f32 %v372, %v449
      %v451 = vpop.f32.mrf.mxu0
      %452 = vdwg.mxu0
      %v453 = vsel %vm376, %v450, -inf
      %454 = vmax.xlane.f32.xlu0 %v453
      %v455 = vpop.xlane.xlu0 %454
      %v456 = vsub.f32 %v450, %v455
      %v457 = vmul.f32 %v456, 1.442695
      %v458 = vpow.pop %v457
      %v459 = vsel %vm376, %v458, 0.0
      %460 = vadd.xlane.f32.xlu0 %v459
      %v461 = vpop.xlane.xlu0 %460
      %v462 = vrcp.pop %v461
      %v463 = vmul.f32 %v458, %v462
      %v464 = vpack.c.bf16 %v463, %v463
      %v466 = vsel %vm376, %v464, 0
      %v469 = vsel %vm411, %v433, 0
      %471 = vmatpush.bf16.msra.mxu0 0
      %472 = vmatpush.bf16.msra.mxu0 0
      %473 = vmatpush.bf16.msra.mxu0 0
      %474 = vmatpush.bf16.msra.mxu0 0
      %475 = vmatpush.bf16.msra.mxu0 0
      %476 = vmatpush.bf16.msra.mxu0 0
      %477 = vmatpush.bf16.msra.mxu0 0
      %478 = vmatpush.bf16.msra.mxu0 %v469
      %479 = vmatmul.bf16.gmra.mxu0 %v466
      %v480 = vpop.f32.mrf.mxu0
      %v481 = vadd.f32 0.0, %v480
      %v482 = vpop.f32.mrf.mxu0
      %483 = vdwg.mxu0
      %s484 = scalar_lea.vmem %s333, 8
      %v485 = vld [vmem:[%s484] sm:$0xf]
      %s486 = scalar_lea.vmem %s338, 8
      %v487 = vld [vmem:[%s486] sm:$0xf]
      %s488 = scalar_lea.vmem %s343, 8
      %v489 = vld [vmem:[%s488] sm:$0xf]
      %v491 = vsel %vm376, %v485, 0
      %v494 = vsel %vm376, %v487, 0
      %496 = vmatpush.bf16.xpose.msra.mxu0 0
      %497 = vmatpush.bf16.xpose.msra.mxu0 0
      %498 = vmatpush.bf16.xpose.msra.mxu0 0
      %499 = vmatpush.bf16.xpose.msra.mxu0 0
      %500 = vmatpush.bf16.xpose.msra.mxu0 0
      %501 = vmatpush.bf16.xpose.msra.mxu0 0
      %502 = vmatpush.bf16.xpose.msra.mxu0 0
      %503 = vmatpush.bf16.xpose.msra.mxu0 %v494
      %504 = vmatmul.bf16.gmra.mxu0 %v491
      %v505 = vpop.f32.mrf.mxu0
      %v506 = vadd.f32 %v372, %v505
      %v507 = vpop.f32.mrf.mxu0
      %508 = vdwg.mxu0
      %v509 = vsel %vm376, %v506, -inf
      %510 = vmax.xlane.f32.xlu0 %v509
      %v511 = vpop.xlane.xlu0 %510
      %v512 = vsub.f32 %v506, %v511
      %v513 = vmul.f32 %v512, 1.442695
      %v514 = vpow.pop %v513
      %v515 = vsel %vm376, %v514, 0.0
      %516 = vadd.xlane.f32.xlu0 %v515
      %v517 = vpop.xlane.xlu0 %516
      %v518 = vrcp.pop %v517
      %v519 = vmul.f32 %v514, %v518
      %v520 = vpack.c.bf16 %v519, %v519
      %v522 = vsel %vm376, %v520, 0
      %v525 = vsel %vm411, %v489, 0
      %527 = vmatpush.bf16.msra.mxu0 0
      %528 = vmatpush.bf16.msra.mxu0 0
      %529 = vmatpush.bf16.msra.mxu0 0
      %530 = vmatpush.bf16.msra.mxu0 0
      %531 = vmatpush.bf16.msra.mxu0 0
      %532 = vmatpush.bf16.msra.mxu0 0
      %533 = vmatpush.bf16.msra.mxu0 0
      %534 = vmatpush.bf16.msra.mxu0 %v525
      %535 = vmatmul.bf16.gmra.mxu0 %v522
      %v536 = vpop.f32.mrf.mxu0
      %v537 = vadd.f32 0.0, %v536
      %v538 = vpop.f32.mrf.mxu0
      %539 = vdwg.mxu0
      %s540 = scalar_lea.vmem %s333, 12
      %v541 = vld [vmem:[%s540] sm:$0xf]
      %s542 = scalar_lea.vmem %s338, 12
      %v543 = vld [vmem:[%s542] sm:$0xf]
      %s544 = scalar_lea.vmem %s343, 12
      %v545 = vld [vmem:[%s544] sm:$0xf]
      %v547 = vsel %vm376, %v541, 0
      %v550 = vsel %vm376, %v543, 0
      %552 = vmatpush.bf16.xpose.msra.mxu0 0
      %553 = vmatpush.bf16.xpose.msra.mxu0 0
      %554 = vmatpush.bf16.xpose.msra.mxu0 0
      %555 = vmatpush.bf16.xpose.msra.mxu0 0
      %556 = vmatpush.bf16.xpose.msra.mxu0 0
      %557 = vmatpush.bf16.xpose.msra.mxu0 0
      %558 = vmatpush.bf16.xpose.msra.mxu0 0
      %559 = vmatpush.bf16.xpose.msra.mxu0 %v550
      %560 = vmatmul.bf16.gmra.mxu0 %v547
      %v561 = vpop.f32.mrf.mxu0
      %v562 = vadd.f32 %v372, %v561
      %v563 = vpop.f32.mrf.mxu0
      %564 = vdwg.mxu0
      %v565 = vsel %vm376, %v562, -inf
      %566 = vmax.xlane.f32.xlu0 %v565
      %v567 = vpop.xlane.xlu0 %566
      %v568 = vsub.f32 %v562, %v567
      %v569 = vmul.f32 %v568, 1.442695
      %v570 = vpow.pop %v569
      %v571 = vsel %vm376, %v570, 0.0
      %572 = vadd.xlane.f32.xlu0 %v571
      %v573 = vpop.xlane.xlu0 %572
      %v574 = vrcp.pop %v573
      %v575 = vmul.f32 %v570, %v574
      %v576 = vpack.c.bf16 %v575, %v575
      %v578 = vsel %vm376, %v576, 0
      %v581 = vsel %vm411, %v545, 0
      %583 = vmatpush.bf16.msra.mxu0 0
      %584 = vmatpush.bf16.msra.mxu0 0
      %585 = vmatpush.bf16.msra.mxu0 0
      %586 = vmatpush.bf16.msra.mxu0 0
      %587 = vmatpush.bf16.msra.mxu0 0
      %588 = vmatpush.bf16.msra.mxu0 0
      %589 = vmatpush.bf16.msra.mxu0 0
      %590 = vmatpush.bf16.msra.mxu0 %v581
      %591 = vmatmul.bf16.gmra.mxu0 %v578
      %v592 = vpop.f32.mrf.mxu0
      %v593 = vadd.f32 0.0, %v592
      %v594 = vpop.f32.mrf.mxu0
      %595 = vdwg.mxu0
      %597 = vrot.lane.b32.xlu0 %v481, 8
      %v598 = vpop.permute.xlu0 %597
      %601 = vrot.lane.b32.xlu0 %v537, 16
      %v602 = vpop.permute.xlu0 %601
      %605 = vrot.lane.b32.xlu0 %v593, 24
      %v606 = vpop.permute.xlu0 %605
      %v608 = vsel %vm376, %v425, %v598
      %vm609 = vcmask 130048
      %v610 = vsel %vm609, %v608, %v602
      %vm611 = vcmask 195584
      %v612 = vsel %vm611, %v610, %v606
      %v613 = vpack.c.bf16 %v612, %v612
      %v614 = vld [vmem:[%s4] sm:$0xf]
      %v615 = vld [vmem:[%s4 + $0x4] sm:$0xf]
      %v616 = vld [vmem:[%s4 + $0x8] sm:$0xf]
      %v617 = vld [vmem:[%s4 + $0xc] sm:$0xf]
      %v622 = vunpack.c.l.b16 %v614
      %v623 = vunpack.c.l.b16 %v615
      %v624 = vunpack.c.l.b16 %v616
      %v625 = vunpack.c.l.b16 %v617
      %v626 = vpack.c.b16 %v623, %v622
      %v627 = vpack.c.b16 %v625, %v624
      %vm630 = vcmask 261120
      %v632 = vsel %vm630, %v613, 0
      %634 = vmatpush.bf16.msra.mxu0 0
      %635 = vmatpush.bf16.msra.mxu0 0
      %636 = vmatpush.bf16.msra.mxu0 0
      %637 = vmatpush.bf16.msra.mxu0 0
      %638 = vmatpush.bf16.msra.mxu0 0
      %639 = vmatpush.bf16.msra.mxu0 0
      %640 = vmatpush.bf16.msra.mxu0 %v627
      %641 = vmatpush.bf16.msra.mxu0 %v626
      %642 = vmatmul.bf16.gmra.mxu0 %v632
      %v643 = vpop.f32.mrf.mxu0
      %v644 = vadd.f32 0.0, %v643
      %v645 = vpop.f32.mrf.mxu0
      %646 = vdwg.mxu0
      %v647 = vld [vmem:[%s350] sm:$0xf]
      %v648 = vunpack.c.l.bf16 %v647
      %v649 = vadd.f32 %v648, %v644
      %v650 = vld [vmem:[%s5] sm:$0x1]
      %v652 = vperm.slane %v650, 0
      %v654 = vadd.f32 %v649, %v652
      %v655 = vpack.c.bf16 %v654, %v654
      %vm656 = vcmask 257024
      %657 = vst.msk [vmem:[%s357] sm:$0xf] %vm656, %v655
      %p658 = scmp.lt.s32.totalorder %s30, 1
      %s659 = scalar_select %p658, %s30, 1
      %p660 = scmp.lt.s32.totalorder %s31, 0
      %s661 = scalar_select %p660, %s31, 0
      %s662 = sadd.s32 %s661, %s659
      %s663 = smul.addr %s662, 4
      %s664 = scalar_lea.vmem %s7, %s663
      // Predicated region
      $region45: #{wait_k_transformer_train_forward.31} parent=43 // pred_check
        %p665 = pneg %p208
      $region46: #{wait_k_transformer_train_forward.31} parent=43 // pred_check_branch
        %667 = sbr.rel (%p665) target = $region48
      $region47: #{wait_k_transformer_train_forward.31} parent=43 // pred_region
        _
      $region48: #{wait_k_transformer_train_forward.31} parent=43 // pred_fallthru
        _
    $region44: #{wait_k_transformer_train_forward.31} parent=5 // pred_fallthru
      _
    %p668 = scmp.le.s32.totalorder 2, %s21
    // Predicated region
    $region49: #{wait_k_transformer_train_forward.31} parent=5 // pred_check
      %p669 = pneg %p668
    $region50: #{wait_k_transformer_train_forward.31} parent=5 // pred_check_branch
      %671 = sbr.rel (%p669) target = $region52
    $region51: #{wait_k_transformer_train_forward.31} parent=5 // pred_region
      %s672 = ssub.s32 %s21, 2
      // Predicated region
      $region53: #{wait_k_transformer_train_forward.31} parent=51 // pred_check
        %p673 = pneg %p214
      $region54: #{wait_k_transformer_train_forward.31} parent=51 // pred_check_branch
        %675 = sbr.rel (%p673) target = $region56
      $region55: #{wait_k_transformer_train_forward.31} parent=51 // pred_region
        %p676 = scmp.lt.s32.totalorder %s32, 1
        %s677 = scalar_select %p676, %s32, 1
        %p678 = scmp.lt.s32.totalorder %s33, 0
        %s679 = scalar_select %p678, %s33, 0
        %s680 = sadd.s32 %s679, %s677
        %s681 = smul.addr %s680, 4
        %s682 = scalar_lea.vmem %s7, %s681
      $region56: #{wait_k_transformer_train_forward.31} parent=51 // pred_fallthru
        _
    $region52: #{wait_k_transformer_train_forward.31} parent=5 // pred_fallthru
      _
  $region6: #{wait_k_transformer_train_forward.31} parent=0 // loop_footer
    %s25 = sadd.s32 1, %s21
  $region7: #{wait_k_transformer_train_forward.31} parent=0 // loop_footer_branch
    %20 = sbr.rel target = $region3
  $region8: #{wait_k_transformer_train_forward.31} parent=0 // loop_exit
    _

// kernel: wait_k_transformer_train_forward.39
$region0: #{wait_k_transformer_train_forward.39}
  #allocation0 [shape = 'u32[]', space=smem, size = 0x4, offset = 0x4, fixed_abs, tag = 'smem constant byte address 0x4 - core index']
  #allocation1 [shape = 'u32[72,128]{1,0:T(1,128)}', space=vmem, size = 0x9000, scoped, tag = 'internal scratch']
  #allocation2 [shape = 'bf16[16,32]{1,0:T(8,128)(2,1)}', space=vmem, size = 0x1000, scoped, tag = 'scratch operand']
  #allocation3 [shape = 'f32[16,1]{1,0:T(8,128)}', space=vmem, size = 0x2000, scoped, tag = 'scratch operand']
  #allocation4 [shape = 'f32[16,1]{1,0:T(8,128)}', space=vmem, size = 0x2000, scoped, tag = 'scratch operand']
  #allocation5 [shape = 'f32[16,1]{1,0:T(8,128)}', space=vmem, size = 0x2000, scoped, tag = 'scratch operand']
  #allocation6 [shape = 'f32[16,1]{1,0:T(8,128)}', space=vmem, size = 0x2000, scoped, tag = 'scratch operand']
  %s0 = inlined_call_operand.vmem [shape: bf16[16,32], index: 0, kind: input, shape index: {}]
  %s1 = inlined_call_operand.vmem [shape: f32[1,32], index: 1, kind: input, shape index: {}]
  %s2 = inlined_call_operand.vmem [shape: f32[1,32], index: 2, kind: input, shape index: {}]
  %s3 = inlined_call_operand.vmem [shape: s32[16,1], index: 3, kind: input, shape index: {}]
  %s4 = inlined_call_operand.vmem [shape: f32[16,1], index: 4, kind: input, shape index: {}]
  %s5 = inlined_call_operand.vmem [shape: bf16[32,32], index: 5, kind: input, shape index: {}]
  %s6 = inlined_call_operand.vmem [shape: f32[1,128], index: 6, kind: output, shape index: {}]
  %s7 = sld [smem:[#allocation0]]
  $region42: #{wait_k_transformer_train_forward.39} parent=0
    _
  %s9 = ssub.s32 1, %s7
  %s10 = scalar_select 0, %s9, %s7
  // Predicated region
  $region2: #{wait_k_transformer_train_forward.39} parent=0 // pred_check
    _
  $region3: #{wait_k_transformer_train_forward.39} parent=0 // pred_check_branch
    %12 = sbr.rel (0) target = $region5
  $region4: #{wait_k_transformer_train_forward.39} parent=0 // pred_region
    _
  $region5: #{wait_k_transformer_train_forward.39} parent=0 // pred_fallthru
    _
  // Predicated region
  $region6: #{wait_k_transformer_train_forward.39} parent=0 // pred_check
    _
  $region7: #{wait_k_transformer_train_forward.39} parent=0 // pred_check_branch
    %14 = sbr.rel (0) target = $region9
  $region8: #{wait_k_transformer_train_forward.39} parent=0 // pred_region
    _
  $region9: #{wait_k_transformer_train_forward.39} parent=0 // pred_fallthru
    _
  // Predicated region
  $region10: #{wait_k_transformer_train_forward.39} parent=0 // pred_check
    _
  $region11: #{wait_k_transformer_train_forward.39} parent=0 // pred_check_branch
    %16 = sbr.rel (0) target = $region13
  $region12: #{wait_k_transformer_train_forward.39} parent=0 // pred_region
    _
  $region13: #{wait_k_transformer_train_forward.39} parent=0 // pred_fallthru
    _
  // Predicated region
  $region14: #{wait_k_transformer_train_forward.39} parent=0 // pred_check
    _
  $region15: #{wait_k_transformer_train_forward.39} parent=0 // pred_check_branch
    %18 = sbr.rel (0) target = $region17
  $region16: #{wait_k_transformer_train_forward.39} parent=0 // pred_region
    _
  $region17: #{wait_k_transformer_train_forward.39} parent=0 // pred_fallthru
    _
  // Predicated region
  $region18: #{wait_k_transformer_train_forward.39} parent=0 // pred_check
    _
  $region19: #{wait_k_transformer_train_forward.39} parent=0 // pred_check_branch
    %20 = sbr.rel (0) target = $region21
  $region20: #{wait_k_transformer_train_forward.39} parent=0 // pred_region
    _
  $region21: #{wait_k_transformer_train_forward.39} parent=0 // pred_fallthru
    _
  // Predicated region
  $region22: #{wait_k_transformer_train_forward.39} parent=0 // pred_check
    _
  $region23: #{wait_k_transformer_train_forward.39} parent=0 // pred_check_branch
    %22 = sbr.rel (0) target = $region25
  $region24: #{wait_k_transformer_train_forward.39} parent=0 // pred_region
    _
  $region25: #{wait_k_transformer_train_forward.39} parent=0 // pred_fallthru
    _
  %p24 = scmp.eq.s32.totalorder 0, 0
  // Predicated region
  $region26: #{wait_k_transformer_train_forward.39} parent=0 // pred_check
    %p25 = pneg %p24
  $region27: #{wait_k_transformer_train_forward.39} parent=0 // pred_check_branch
    %27 = sbr.rel (%p25) target = $region29
  $region28: #{wait_k_transformer_train_forward.39} parent=0 // pred_region
    %v28 = vld [vmem:[%s0] sm:$0xf]
    %v29 = vld [vmem:[%s0 + $0x4] sm:$0xf]
    %v30 = vunpack.c.l.bf16 %v28
    %v31 = vunpack.c.l.bf16 %v29
    %vm32 = vcmask 261120
    %v33 = vsel %vm32, %v30, 0.0
    %34 = vadd.xlane.f32.xlu0 %v33
    %v35 = vpop.xlane.xlu0 %34
    %v36 = vsel %vm32, %v31, 0.0
    %37 = vadd.xlane.f32.xlu0 %v36
    %v38 = vpop.xlane.xlu0 %37
    %v39 = vrcp.pop 32.0
    %v40 = vmul.f32 32.0, %v39
    %v41 = vsub.f32 1.0, %v40
    %v42 = vmul.f32 %v39, %v41
    %v43 = vadd.f32 %v39, %v42
    %vm44 = vweird.f32 %v39
    %v45 = vsel %vm44, %v39, %v43
    %v46 = vmul.f32 %v35, %v45
    %v47 = vmul.f32 %v38, %v45
    %v48 = vsub.f32 %v30, %v46
    %v49 = vsub.f32 %v31, %v47
    %v50 = vmul.f32 %v48, %v48
    %v51 = vmul.f32 %v49, %v49
    %v52 = vsel %vm32, %v50, 0.0
    %53 = vadd.xlane.f32.xlu0 %v52
    %v54 = vpop.xlane.xlu0 %53
    %v55 = vsel %vm32, %v51, 0.0
    %56 = vadd.xlane.f32.xlu0 %v55
    %v57 = vpop.xlane.xlu0 %56
    %v58 = vmul.f32 %v54, %v45
    %v59 = vmul.f32 %v57, %v45
    %v60 = vadd.f32 %v58, 1e-05
    %v61 = vadd.f32 %v59, 1e-05
    %v62 = vrsqrt.pop %v60
    %v63 = vmul.f32 %v62, %v60
    %v64 = vmul.f32 %v63, %v62
    %v65 = vmul.f32 0.5, %v64
    %v66 = vsub.f32 1.5, %v65
    %v67 = vmul.f32 %v62, %v66
    %vm68 = vweird.f32 %v60
    %vm69 = vweird.f32 %v62
    %vm70 = vmor %vm68, %vm69
    %v71 = vsel %vm70, %v62, %v67
    %v72 = vrsqrt.pop %v61
    %v73 = vmul.f32 %v72, %v61
    %v74 = vmul.f32 %v73, %v72
    %v75 = vmul.f32 0.5, %v74
    %v76 = vsub.f32 1.5, %v75
    %v77 = vmul.f32 %v72, %v76
    %vm78 = vweird.f32 %v61
    %vm79 = vweird.f32 %v72
    %vm80 = vmor %vm78, %vm79
    %v81 = vsel %vm80, %v72, %v77
    %v82 = vmul.f32 %v48, %v71
    %v83 = vmul.f32 %v49, %v81
    %v84 = vld [vmem:[%s1] sm:$0x1]
    %v86 = vperm.slane %v84, 0
    %v88 = vmul.f32 %v82, %v86
    %v89 = vmul.f32 %v83, %v86
    %v90 = vld [vmem:[%s2] sm:$0x1]
    %v92 = vperm.slane %v90, 0
    %v94 = vadd.f32 %v88, %v92
    %v95 = vadd.f32 %v89, %v92
    %v96 = vpack.c.bf16 %v94, %v94
    %v97 = vpack.c.bf16 %v95, %v95
    %vm98 = vcmask 257024
    %99 = vst.msk [vmem:[#allocation2] sm:$0xf] %vm98, %v96
    %100 = vst.msk [vmem:[#allocation2 + $0x4] sm:$0xf] %vm98, %v97
    %vm101 = vcmask 7168
    %102 = vst.msk [vmem:[#allocation3] sm:$0xff] %vm101, -inf
    %103 = vst.msk [vmem:[#allocation3 + $0x8] sm:$0xff] %vm101, -inf
    %104 = vst.msk [vmem:[#allocation4] sm:$0xff] %vm101, 0.0
    %105 = vst.msk [vmem:[#allocation4 + $0x8] sm:$0xff] %vm101, 0.0
    %106 = vst.msk [vmem:[#allocation5] sm:$0xff] %vm101, 0.0
    %107 = vst.msk [vmem:[#allocation5 + $0x8] sm:$0xff] %vm101, 0.0
    %108 = vst.msk [vmem:[#allocation6] sm:$0xff] %vm101, 0.0
    %109 = vst.msk [vmem:[#allocation6 + $0x8] sm:$0xff] %vm101, 0.0
    %110 = vst [vmem:[%s6] sm:$0x1] 0.0
  $region29: #{wait_k_transformer_train_forward.39} parent=0 // pred_fallthru
    _
  %v111 = vld [vmem:[#allocation2] sm:$0xf]
  %v112 = vld [vmem:[#allocation2 + $0x4] sm:$0xf]
  %v113 = vld [vmem:[%s5] sm:$0xf]
  %v114 = vld [vmem:[%s5 + $0x4] sm:$0xf]
  %v115 = vld [vmem:[%s5 + $0x8] sm:$0xf]
  %v116 = vld [vmem:[%s5 + $0xc] sm:$0xf]
  %v119 = vunpack.c.l.b16 %v111
  %v120 = vunpack.c.l.b16 %v112
  %v121 = vpack.c.b16 %v120, %v119
  %v126 = vunpack.c.l.b16 %v113
  %v127 = vunpack.c.l.b16 %v114
  %v128 = vunpack.c.l.b16 %v115
  %v129 = vunpack.c.l.b16 %v116
  %v130 = vpack.c.b16 %v127, %v126
  %v131 = vpack.c.b16 %v129, %v128
  %vm132 = vcmask 261120
  %v134 = vsel %vm132, %v121, 0
  %v137 = vsel %vm132, %v130, 0
  %v140 = vsel %vm132, %v131, 0
  %142 = vmatpush.bf16.xpose.msra.mxu0 0
  %143 = vmatpush.bf16.xpose.msra.mxu0 0
  %144 = vmatpush.bf16.xpose.msra.mxu0 0
  %145 = vmatpush.bf16.xpose.msra.mxu0 0
  %146 = vmatpush.bf16.xpose.msra.mxu0 0
  %147 = vmatpush.bf16.xpose.msra.mxu0 0
  %148 = vmatpush.bf16.xpose.msra.mxu0 %v140
  %149 = vmatpush.bf16.xpose.msra.mxu0 %v137
  %150 = vmatmul.bf16.gmra.mxu0 %v134
  %v151 = vpop.f32.mrf.mxu0
  %v152 = vadd.f32 0.0, %v151
  %v153 = vpop.f32.mrf.mxu0
  %v154 = vadd.f32 0.0, %v153
  %155 = vdwg.mxu0
  %v156 = vld [vmem:[#allocation3] sm:$0xff]
  %v157 = vld [vmem:[#allocation3 + $0x8] sm:$0xff]
  %v158 = vsel %vm132, %v152, -inf
  %159 = vmax.xlane.f32.xlu0 %v158
  %v160 = vpop.xlane.xlu0 %159
  %v161 = vsel %vm132, %v154, -inf
  %162 = vmax.xlane.f32.xlu0 %v161
  %v163 = vpop.xlane.xlu0 %162
  %v164 = vmax.f32 %v156, %v160
  %v165 = vmax.f32 %v157, %v163
  %v166 = vld [vmem:[#allocation4] sm:$0xff]
  %v167 = vld [vmem:[#allocation4 + $0x8] sm:$0xff]
  %v168 = vsub.f32 %v156, %v164
  %v169 = vsub.f32 %v157, %v165
  %v170 = vmul.f32 %v168, 1.442695
  %v171 = vpow.pop %v170
  %v172 = vmul.f32 %v169, 1.442695
  %v173 = vpow.pop %v172
  %v174 = vmul.f32 %v166, %v171
  %v175 = vmul.f32 %v167, %v173
  %177 = vset.pattern.permute.xlu0 0
  %178 = vperm.xlu0 %177, %v164
  %v179 = vpop.permute.xlu0 %178
  %182 = vset.pattern.permute.xlu0 0
  %183 = vperm.xlu0 %182, %v165
  %v184 = vpop.permute.xlu0 %183
  %v186 = vsub.f32 %v152, %v179
  %v187 = vsub.f32 %v154, %v184
  %v188 = vmul.f32 %v186, 1.442695
  %v189 = vpow.pop %v188
  %v190 = vmul.f32 %v187, 1.442695
  %v191 = vpow.pop %v190
  %v192 = vsel %vm132, %v189, 0.0
  %193 = vadd.xlane.f32.xlu0 %v192
  %v194 = vpop.xlane.xlu0 %193
  %v195 = vsel %vm132, %v191, 0.0
  %196 = vadd.xlane.f32.xlu0 %v195
  %v197 = vpop.xlane.xlu0 %196
  %v198 = vadd.f32 %v174, %v194
  %v199 = vadd.f32 %v175, %v197
  %vm200 = vcmask 7168
  %201 = vst.msk [vmem:[#allocation4] sm:$0xff] %vm200, %v198
  %202 = vst.msk [vmem:[#allocation4 + $0x8] sm:$0xff] %vm200, %v199
  %203 = vst.msk [vmem:[#allocation3] sm:$0xff] %vm200, %v164
  %204 = vst.msk [vmem:[#allocation3 + $0x8] sm:$0xff] %vm200, %v165
  %v205 = vld [vmem:[#allocation5] sm:$0xff]
  %v206 = vld [vmem:[#allocation5 + $0x8] sm:$0xff]
  %v207 = vsel %vm132, %v152, 0.0
  %208 = vadd.xlane.f32.xlu0 %v207
  %v209 = vpop.xlane.xlu0 %208
  %v210 = vsel %vm132, %v154, 0.0
  %211 = vadd.xlane.f32.xlu0 %v210
  %v212 = vpop.xlane.xlu0 %211
  %v213 = vadd.f32 %v205, %v209
  %v214 = vadd.f32 %v206, %v212
  %215 = vst.msk [vmem:[#allocation5] sm:$0xff] %vm200, %v213
  %216 = vst.msk [vmem:[#allocation5 + $0x8] sm:$0xff] %vm200, %v214
  %s217 = smul.u32 0, 32
  %v218 = vlaneseq
  %v219 = vand.u32 %v218, 127
  %v220 = vstv %s217
  %v221 = vadd.s32 %v220, %v219
  %v222 = vld [vmem:[#allocation6] sm:$0xff]
  %v223 = vld [vmem:[#allocation6 + $0x8] sm:$0xff]
  %v224 = vld [vmem:[%s3] sm:$0xff]
  %v225 = vld [vmem:[%s3 + $0x8] sm:$0xff]
  %226 = vset.pattern.permute.xlu0 0
  %227 = vperm.xlu0 %226, %v224
  %v228 = vpop.permute.xlu0 %227
  %229 = vset.pattern.permute.xlu0 0
  %230 = vperm.xlu0 %229, %v225
  %v231 = vpop.permute.xlu0 %230
  %vm232 = vcmp.eq.s32.totalorder %v221, %v228
  %vm233 = vcmp.eq.s32.totalorder %v221, %v231
  %v234 = vsel %vm232, %v152, 0.0
  %v235 = vsel %vm233, %v154, 0.0
  %v236 = vsel %vm132, %v234, 0.0
  %237 = vadd.xlane.f32.xlu0 %v236
  %v238 = vpop.xlane.xlu0 %237
  %v239 = vsel %vm132, %v235, 0.0
  %240 = vadd.xlane.f32.xlu0 %v239
  %v241 = vpop.xlane.xlu0 %240
  %v242 = vadd.f32 %v222, %v238
  %v243 = vadd.f32 %v223, %v241
  %244 = vst.msk [vmem:[#allocation6] sm:$0xff] %vm200, %v242
  %245 = vst.msk [vmem:[#allocation6 + $0x8] sm:$0xff] %vm200, %v243
  // Predicated region
  $region30: #{wait_k_transformer_train_forward.39} parent=0 // pred_check
    %p246 = pneg %p24
  $region31: #{wait_k_transformer_train_forward.39} parent=0 // pred_check_branch
    %248 = sbr.rel (%p246) target = $region33
  $region32: #{wait_k_transformer_train_forward.39} parent=0 // pred_region
    %v249 = vld [vmem:[#allocation3] sm:$0xff]
    %v250 = vld [vmem:[#allocation3 + $0x8] sm:$0xff]
    %v251 = vld [vmem:[#allocation4] sm:$0xff]
    %v252 = vld [vmem:[#allocation4 + $0x8] sm:$0xff]
    %v253 = vlog2.pop %v251
    %v254 = vmul.f32 %v253, 0.6931472
    %v255 = vlog2.pop %v252
    %v256 = vmul.f32 %v255, 0.6931472
    %v257 = vadd.f32 %v249, %v254
    %v258 = vadd.f32 %v250, %v256
    %v259 = vld [vmem:[#allocation6] sm:$0xff]
    %v260 = vld [vmem:[#allocation6 + $0x8] sm:$0xff]
    %v261 = vsub.f32 %v257, %v259
    %v262 = vsub.f32 %v258, %v260
    %v263 = vmul.f32 %v261, 0.9
    %v264 = vmul.f32 %v262, 0.9
    %v265 = vmul.f32 %v257, 32.0
    %v266 = vmul.f32 %v258, 32.0
    %v267 = vld [vmem:[#allocation5] sm:$0xff]
    %v268 = vld [vmem:[#allocation5 + $0x8] sm:$0xff]
    %v269 = vsub.f32 %v265, %v267
    %v270 = vsub.f32 %v266, %v268
    %v271 = vmul.f32 %v269, 0.003125
    %v272 = vmul.f32 %v270, 0.003125
    %v273 = vadd.f32 %v263, %v271
    %v274 = vadd.f32 %v264, %v272
    %v275 = vld [vmem:[%s4] sm:$0xff]
    %v276 = vld [vmem:[%s4 + $0x8] sm:$0xff]
    %v277 = vmul.f32 %v273, %v275
    %v278 = vmul.f32 %v274, %v276
    %v279 = vsel %vm200, %v277, 0.0
    %v280 = vsel %vm200, %v278, 0.0
    %v281 = vadd.f32 %v279, %v280
    %v282 = vrot.slane %v281, 4
    %v283 = vadd.f32 %v281, %v282
    %v284 = vrot.slane %v283, 2
    %v285 = vadd.f32 %v283, %v284
    %v286 = vrot.slane %v285, 1
    %v287 = vadd.f32 %v285, %v286
    %vm288 = vcmp.eq.s32.totalorder %v219, 0
    %290 = vset.pattern.permute.xlu0 0
    %291 = vperm.xlu0 %290, %v287
    %v292 = vpop.permute.xlu0 %291
    %v294 = vsel %vm288, %v292, 0.0
    %295 = vst [vmem:[%s6] sm:$0x1] %v294
  $region33: #{wait_k_transformer_train_forward.39} parent=0 // pred_fallthru
    _
  // Predicated region
  $region34: #{wait_k_transformer_train_forward.39} parent=0 // pred_check
    _
  $region35: #{wait_k_transformer_train_forward.39} parent=0 // pred_check_branch
    %297 = sbr.rel (0) target = $region37
  $region36: #{wait_k_transformer_train_forward.39} parent=0 // pred_region
    _
  $region37: #{wait_k_transformer_train_forward.39} parent=0 // pred_fallthru
    _
  // Predicated region
  $region38: #{wait_k_transformer_train_forward.39} parent=0 // pred_check
    _
  $region39: #{wait_k_transformer_train_forward.39} parent=0 // pred_check_branch
    %299 = sbr.rel (0) target = $region41
  $region40: #{wait_k_transformer_train_forward.39} parent=0 // pred_region
    _
  $region41: #{wait_k_transformer_train_forward.39} parent=0 // pred_fallthru
    _

</llo_original>
